<compile_context>
chip_gen: v7x
topology: tpu7x:2x2x1
jax: 0.10.0
libtpu: 0.0.40
codegen_flags: <defaults>
</compile_context>

<pallas_src>
import functools
import math

import jax
import jax.numpy as jnp
from jax.experimental import pallas as pl
from jax.experimental.pallas import tpu as pltpu


CFG = dict(
    vocab_size=50,
    type_vocab_size=2,
    max_position=16,
    hidden=32,
    num_heads=2,
    intermediate=64,
    num_layers=2,
    num_classes=3,
)

LANE = 128      # final logits padded to a lane-dense width (sliced in wrapper)
LN_EPS = 1e-12


# ----------------------------------------------------------------------------
# In-kernel helpers (traced inside the Pallas body)
# ----------------------------------------------------------------------------

def _layernorm(x, g, b):
    mu = jnp.mean(x, axis=-1, keepdims=True)
    xc = x - mu
    var = jnp.mean(xc * xc, axis=-1, keepdims=True)
    return xc * jax.lax.rsqrt(var + LN_EPS) * g + b


def _gelu(x):
    # TODO(synk): PyTorch BertModel default is exact-erf GELU; tanh approx used
    # (erf lowering in Mosaic is not guaranteed; weights are synthetic anyway).
    c = math.sqrt(2.0 / math.pi)
    return 0.5 * x * (1.0 + jnp.tanh(c * (x + 0.044715 * x * x * x)))


# ----------------------------------------------------------------------------
# Fused whole-model kernel (embeddings -> 2 encoder layers -> pooler -> head)
# ----------------------------------------------------------------------------

def _bert_kernel(
    # inputs
    ids_ref, mask_ref,
    wemb_ref, pt_ref, emb_g_ref, emb_b_ref,
    wq_ref, bq_ref, wk_ref, bk_ref, wv_ref, bv_ref, wo_ref, bo_ref,
    ln1g_ref, ln1b_ref,
    wi_ref, bi_ref, wo2_ref, bo2_ref, ln2g_ref, ln2b_ref,
    pw_ref, pb_ref,
    c1w_ref, c1b_ref, c2w_ref, c2b_ref, c3w_ref, c3b_ref,
    # output
    o_ref,
    *, B, S, H, nh, L, V_pad, B_pad,
):
    BS = B * S
    dh = H // nh
    f32 = jnp.float32

    # ---- in-kernel embedding lookup: one-hot gather on the MXU --------------
    ids = ids_ref[...]                                             # [BS, 1] i32
    tok_iota = jax.lax.broadcasted_iota(jnp.int32, (BS, V_pad), 1)
    onehot = jnp.where(ids == tok_iota, 1.0, 0.0)                  # [BS, V_pad]
    x = jnp.dot(onehot, wemb_ref[...], preferred_element_type=f32)  # [BS, H]
    pt = pt_ref[pl.ds(0, S), :]                                    # pos + type0
    x = x + jnp.concatenate([pt] * B, axis=0)                      # [BS, H]
    x = _layernorm(x, emb_g_ref[...], emb_b_ref[...])

    # ---- in-kernel additive attention mask (HF-style constant) --------------
    bias3 = (1.0 - mask_ref[...]) * f32(-10000.0)                  # [B, 1, S]

    # ---- encoder layers ------------------------------------------------------
    for l in range(L):
        head_out = None
        for hd in range(nh):
            # per-head projections (weights pre-split at init; 1/sqrt(dh)
            # already folded into wq/bq) — no runtime lane slicing.
            q = jnp.dot(x, wq_ref[l, hd], preferred_element_type=f32) + bq_ref[l, hd]
            k = jnp.dot(x, wk_ref[l, hd], preferred_element_type=f32) + bk_ref[l, hd]
            v = jnp.dot(x, wv_ref[l, hd], preferred_element_type=f32) + bv_ref[l, hd]
            qb = q.reshape(B, S, dh)
            kb = k.reshape(B, S, dh)
            vb = v.reshape(B, S, dh)

            s = jnp.einsum('bqd,bkd->bqk', qb, kb,
                           preferred_element_type=f32)             # [B, S, S]
            s = s + bias3
            s = s - jnp.max(s, axis=-1, keepdims=True)
            p = jnp.exp(s)
            p = p * pl.reciprocal(jnp.sum(p, axis=-1, keepdims=True), approx=True)
            ctx = jnp.einsum('bqk,bkd->bqd', p, vb,
                             preferred_element_type=f32)           # [B, S, dh]

            # fold output projection into the head loop (register accumulate)
            proj = jnp.dot(ctx.reshape(BS, dh), wo_ref[l, hd],
                           preferred_element_type=f32)             # [BS, H]
            head_out = proj if head_out is None else head_out + proj

        attn = head_out + bo_ref[l]
        x = _layernorm(x + attn, ln1g_ref[l], ln1b_ref[l])

        inter = _gelu(jnp.dot(x, wi_ref[l], preferred_element_type=f32) + bi_ref[l])
        ffn = jnp.dot(inter, wo2_ref[l], preferred_element_type=f32) + bo2_ref[l]
        x = _layernorm(x + ffn, ln2g_ref[l], ln2b_ref[l])

    # ---- pooler on CLS tokens (value-level row select, no scratch) ----------
    cls = x.reshape(B, S, H)[:, 0, :]                              # [B, H]
    if B_pad > B:
        cls = jnp.concatenate(
            [cls, jnp.zeros((B_pad - B, H), f32)], axis=0)         # [B_pad, H]
    pooled = jnp.tanh(jnp.dot(cls, pw_ref[...], preferred_element_type=f32)
                      + pb_ref[...])

    # ---- classifier head (dropout = identity in eval mode) ------------------
    z = jnp.maximum(jnp.dot(pooled, c1w_ref[...], preferred_element_type=f32)
                    + c1b_ref[...], 0.0)
    z = jnp.maximum(jnp.dot(z, c2w_ref[...], preferred_element_type=f32)
                    + c2b_ref[...], 0.0)
    logits = jnp.dot(z, c3w_ref[...], preferred_element_type=f32) + c3b_ref[...]

    o_ref[...] = logits                                            # [B_pad, 128]


# ----------------------------------------------------------------------------
# Parameter init (deterministic synthetic weights; per-head split, scale folded)
# ----------------------------------------------------------------------------

def _init_params(key, cfg):
    H, I, L = cfg["hidden"], cfg["intermediate"], cfg["num_layers"]
    nh = cfg["num_heads"]
    dh = H // nh
    C = cfg["num_classes"]
    V = cfg["vocab_size"]
    V_pad = ((V + 7) // 8) * 8
    P = cfg["max_position"]

    def nrm(k, shape, scale=0.02):
        return (scale * jax.random.normal(k, shape)).astype(jnp.float32)

    keys = iter(jax.random.split(key, 256))

    word = nrm(next(keys), (V, H))
    word_pad = jnp.zeros((V_pad, H), jnp.float32).at[:V].set(word)
    pos = nrm(next(keys), (P, H))
    typ = nrm(next(keys), (cfg["type_vocab_size"], H))
    # TODO(synk): token_type_ids assumed all-zero (HF default when omitted).
    p = {
        "word_emb": word_pad,                      # [V_pad, H], zero-padded rows
        "pos_type_emb": pos + typ[0][None, :],     # [P, H] pos + segment-0 emb
        "emb_ln_g": jnp.ones((1, H), jnp.float32),
        "emb_ln_b": jnp.zeros((1, H), jnp.float32),
    }

    att_scale = 1.0 / math.sqrt(dh)
    wq = att_scale * jnp.stack(
        [jnp.stack([nrm(next(keys), (H, dh)) for _ in range(nh)]) for _ in range(L)])
    wk = jnp.stack(
        [jnp.stack([nrm(next(keys), (H, dh)) for _ in range(nh)]) for _ in range(L)])
    wv = jnp.stack(
        [jnp.stack([nrm(next(keys), (H, dh)) for _ in range(nh)]) for _ in range(L)])
    wo = jnp.stack(
        [jnp.stack([nrm(next(keys), (dh, H)) for _ in range(nh)]) for _ in range(L)])
    p.update(
        wq=wq, wk=wk, wv=wv, wo=wo,                      # [L,nh,H,dh] / [L,nh,dh,H]
        bq=jnp.zeros((L, nh, 1, dh), jnp.float32),       # 1/sqrt(dh) folded in wq/bq
        bk=jnp.zeros((L, nh, 1, dh), jnp.float32),
        bv=jnp.zeros((L, nh, 1, dh), jnp.float32),
        bo=jnp.zeros((L, 1, H), jnp.float32),
        ln1_g=jnp.ones((L, 1, H), jnp.float32),
        ln1_b=jnp.zeros((L, 1, H), jnp.float32),
        wi=jnp.stack([nrm(next(keys), (H, I)) for _ in range(L)]),
        bi=jnp.zeros((L, 1, I), jnp.float32),
        wo2=jnp.stack([nrm(next(keys), (I, H)) for _ in range(L)]),
        bo2=jnp.zeros((L, 1, H), jnp.float32),
        ln2_g=jnp.ones((L, 1, H), jnp.float32),
        ln2_b=jnp.zeros((L, 1, H), jnp.float32),
    )

    p["pooler_w"] = nrm(next(keys), (H, H))
    p["pooler_b"] = jnp.zeros((1, H), jnp.float32)
    # classifier head: Linear(H,H)+ReLU, Linear(H,H//2)+ReLU, Linear(H//2,C)
    p["cls_w1"] = nrm(next(keys), (H, H))
    p["cls_b1"] = jnp.zeros((1, H), jnp.float32)
    p["cls_w2"] = nrm(next(keys), (H, H // 2))
    p["cls_b2"] = jnp.zeros((1, H // 2), jnp.float32)
    # final projection zero-padded to LANE columns -> lane-dense output store
    w3 = nrm(next(keys), (H // 2, C))
    p["cls_w3_pad"] = jnp.zeros((H // 2, LANE), jnp.float32).at[:, :C].set(w3)
    p["cls_b3_pad"] = jnp.zeros((1, LANE), jnp.float32)
    return p


# ----------------------------------------------------------------------------
# Forward pass wrapper (one pallas_call for the whole model; jit-fuse the rest)
# ----------------------------------------------------------------------------

def _full_spec(a):
    nd = a.ndim
    return pl.BlockSpec(a.shape, lambda i, nd=nd: (0,) * nd)


def bert_review_classifier(params, input_ids, attention_mask, cfg=CFG):
    B, S = input_ids.shape
    H = cfg["hidden"]
    nh = cfg["num_heads"]
    L = cfg["num_layers"]
    C = cfg["num_classes"]
    V_pad = params["word_emb"].shape[0]
    B_pad = max(8, ((B + 7) // 8) * 8)            # full-sublane-tile output rows

    ids2d = input_ids.astype(jnp.int32).reshape(B * S, 1)
    mask3d = attention_mask.astype(jnp.float32).reshape(B, 1, S)

    args = (
        ids2d, mask3d,
        params["word_emb"], params["pos_type_emb"],
        params["emb_ln_g"], params["emb_ln_b"],
        params["wq"], params["bq"], params["wk"], params["bk"],
        params["wv"], params["bv"], params["wo"], params["bo"],
        params["ln1_g"], params["ln1_b"],
        params["wi"], params["bi"], params["wo2"], params["bo2"],
        params["ln2_g"], params["ln2_b"],
        params["pooler_w"], params["pooler_b"],
        params["cls_w1"], params["cls_b1"],
        params["cls_w2"], params["cls_b2"],
        params["cls_w3_pad"], params["cls_b3_pad"],
    )

    kernel = functools.partial(_bert_kernel, B=B, S=S, H=H, nh=nh, L=L,
                               V_pad=V_pad, B_pad=B_pad)
    # TODO(synk): for large batch, add a 'parallel' row-tile grid axis over B
    # (mandatory for v7x's 2 TensorCores / 64 MiB VMEM); unnecessary at B=2.
    logits_pad = pl.pallas_call(
        kernel,
        out_shape=jax.ShapeDtypeStruct((B_pad, LANE), jnp.float32),
        grid=(1,),
        in_specs=[_full_spec(a) for a in args],
        out_specs=pl.BlockSpec((B_pad, LANE), lambda i: (0, 0)),
        compiler_params=pltpu.CompilerParams(
            dimension_semantics=("arbitrary",),
            vmem_limit_bytes=32 * 1024 * 1024),
    )(*args)
    return logits_pad[:B, :C]                                      # [B, C]


# ----------------------------------------------------------------------------
# Main
# ----------------------------------------------------------------------------

if __name__ == "__main__":
    key = jax.random.PRNGKey(0)
    k_param, k_ids = jax.random.split(key)

    params = _init_params(k_param, CFG)

    B, S = 2, 8
    input_ids = jax.random.randint(k_ids, (B, S), 0, CFG["vocab_size"],
                                   dtype=jnp.int32)
    # mask out the last two tokens of the second sequence
    attention_mask = jnp.ones((B, S), dtype=jnp.float32)
    attention_mask = attention_mask.at[1, -2:].set(0.0)

    fwd = jax.jit(bert_review_classifier)
    logits = jax.block_until_ready(fwd(params, input_ids, attention_mask))

    assert logits.shape == (B, CFG["num_classes"])
    assert bool(jnp.all(jnp.isfinite(logits)))
    print("KERNEL_OK")
</pallas_src>

<mosaic_0001>
module attributes {stable_mosaic.version = 11 : i64} {
  func.func @_bert_kernel(%arg0: i32, %arg1: memref<16x1xi32, #tpu.memory_space<vmem>>, %arg2: memref<2x1x8xf32, #tpu.memory_space<vmem>>, %arg3: memref<56x32xf32, #tpu.memory_space<vmem>>, %arg4: memref<16x32xf32, #tpu.memory_space<vmem>>, %arg5: memref<1x32xf32, #tpu.memory_space<vmem>>, %arg6: memref<1x32xf32, #tpu.memory_space<vmem>>, %arg7: memref<2x2x32x16xf32, #tpu.memory_space<vmem>>, %arg8: memref<2x2x1x16xf32, #tpu.memory_space<vmem>>, %arg9: memref<2x2x32x16xf32, #tpu.memory_space<vmem>>, %arg10: memref<2x2x1x16xf32, #tpu.memory_space<vmem>>, %arg11: memref<2x2x32x16xf32, #tpu.memory_space<vmem>>, %arg12: memref<2x2x1x16xf32, #tpu.memory_space<vmem>>, %arg13: memref<2x2x16x32xf32, #tpu.memory_space<vmem>>, %arg14: memref<2x1x32xf32, #tpu.memory_space<vmem>>, %arg15: memref<2x1x32xf32, #tpu.memory_space<vmem>>, %arg16: memref<2x1x32xf32, #tpu.memory_space<vmem>>, %arg17: memref<2x32x64xf32, #tpu.memory_space<vmem>>, %arg18: memref<2x1x64xf32, #tpu.memory_space<vmem>>, %arg19: memref<2x64x32xf32, #tpu.memory_space<vmem>>, %arg20: memref<2x1x32xf32, #tpu.memory_space<vmem>>, %arg21: memref<2x1x32xf32, #tpu.memory_space<vmem>>, %arg22: memref<2x1x32xf32, #tpu.memory_space<vmem>>, %arg23: memref<32x32xf32, #tpu.memory_space<vmem>>, %arg24: memref<1x32xf32, #tpu.memory_space<vmem>>, %arg25: memref<32x32xf32, #tpu.memory_space<vmem>>, %arg26: memref<1x32xf32, #tpu.memory_space<vmem>>, %arg27: memref<32x16xf32, #tpu.memory_space<vmem>>, %arg28: memref<1x16xf32, #tpu.memory_space<vmem>>, %arg29: memref<16x128xf32, #tpu.memory_space<vmem>>, %arg30: memref<1x128xf32, #tpu.memory_space<vmem>>, %arg31: memref<8x128xf32, #tpu.memory_space<vmem>>) attributes {dimension_semantics = [#tpu.dimension_semantics<arbitrary>], iteration_bounds = array<i64: 1>, scalar_prefetch = 0 : i64, scratch_operands = 0 : i64, tpu.core_type = #tpu.core_type<tc>, window_params = [{pipeline_mode = #tpu.pipeline_mode<synchronous>, transform_indices = @transform_0, window_bounds = array<i64: 16, 1>}, {pipeline_mode = #tpu.pipeline_mode<synchronous>, transform_indices = @transform_1, window_bounds = array<i64: 2, 1, 8>}, {pipeline_mode = #tpu.pipeline_mode<synchronous>, transform_indices = @transform_2, window_bounds = array<i64: 56, 32>}, {pipeline_mode = #tpu.pipeline_mode<synchronous>, transform_indices = @transform_3, window_bounds = array<i64: 16, 32>}, {pipeline_mode = #tpu.pipeline_mode<synchronous>, transform_indices = @transform_4, window_bounds = array<i64: 1, 32>}, {pipeline_mode = #tpu.pipeline_mode<synchronous>, transform_indices = @transform_5, window_bounds = array<i64: 1, 32>}, {pipeline_mode = #tpu.pipeline_mode<synchronous>, transform_indices = @transform_6, window_bounds = array<i64: 2, 2, 32, 16>}, {pipeline_mode = #tpu.pipeline_mode<synchronous>, transform_indices = @transform_7, window_bounds = array<i64: 2, 2, 1, 16>}, {pipeline_mode = #tpu.pipeline_mode<synchronous>, transform_indices = @transform_8, window_bounds = array<i64: 2, 2, 32, 16>}, {pipeline_mode = #tpu.pipeline_mode<synchronous>, transform_indices = @transform_9, window_bounds = array<i64: 2, 2, 1, 16>}, {pipeline_mode = #tpu.pipeline_mode<synchronous>, transform_indices = @transform_10, window_bounds = array<i64: 2, 2, 32, 16>}, {pipeline_mode = #tpu.pipeline_mode<synchronous>, transform_indices = @transform_11, window_bounds = array<i64: 2, 2, 1, 16>}, {pipeline_mode = #tpu.pipeline_mode<synchronous>, transform_indices = @transform_12, window_bounds = array<i64: 2, 2, 16, 32>}, {pipeline_mode = #tpu.pipeline_mode<synchronous>, transform_indices = @transform_13, window_bounds = array<i64: 2, 1, 32>}, {pipeline_mode = #tpu.pipeline_mode<synchronous>, transform_indices = @transform_14, window_bounds = array<i64: 2, 1, 32>}, {pipeline_mode = #tpu.pipeline_mode<synchronous>, transform_indices = @transform_15, window_bounds = array<i64: 2, 1, 32>}, {pipeline_mode = #tpu.pipeline_mode<synchronous>, transform_indices = @transform_16, window_bounds = array<i64: 2, 32, 64>}, {pipeline_mode = #tpu.pipeline_mode<synchronous>, transform_indices = @transform_17, window_bounds = array<i64: 2, 1, 64>}, {pipeline_mode = #tpu.pipeline_mode<synchronous>, transform_indices = @transform_18, window_bounds = array<i64: 2, 64, 32>}, {pipeline_mode = #tpu.pipeline_mode<synchronous>, transform_indices = @transform_19, window_bounds = array<i64: 2, 1, 32>}, {pipeline_mode = #tpu.pipeline_mode<synchronous>, transform_indices = @transform_20, window_bounds = array<i64: 2, 1, 32>}, {pipeline_mode = #tpu.pipeline_mode<synchronous>, transform_indices = @transform_21, window_bounds = array<i64: 2, 1, 32>}, {pipeline_mode = #tpu.pipeline_mode<synchronous>, transform_indices = @transform_22, window_bounds = array<i64: 32, 32>}, {pipeline_mode = #tpu.pipeline_mode<synchronous>, transform_indices = @transform_23, window_bounds = array<i64: 1, 32>}, {pipeline_mode = #tpu.pipeline_mode<synchronous>, transform_indices = @transform_24, window_bounds = array<i64: 32, 32>}, {pipeline_mode = #tpu.pipeline_mode<synchronous>, transform_indices = @transform_25, window_bounds = array<i64: 1, 32>}, {pipeline_mode = #tpu.pipeline_mode<synchronous>, transform_indices = @transform_26, window_bounds = array<i64: 32, 16>}, {pipeline_mode = #tpu.pipeline_mode<synchronous>, transform_indices = @transform_27, window_bounds = array<i64: 1, 16>}, {pipeline_mode = #tpu.pipeline_mode<synchronous>, transform_indices = @transform_28, window_bounds = array<i64: 16, 128>}, {pipeline_mode = #tpu.pipeline_mode<synchronous>, transform_indices = @transform_29, window_bounds = array<i64: 1, 128>}, {pipeline_mode = #tpu.pipeline_mode<synchronous>, transform_indices = @transform_30, window_bounds = array<i64: 8, 128>}]} {
    %c0 = arith.constant 0 : index
    %c0_0 = arith.constant 0 : index
    %0 = vector.load %arg1[%c0, %c0_0] : memref<16x1xi32, #tpu.memory_space<vmem>>, vector<16x1xi32>
    %1 = tpu.iota {dimensions = array<i32: 1>} : vector<16x56xi32>
    %2 = vector.broadcast %0 : vector<16x1xi32> to vector<16x56xi32>
    %3 = arith.cmpi eq, %2, %1 : vector<16x56xi32>
    %cst = arith.constant 1.000000e+00 : f32
    %cst_1 = arith.constant 0.000000e+00 : f32
    %4 = vector.broadcast %cst : f32 to vector<16x56xf32>
    %5 = vector.broadcast %cst_1 : f32 to vector<16x56xf32>
    %6 = arith.select %3, %4, %5 : vector<16x56xi1>, vector<16x56xf32>
    %c0_2 = arith.constant 0 : index
    %c0_3 = arith.constant 0 : index
    %7 = vector.load %arg3[%c0_2, %c0_3] : memref<56x32xf32, #tpu.memory_space<vmem>>, vector<56x32xf32>
    %cst_4 = arith.constant dense<0.000000e+00> : vector<16x32xf32>
    %8 = tpu.matmul %6, %7, %cst_4 {dimension_numbers = #tpu.dot_dimension_numbers<[1], [0], [0], [1], [0, 0, 1, 1], [], []>} : vector<16x56xf32>, vector<56x32xf32>, vector<16x32xf32> -> vector<16x32xf32>
    %c0_5 = arith.constant 0 : index
    %c0_6 = arith.constant 0 : index
    %9 = vector.load %arg4[%c0_5, %c0_6] : memref<16x32xf32, #tpu.memory_space<vmem>>, vector<8x32xf32>
    %10 = tpu.concatenate %9, %9 in 0 : vector<8x32xf32>, vector<8x32xf32> -> vector<16x32xf32>
    %11 = arith.addf %8, %10 : vector<16x32xf32>
    %c0_7 = arith.constant 0 : index
    %c0_8 = arith.constant 0 : index
    %12 = vector.load %arg5[%c0_7, %c0_8] : memref<1x32xf32, #tpu.memory_space<vmem>>, vector<1x32xf32>
    %c0_9 = arith.constant 0 : index
    %c0_10 = arith.constant 0 : index
    %13 = vector.load %arg6[%c0_9, %c0_10] : memref<1x32xf32, #tpu.memory_space<vmem>>, vector<1x32xf32>
    %cst_11 = arith.constant dense<0.000000e+00> : vector<16xf32>
    %14 = vector.multi_reduction <add>, %11, %cst_11 [1] : vector<16x32xf32> to vector<16xf32>
    %15 = vector.shape_cast %14 : vector<16xf32> to vector<16x1xf32>
    %cst_12 = arith.constant 3.200000e+01 : f32
    %16 = vector.broadcast %cst_12 : f32 to vector<16x1xf32>
    %17 = arith.divf %15, %16 : vector<16x1xf32>
    %18 = vector.broadcast %17 : vector<16x1xf32> to vector<16x32xf32>
    %19 = arith.subf %11, %18 : vector<16x32xf32>
    %20 = arith.mulf %19, %19 : vector<16x32xf32>
    %cst_13 = arith.constant dense<0.000000e+00> : vector<16xf32>
    %21 = vector.multi_reduction <add>, %20, %cst_13 [1] : vector<16x32xf32> to vector<16xf32>
    %22 = vector.shape_cast %21 : vector<16xf32> to vector<16x1xf32>
    %cst_14 = arith.constant 3.200000e+01 : f32
    %23 = vector.broadcast %cst_14 : f32 to vector<16x1xf32>
    %24 = arith.divf %22, %23 : vector<16x1xf32>
    %cst_15 = arith.constant 9.99999996E-13 : f32
    %25 = vector.broadcast %cst_15 : f32 to vector<16x1xf32>
    %26 = arith.addf %24, %25 : vector<16x1xf32>
    %27 = math.rsqrt %26 : vector<16x1xf32>
    %28 = vector.broadcast %27 : vector<16x1xf32> to vector<16x32xf32>
    %29 = arith.mulf %19, %28 : vector<16x32xf32>
    %30 = vector.broadcast %12 : vector<1x32xf32> to vector<16x32xf32>
    %31 = arith.mulf %29, %30 : vector<16x32xf32>
    %32 = vector.broadcast %13 : vector<1x32xf32> to vector<16x32xf32>
    %33 = arith.addf %31, %32 : vector<16x32xf32>
    %c0_16 = arith.constant 0 : index
    %c0_17 = arith.constant 0 : index
    %c0_18 = arith.constant 0 : index
    %34 = vector.load %arg2[%c0_16, %c0_17, %c0_18] : memref<2x1x8xf32, #tpu.memory_space<vmem>>, vector<2x1x8xf32>
    %cst_19 = arith.constant 1.000000e+00 : f32
    %35 = vector.broadcast %cst_19 : f32 to vector<2x1x8xf32>
    %36 = arith.subf %35, %34 : vector<2x1x8xf32>
    %cst_20 = arith.constant -1.000000e+04 : f32
    %37 = vector.broadcast %cst_20 : f32 to vector<2x1x8xf32>
    %38 = arith.mulf %36, %37 : vector<2x1x8xf32>
    %c0_21 = arith.constant 0 : index
    %c0_22 = arith.constant 0 : index
    %c0_23 = arith.constant 0 : index
    %c0_24 = arith.constant 0 : index
    %39 = vector.load %arg7[%c0_21, %c0_22, %c0_23, %c0_24] : memref<2x2x32x16xf32, #tpu.memory_space<vmem>>, vector<1x1x32x16xf32>
    %40 = vector.shape_cast %39 : vector<1x1x32x16xf32> to vector<32x16xf32>
    %cst_25 = arith.constant dense<0.000000e+00> : vector<16x16xf32>
    %41 = tpu.matmul %33, %40, %cst_25 {dimension_numbers = #tpu.dot_dimension_numbers<[1], [0], [0], [1], [0, 0, 1, 1], [], []>} : vector<16x32xf32>, vector<32x16xf32>, vector<16x16xf32> -> vector<16x16xf32>
    %c0_26 = arith.constant 0 : index
    %c0_27 = arith.constant 0 : index
    %c0_28 = arith.constant 0 : index
    %c0_29 = arith.constant 0 : index
    %42 = vector.load %arg8[%c0_26, %c0_27, %c0_28, %c0_29] : memref<2x2x1x16xf32, #tpu.memory_space<vmem>>, vector<1x1x1x16xf32>
    %43 = vector.shape_cast %42 : vector<1x1x1x16xf32> to vector<1x16xf32>
    %44 = vector.broadcast %43 : vector<1x16xf32> to vector<16x16xf32>
    %45 = arith.addf %41, %44 : vector<16x16xf32>
    %c0_30 = arith.constant 0 : index
    %c0_31 = arith.constant 0 : index
    %c0_32 = arith.constant 0 : index
    %c0_33 = arith.constant 0 : index
    %46 = vector.load %arg9[%c0_30, %c0_31, %c0_32, %c0_33] : memref<2x2x32x16xf32, #tpu.memory_space<vmem>>, vector<1x1x32x16xf32>
    %47 = vector.shape_cast %46 : vector<1x1x32x16xf32> to vector<32x16xf32>
    %cst_34 = arith.constant dense<0.000000e+00> : vector<16x16xf32>
    %48 = tpu.matmul %33, %47, %cst_34 {dimension_numbers = #tpu.dot_dimension_numbers<[1], [0], [0], [1], [0, 0, 1, 1], [], []>} : vector<16x32xf32>, vector<32x16xf32>, vector<16x16xf32> -> vector<16x16xf32>
    %c0_35 = arith.constant 0 : index
    %c0_36 = arith.constant 0 : index
    %c0_37 = arith.constant 0 : index
    %c0_38 = arith.constant 0 : index
    %49 = vector.load %arg10[%c0_35, %c0_36, %c0_37, %c0_38] : memref<2x2x1x16xf32, #tpu.memory_space<vmem>>, vector<1x1x1x16xf32>
    %50 = vector.shape_cast %49 : vector<1x1x1x16xf32> to vector<1x16xf32>
    %51 = vector.broadcast %50 : vector<1x16xf32> to vector<16x16xf32>
    %52 = arith.addf %48, %51 : vector<16x16xf32>
    %c0_39 = arith.constant 0 : index
    %c0_40 = arith.constant 0 : index
    %c0_41 = arith.constant 0 : index
    %c0_42 = arith.constant 0 : index
    %53 = vector.load %arg11[%c0_39, %c0_40, %c0_41, %c0_42] : memref<2x2x32x16xf32, #tpu.memory_space<vmem>>, vector<1x1x32x16xf32>
    %54 = vector.shape_cast %53 : vector<1x1x32x16xf32> to vector<32x16xf32>
    %cst_43 = arith.constant dense<0.000000e+00> : vector<16x16xf32>
    %55 = tpu.matmul %33, %54, %cst_43 {dimension_numbers = #tpu.dot_dimension_numbers<[1], [0], [0], [1], [0, 0, 1, 1], [], []>} : vector<16x32xf32>, vector<32x16xf32>, vector<16x16xf32> -> vector<16x16xf32>
    %c0_44 = arith.constant 0 : index
    %c0_45 = arith.constant 0 : index
    %c0_46 = arith.constant 0 : index
    %c0_47 = arith.constant 0 : index
    %56 = vector.load %arg12[%c0_44, %c0_45, %c0_46, %c0_47] : memref<2x2x1x16xf32, #tpu.memory_space<vmem>>, vector<1x1x1x16xf32>
    %57 = vector.shape_cast %56 : vector<1x1x1x16xf32> to vector<1x16xf32>
    %58 = vector.broadcast %57 : vector<1x16xf32> to vector<16x16xf32>
    %59 = arith.addf %55, %58 : vector<16x16xf32>
    %60 = vector.shape_cast %45 : vector<16x16xf32> to vector<2x8x16xf32>
    %61 = vector.shape_cast %52 : vector<16x16xf32> to vector<2x8x16xf32>
    %62 = vector.shape_cast %59 : vector<16x16xf32> to vector<2x8x16xf32>
    "tpu.trace_start"() <{level = 10 : i32, message = "bqd,bkd->bqk"}> : () -> ()
    %cst_48 = arith.constant dense<0.000000e+00> : vector<2x8x8xf32>
    %63 = tpu.matmul %60, %61, %cst_48 {dimension_numbers = #tpu.dot_dimension_numbers<[2], [2], [1], [1], [0, 0, 0, 1, 1, 1], [0], [0]>} : vector<2x8x16xf32>, vector<2x8x16xf32>, vector<2x8x8xf32> -> vector<2x8x8xf32>
    "tpu.trace_stop"() : () -> ()
    %64 = vector.broadcast %38 : vector<2x1x8xf32> to vector<2x8x8xf32>
    %65 = arith.addf %63, %64 : vector<2x8x8xf32>
    %cst_49 = arith.constant dense<0xFF800000> : vector<2x8xf32>
    %66 = vector.multi_reduction <maximumf>, %65, %cst_49 [2] : vector<2x8x8xf32> to vector<2x8xf32>
    %67 = vector.shape_cast %66 : vector<2x8xf32> to vector<2x8x1xf32>
    %68 = vector.broadcast %67 : vector<2x8x1xf32> to vector<2x8x8xf32>
    %69 = arith.subf %65, %68 : vector<2x8x8xf32>
    %70 = math.exp %69 : vector<2x8x8xf32>
    %cst_50 = arith.constant dense<0.000000e+00> : vector<2x8xf32>
    %71 = vector.multi_reduction <add>, %70, %cst_50 [2] : vector<2x8x8xf32> to vector<2x8xf32>
    %72 = vector.shape_cast %71 : vector<2x8xf32> to vector<2x8x1xf32>
    %73 = tpu.reciprocal %72 {approx = true} : vector<2x8x1xf32> -> vector<2x8x1xf32>
    %74 = vector.broadcast %73 : vector<2x8x1xf32> to vector<2x8x8xf32>
    %75 = arith.mulf %70, %74 : vector<2x8x8xf32>
    "tpu.trace_start"() <{level = 10 : i32, message = "bqk,bkd->bqd"}> : () -> ()
    %cst_51 = arith.constant dense<0.000000e+00> : vector<2x8x16xf32>
    %76 = tpu.matmul %75, %62, %cst_51 {dimension_numbers = #tpu.dot_dimension_numbers<[2], [1], [1], [2], [0, 0, 0, 1, 1, 2], [0], [0]>} : vector<2x8x8xf32>, vector<2x8x16xf32>, vector<2x8x16xf32> -> vector<2x8x16xf32>
    "tpu.trace_stop"() : () -> ()
    %77 = vector.shape_cast %76 : vector<2x8x16xf32> to vector<16x16xf32>
    %c0_52 = arith.constant 0 : index
    %c0_53 = arith.constant 0 : index
    %c0_54 = arith.constant 0 : index
    %c0_55 = arith.constant 0 : index
    %78 = vector.load %arg13[%c0_52, %c0_53, %c0_54, %c0_55] : memref<2x2x16x32xf32, #tpu.memory_space<vmem>>, vector<1x1x16x32xf32>
    %79 = vector.shape_cast %78 : vector<1x1x16x32xf32> to vector<16x32xf32>
    %cst_56 = arith.constant dense<0.000000e+00> : vector<16x32xf32>
    %80 = tpu.matmul %77, %79, %cst_56 {dimension_numbers = #tpu.dot_dimension_numbers<[1], [0], [0], [1], [0, 0, 1, 1], [], []>} : vector<16x16xf32>, vector<16x32xf32>, vector<16x32xf32> -> vector<16x32xf32>
    %c0_57 = arith.constant 0 : index
    %c1 = arith.constant 1 : index
    %c0_58 = arith.constant 0 : index
    %c0_59 = arith.constant 0 : index
    %81 = vector.load %arg7[%c0_57, %c1, %c0_58, %c0_59] : memref<2x2x32x16xf32, #tpu.memory_space<vmem>>, vector<1x1x32x16xf32>
    %82 = vector.shape_cast %81 : vector<1x1x32x16xf32> to vector<32x16xf32>
    %cst_60 = arith.constant dense<0.000000e+00> : vector<16x16xf32>
    %83 = tpu.matmul %33, %82, %cst_60 {dimension_numbers = #tpu.dot_dimension_numbers<[1], [0], [0], [1], [0, 0, 1, 1], [], []>} : vector<16x32xf32>, vector<32x16xf32>, vector<16x16xf32> -> vector<16x16xf32>
    %c0_61 = arith.constant 0 : index
    %c1_62 = arith.constant 1 : index
    %c0_63 = arith.constant 0 : index
    %c0_64 = arith.constant 0 : index
    %84 = vector.load %arg8[%c0_61, %c1_62, %c0_63, %c0_64] : memref<2x2x1x16xf32, #tpu.memory_space<vmem>>, vector<1x1x1x16xf32>
    %85 = vector.shape_cast %84 : vector<1x1x1x16xf32> to vector<1x16xf32>
    %86 = vector.broadcast %85 : vector<1x16xf32> to vector<16x16xf32>
    %87 = arith.addf %83, %86 : vector<16x16xf32>
    %c0_65 = arith.constant 0 : index
    %c1_66 = arith.constant 1 : index
    %c0_67 = arith.constant 0 : index
    %c0_68 = arith.constant 0 : index
    %88 = vector.load %arg9[%c0_65, %c1_66, %c0_67, %c0_68] : memref<2x2x32x16xf32, #tpu.memory_space<vmem>>, vector<1x1x32x16xf32>
    %89 = vector.shape_cast %88 : vector<1x1x32x16xf32> to vector<32x16xf32>
    %cst_69 = arith.constant dense<0.000000e+00> : vector<16x16xf32>
    %90 = tpu.matmul %33, %89, %cst_69 {dimension_numbers = #tpu.dot_dimension_numbers<[1], [0], [0], [1], [0, 0, 1, 1], [], []>} : vector<16x32xf32>, vector<32x16xf32>, vector<16x16xf32> -> vector<16x16xf32>
    %c0_70 = arith.constant 0 : index
    %c1_71 = arith.constant 1 : index
    %c0_72 = arith.constant 0 : index
    %c0_73 = arith.constant 0 : index
    %91 = vector.load %arg10[%c0_70, %c1_71, %c0_72, %c0_73] : memref<2x2x1x16xf32, #tpu.memory_space<vmem>>, vector<1x1x1x16xf32>
    %92 = vector.shape_cast %91 : vector<1x1x1x16xf32> to vector<1x16xf32>
    %93 = vector.broadcast %92 : vector<1x16xf32> to vector<16x16xf32>
    %94 = arith.addf %90, %93 : vector<16x16xf32>
    %c0_74 = arith.constant 0 : index
    %c1_75 = arith.constant 1 : index
    %c0_76 = arith.constant 0 : index
    %c0_77 = arith.constant 0 : index
    %95 = vector.load %arg11[%c0_74, %c1_75, %c0_76, %c0_77] : memref<2x2x32x16xf32, #tpu.memory_space<vmem>>, vector<1x1x32x16xf32>
    %96 = vector.shape_cast %95 : vector<1x1x32x16xf32> to vector<32x16xf32>
    %cst_78 = arith.constant dense<0.000000e+00> : vector<16x16xf32>
    %97 = tpu.matmul %33, %96, %cst_78 {dimension_numbers = #tpu.dot_dimension_numbers<[1], [0], [0], [1], [0, 0, 1, 1], [], []>} : vector<16x32xf32>, vector<32x16xf32>, vector<16x16xf32> -> vector<16x16xf32>
    %c0_79 = arith.constant 0 : index
    %c1_80 = arith.constant 1 : index
    %c0_81 = arith.constant 0 : index
    %c0_82 = arith.constant 0 : index
    %98 = vector.load %arg12[%c0_79, %c1_80, %c0_81, %c0_82] : memref<2x2x1x16xf32, #tpu.memory_space<vmem>>, vector<1x1x1x16xf32>
    %99 = vector.shape_cast %98 : vector<1x1x1x16xf32> to vector<1x16xf32>
    %100 = vector.broadcast %99 : vector<1x16xf32> to vector<16x16xf32>
    %101 = arith.addf %97, %100 : vector<16x16xf32>
    %102 = vector.shape_cast %87 : vector<16x16xf32> to vector<2x8x16xf32>
    %103 = vector.shape_cast %94 : vector<16x16xf32> to vector<2x8x16xf32>
    %104 = vector.shape_cast %101 : vector<16x16xf32> to vector<2x8x16xf32>
    "tpu.trace_start"() <{level = 10 : i32, message = "bqd,bkd->bqk"}> : () -> ()
    %cst_83 = arith.constant dense<0.000000e+00> : vector<2x8x8xf32>
    %105 = tpu.matmul %102, %103, %cst_83 {dimension_numbers = #tpu.dot_dimension_numbers<[2], [2], [1], [1], [0, 0, 0, 1, 1, 1], [0], [0]>} : vector<2x8x16xf32>, vector<2x8x16xf32>, vector<2x8x8xf32> -> vector<2x8x8xf32>
    "tpu.trace_stop"() : () -> ()
    %106 = vector.broadcast %38 : vector<2x1x8xf32> to vector<2x8x8xf32>
    %107 = arith.addf %105, %106 : vector<2x8x8xf32>
    %cst_84 = arith.constant dense<0xFF800000> : vector<2x8xf32>
    %108 = vector.multi_reduction <maximumf>, %107, %cst_84 [2] : vector<2x8x8xf32> to vector<2x8xf32>
    %109 = vector.shape_cast %108 : vector<2x8xf32> to vector<2x8x1xf32>
    %110 = vector.broadcast %109 : vector<2x8x1xf32> to vector<2x8x8xf32>
    %111 = arith.subf %107, %110 : vector<2x8x8xf32>
    %112 = math.exp %111 : vector<2x8x8xf32>
    %cst_85 = arith.constant dense<0.000000e+00> : vector<2x8xf32>
    %113 = vector.multi_reduction <add>, %112, %cst_85 [2] : vector<2x8x8xf32> to vector<2x8xf32>
    %114 = vector.shape_cast %113 : vector<2x8xf32> to vector<2x8x1xf32>
    %115 = tpu.reciprocal %114 {approx = true} : vector<2x8x1xf32> -> vector<2x8x1xf32>
    %116 = vector.broadcast %115 : vector<2x8x1xf32> to vector<2x8x8xf32>
    %117 = arith.mulf %112, %116 : vector<2x8x8xf32>
    "tpu.trace_start"() <{level = 10 : i32, message = "bqk,bkd->bqd"}> : () -> ()
    %cst_86 = arith.constant dense<0.000000e+00> : vector<2x8x16xf32>
    %118 = tpu.matmul %117, %104, %cst_86 {dimension_numbers = #tpu.dot_dimension_numbers<[2], [1], [1], [2], [0, 0, 0, 1, 1, 2], [0], [0]>} : vector<2x8x8xf32>, vector<2x8x16xf32>, vector<2x8x16xf32> -> vector<2x8x16xf32>
    "tpu.trace_stop"() : () -> ()
    %119 = vector.shape_cast %118 : vector<2x8x16xf32> to vector<16x16xf32>
    %c0_87 = arith.constant 0 : index
    %c1_88 = arith.constant 1 : index
    %c0_89 = arith.constant 0 : index
    %c0_90 = arith.constant 0 : index
    %120 = vector.load %arg13[%c0_87, %c1_88, %c0_89, %c0_90] : memref<2x2x16x32xf32, #tpu.memory_space<vmem>>, vector<1x1x16x32xf32>
    %121 = vector.shape_cast %120 : vector<1x1x16x32xf32> to vector<16x32xf32>
    %cst_91 = arith.constant dense<0.000000e+00> : vector<16x32xf32>
    %122 = tpu.matmul %119, %121, %cst_91 {dimension_numbers = #tpu.dot_dimension_numbers<[1], [0], [0], [1], [0, 0, 1, 1], [], []>} : vector<16x16xf32>, vector<16x32xf32>, vector<16x32xf32> -> vector<16x32xf32>
    %123 = arith.addf %80, %122 : vector<16x32xf32>
    %c0_92 = arith.constant 0 : index
    %c0_93 = arith.constant 0 : index
    %c0_94 = arith.constant 0 : index
    %124 = vector.load %arg14[%c0_92, %c0_93, %c0_94] : memref<2x1x32xf32, #tpu.memory_space<vmem>>, vector<1x1x32xf32>
    %125 = vector.shape_cast %124 : vector<1x1x32xf32> to vector<1x32xf32>
    %126 = vector.broadcast %125 : vector<1x32xf32> to vector<16x32xf32>
    %127 = arith.addf %123, %126 : vector<16x32xf32>
    %128 = arith.addf %33, %127 : vector<16x32xf32>
    %c0_95 = arith.constant 0 : index
    %c0_96 = arith.constant 0 : index
    %c0_97 = arith.constant 0 : index
    %129 = vector.load %arg15[%c0_95, %c0_96, %c0_97] : memref<2x1x32xf32, #tpu.memory_space<vmem>>, vector<1x1x32xf32>
    %130 = vector.shape_cast %129 : vector<1x1x32xf32> to vector<1x32xf32>
    %c0_98 = arith.constant 0 : index
    %c0_99 = arith.constant 0 : index
    %c0_100 = arith.constant 0 : index
    %131 = vector.load %arg16[%c0_98, %c0_99, %c0_100] : memref<2x1x32xf32, #tpu.memory_space<vmem>>, vector<1x1x32xf32>
    %132 = vector.shape_cast %131 : vector<1x1x32xf32> to vector<1x32xf32>
    %cst_101 = arith.constant dense<0.000000e+00> : vector<16xf32>
    %133 = vector.multi_reduction <add>, %128, %cst_101 [1] : vector<16x32xf32> to vector<16xf32>
    %134 = vector.shape_cast %133 : vector<16xf32> to vector<16x1xf32>
    %cst_102 = arith.constant 3.200000e+01 : f32
    %135 = vector.broadcast %cst_102 : f32 to vector<16x1xf32>
    %136 = arith.divf %134, %135 : vector<16x1xf32>
    %137 = vector.broadcast %136 : vector<16x1xf32> to vector<16x32xf32>
    %138 = arith.subf %128, %137 : vector<16x32xf32>
    %139 = arith.mulf %138, %138 : vector<16x32xf32>
    %cst_103 = arith.constant dense<0.000000e+00> : vector<16xf32>
    %140 = vector.multi_reduction <add>, %139, %cst_103 [1] : vector<16x32xf32> to vector<16xf32>
    %141 = vector.shape_cast %140 : vector<16xf32> to vector<16x1xf32>
    %cst_104 = arith.constant 3.200000e+01 : f32
    %142 = vector.broadcast %cst_104 : f32 to vector<16x1xf32>
    %143 = arith.divf %141, %142 : vector<16x1xf32>
    %cst_105 = arith.constant 9.99999996E-13 : f32
    %144 = vector.broadcast %cst_105 : f32 to vector<16x1xf32>
    %145 = arith.addf %143, %144 : vector<16x1xf32>
    %146 = math.rsqrt %145 : vector<16x1xf32>
    %147 = vector.broadcast %146 : vector<16x1xf32> to vector<16x32xf32>
    %148 = arith.mulf %138, %147 : vector<16x32xf32>
    %149 = vector.broadcast %130 : vector<1x32xf32> to vector<16x32xf32>
    %150 = arith.mulf %148, %149 : vector<16x32xf32>
    %151 = vector.broadcast %132 : vector<1x32xf32> to vector<16x32xf32>
    %152 = arith.addf %150, %151 : vector<16x32xf32>
    %c0_106 = arith.constant 0 : index
    %c0_107 = arith.constant 0 : index
    %c0_108 = arith.constant 0 : index
    %153 = vector.load %arg17[%c0_106, %c0_107, %c0_108] : memref<2x32x64xf32, #tpu.memory_space<vmem>>, vector<1x32x64xf32>
    %154 = vector.shape_cast %153 : vector<1x32x64xf32> to vector<32x64xf32>
    %cst_109 = arith.constant dense<0.000000e+00> : vector<16x64xf32>
    %155 = tpu.matmul %152, %154, %cst_109 {dimension_numbers = #tpu.dot_dimension_numbers<[1], [0], [0], [1], [0, 0, 1, 1], [], []>} : vector<16x32xf32>, vector<32x64xf32>, vector<16x64xf32> -> vector<16x64xf32>
    %c0_110 = arith.constant 0 : index
    %c0_111 = arith.constant 0 : index
    %c0_112 = arith.constant 0 : index
    %156 = vector.load %arg18[%c0_110, %c0_111, %c0_112] : memref<2x1x64xf32, #tpu.memory_space<vmem>>, vector<1x1x64xf32>
    %157 = vector.shape_cast %156 : vector<1x1x64xf32> to vector<1x64xf32>
    %158 = vector.broadcast %157 : vector<1x64xf32> to vector<16x64xf32>
    %159 = arith.addf %155, %158 : vector<16x64xf32>
    %cst_113 = arith.constant 5.000000e-01 : f32
    %160 = vector.broadcast %cst_113 : f32 to vector<16x64xf32>
    %161 = arith.mulf %160, %159 : vector<16x64xf32>
    %cst_114 = arith.constant 4.471500e-02 : f32
    %162 = vector.broadcast %cst_114 : f32 to vector<16x64xf32>
    %163 = arith.mulf %162, %159 : vector<16x64xf32>
    %164 = arith.mulf %163, %159 : vector<16x64xf32>
    %165 = arith.mulf %164, %159 : vector<16x64xf32>
    %166 = arith.addf %159, %165 : vector<16x64xf32>
    %cst_115 = arith.constant 0.797884583 : f32
    %167 = vector.broadcast %cst_115 : f32 to vector<16x64xf32>
    %168 = arith.mulf %167, %166 : vector<16x64xf32>
    %169 = math.tanh %168 : vector<16x64xf32>
    %cst_116 = arith.constant 1.000000e+00 : f32
    %170 = vector.broadcast %cst_116 : f32 to vector<16x64xf32>
    %171 = arith.addf %170, %169 : vector<16x64xf32>
    %172 = arith.mulf %161, %171 : vector<16x64xf32>
    %c0_117 = arith.constant 0 : index
    %c0_118 = arith.constant 0 : index
    %c0_119 = arith.constant 0 : index
    %173 = vector.load %arg19[%c0_117, %c0_118, %c0_119] : memref<2x64x32xf32, #tpu.memory_space<vmem>>, vector<1x64x32xf32>
    %174 = vector.shape_cast %173 : vector<1x64x32xf32> to vector<64x32xf32>
    %cst_120 = arith.constant dense<0.000000e+00> : vector<16x32xf32>
    %175 = tpu.matmul %172, %174, %cst_120 {dimension_numbers = #tpu.dot_dimension_numbers<[1], [0], [0], [1], [0, 0, 1, 1], [], []>} : vector<16x64xf32>, vector<64x32xf32>, vector<16x32xf32> -> vector<16x32xf32>
    %c0_121 = arith.constant 0 : index
    %c0_122 = arith.constant 0 : index
    %c0_123 = arith.constant 0 : index
    %176 = vector.load %arg20[%c0_121, %c0_122, %c0_123] : memref<2x1x32xf32, #tpu.memory_space<vmem>>, vector<1x1x32xf32>
    %177 = vector.shape_cast %176 : vector<1x1x32xf32> to vector<1x32xf32>
    %178 = vector.broadcast %177 : vector<1x32xf32> to vector<16x32xf32>
    %179 = arith.addf %175, %178 : vector<16x32xf32>
    %180 = arith.addf %152, %179 : vector<16x32xf32>
    %c0_124 = arith.constant 0 : index
    %c0_125 = arith.constant 0 : index
    %c0_126 = arith.constant 0 : index
    %181 = vector.load %arg21[%c0_124, %c0_125, %c0_126] : memref<2x1x32xf32, #tpu.memory_space<vmem>>, vector<1x1x32xf32>
    %182 = vector.shape_cast %181 : vector<1x1x32xf32> to vector<1x32xf32>
    %c0_127 = arith.constant 0 : index
    %c0_128 = arith.constant 0 : index
    %c0_129 = arith.constant 0 : index
    %183 = vector.load %arg22[%c0_127, %c0_128, %c0_129] : memref<2x1x32xf32, #tpu.memory_space<vmem>>, vector<1x1x32xf32>
    %184 = vector.shape_cast %183 : vector<1x1x32xf32> to vector<1x32xf32>
    %cst_130 = arith.constant dense<0.000000e+00> : vector<16xf32>
    %185 = vector.multi_reduction <add>, %180, %cst_130 [1] : vector<16x32xf32> to vector<16xf32>
    %186 = vector.shape_cast %185 : vector<16xf32> to vector<16x1xf32>
    %cst_131 = arith.constant 3.200000e+01 : f32
    %187 = vector.broadcast %cst_131 : f32 to vector<16x1xf32>
    %188 = arith.divf %186, %187 : vector<16x1xf32>
    %189 = vector.broadcast %188 : vector<16x1xf32> to vector<16x32xf32>
    %190 = arith.subf %180, %189 : vector<16x32xf32>
    %191 = arith.mulf %190, %190 : vector<16x32xf32>
    %cst_132 = arith.constant dense<0.000000e+00> : vector<16xf32>
    %192 = vector.multi_reduction <add>, %191, %cst_132 [1] : vector<16x32xf32> to vector<16xf32>
    %193 = vector.shape_cast %192 : vector<16xf32> to vector<16x1xf32>
    %cst_133 = arith.constant 3.200000e+01 : f32
    %194 = vector.broadcast %cst_133 : f32 to vector<16x1xf32>
    %195 = arith.divf %193, %194 : vector<16x1xf32>
    %cst_134 = arith.constant 9.99999996E-13 : f32
    %196 = vector.broadcast %cst_134 : f32 to vector<16x1xf32>
    %197 = arith.addf %195, %196 : vector<16x1xf32>
    %198 = math.rsqrt %197 : vector<16x1xf32>
    %199 = vector.broadcast %198 : vector<16x1xf32> to vector<16x32xf32>
    %200 = arith.mulf %190, %199 : vector<16x32xf32>
    %201 = vector.broadcast %182 : vector<1x32xf32> to vector<16x32xf32>
    %202 = arith.mulf %200, %201 : vector<16x32xf32>
    %203 = vector.broadcast %184 : vector<1x32xf32> to vector<16x32xf32>
    %204 = arith.addf %202, %203 : vector<16x32xf32>
    %c1_135 = arith.constant 1 : index
    %c0_136 = arith.constant 0 : index
    %c0_137 = arith.constant 0 : index
    %c0_138 = arith.constant 0 : index
    %205 = vector.load %arg7[%c1_135, %c0_136, %c0_137, %c0_138] : memref<2x2x32x16xf32, #tpu.memory_space<vmem>>, vector<1x1x32x16xf32>
    %206 = vector.shape_cast %205 : vector<1x1x32x16xf32> to vector<32x16xf32>
    %cst_139 = arith.constant dense<0.000000e+00> : vector<16x16xf32>
    %207 = tpu.matmul %204, %206, %cst_139 {dimension_numbers = #tpu.dot_dimension_numbers<[1], [0], [0], [1], [0, 0, 1, 1], [], []>} : vector<16x32xf32>, vector<32x16xf32>, vector<16x16xf32> -> vector<16x16xf32>
    %c1_140 = arith.constant 1 : index
    %c0_141 = arith.constant 0 : index
    %c0_142 = arith.constant 0 : index
    %c0_143 = arith.constant 0 : index
    %208 = vector.load %arg8[%c1_140, %c0_141, %c0_142, %c0_143] : memref<2x2x1x16xf32, #tpu.memory_space<vmem>>, vector<1x1x1x16xf32>
    %209 = vector.shape_cast %208 : vector<1x1x1x16xf32> to vector<1x16xf32>
    %210 = vector.broadcast %209 : vector<1x16xf32> to vector<16x16xf32>
    %211 = arith.addf %207, %210 : vector<16x16xf32>
    %c1_144 = arith.constant 1 : index
    %c0_145 = arith.constant 0 : index
    %c0_146 = arith.constant 0 : index
    %c0_147 = arith.constant 0 : index
    %212 = vector.load %arg9[%c1_144, %c0_145, %c0_146, %c0_147] : memref<2x2x32x16xf32, #tpu.memory_space<vmem>>, vector<1x1x32x16xf32>
    %213 = vector.shape_cast %212 : vector<1x1x32x16xf32> to vector<32x16xf32>
    %cst_148 = arith.constant dense<0.000000e+00> : vector<16x16xf32>
    %214 = tpu.matmul %204, %213, %cst_148 {dimension_numbers = #tpu.dot_dimension_numbers<[1], [0], [0], [1], [0, 0, 1, 1], [], []>} : vector<16x32xf32>, vector<32x16xf32>, vector<16x16xf32> -> vector<16x16xf32>
    %c1_149 = arith.constant 1 : index
    %c0_150 = arith.constant 0 : index
    %c0_151 = arith.constant 0 : index
    %c0_152 = arith.constant 0 : index
    %215 = vector.load %arg10[%c1_149, %c0_150, %c0_151, %c0_152] : memref<2x2x1x16xf32, #tpu.memory_space<vmem>>, vector<1x1x1x16xf32>
    %216 = vector.shape_cast %215 : vector<1x1x1x16xf32> to vector<1x16xf32>
    %217 = vector.broadcast %216 : vector<1x16xf32> to vector<16x16xf32>
    %218 = arith.addf %214, %217 : vector<16x16xf32>
    %c1_153 = arith.constant 1 : index
    %c0_154 = arith.constant 0 : index
    %c0_155 = arith.constant 0 : index
    %c0_156 = arith.constant 0 : index
    %219 = vector.load %arg11[%c1_153, %c0_154, %c0_155, %c0_156] : memref<2x2x32x16xf32, #tpu.memory_space<vmem>>, vector<1x1x32x16xf32>
    %220 = vector.shape_cast %219 : vector<1x1x32x16xf32> to vector<32x16xf32>
    %cst_157 = arith.constant dense<0.000000e+00> : vector<16x16xf32>
    %221 = tpu.matmul %204, %220, %cst_157 {dimension_numbers = #tpu.dot_dimension_numbers<[1], [0], [0], [1], [0, 0, 1, 1], [], []>} : vector<16x32xf32>, vector<32x16xf32>, vector<16x16xf32> -> vector<16x16xf32>
    %c1_158 = arith.constant 1 : index
    %c0_159 = arith.constant 0 : index
    %c0_160 = arith.constant 0 : index
    %c0_161 = arith.constant 0 : index
    %222 = vector.load %arg12[%c1_158, %c0_159, %c0_160, %c0_161] : memref<2x2x1x16xf32, #tpu.memory_space<vmem>>, vector<1x1x1x16xf32>
    %223 = vector.shape_cast %222 : vector<1x1x1x16xf32> to vector<1x16xf32>
    %224 = vector.broadcast %223 : vector<1x16xf32> to vector<16x16xf32>
    %225 = arith.addf %221, %224 : vector<16x16xf32>
    %226 = vector.shape_cast %211 : vector<16x16xf32> to vector<2x8x16xf32>
    %227 = vector.shape_cast %218 : vector<16x16xf32> to vector<2x8x16xf32>
    %228 = vector.shape_cast %225 : vector<16x16xf32> to vector<2x8x16xf32>
    "tpu.trace_start"() <{level = 10 : i32, message = "bqd,bkd->bqk"}> : () -> ()
    %cst_162 = arith.constant dense<0.000000e+00> : vector<2x8x8xf32>
    %229 = tpu.matmul %226, %227, %cst_162 {dimension_numbers = #tpu.dot_dimension_numbers<[2], [2], [1], [1], [0, 0, 0, 1, 1, 1], [0], [0]>} : vector<2x8x16xf32>, vector<2x8x16xf32>, vector<2x8x8xf32> -> vector<2x8x8xf32>
    "tpu.trace_stop"() : () -> ()
    %230 = vector.broadcast %38 : vector<2x1x8xf32> to vector<2x8x8xf32>
    %231 = arith.addf %229, %230 : vector<2x8x8xf32>
    %cst_163 = arith.constant dense<0xFF800000> : vector<2x8xf32>
    %232 = vector.multi_reduction <maximumf>, %231, %cst_163 [2] : vector<2x8x8xf32> to vector<2x8xf32>
    %233 = vector.shape_cast %232 : vector<2x8xf32> to vector<2x8x1xf32>
    %234 = vector.broadcast %233 : vector<2x8x1xf32> to vector<2x8x8xf32>
    %235 = arith.subf %231, %234 : vector<2x8x8xf32>
    %236 = math.exp %235 : vector<2x8x8xf32>
    %cst_164 = arith.constant dense<0.000000e+00> : vector<2x8xf32>
    %237 = vector.multi_reduction <add>, %236, %cst_164 [2] : vector<2x8x8xf32> to vector<2x8xf32>
    %238 = vector.shape_cast %237 : vector<2x8xf32> to vector<2x8x1xf32>
    %239 = tpu.reciprocal %238 {approx = true} : vector<2x8x1xf32> -> vector<2x8x1xf32>
    %240 = vector.broadcast %239 : vector<2x8x1xf32> to vector<2x8x8xf32>
    %241 = arith.mulf %236, %240 : vector<2x8x8xf32>
    "tpu.trace_start"() <{level = 10 : i32, message = "bqk,bkd->bqd"}> : () -> ()
    %cst_165 = arith.constant dense<0.000000e+00> : vector<2x8x16xf32>
    %242 = tpu.matmul %241, %228, %cst_165 {dimension_numbers = #tpu.dot_dimension_numbers<[2], [1], [1], [2], [0, 0, 0, 1, 1, 2], [0], [0]>} : vector<2x8x8xf32>, vector<2x8x16xf32>, vector<2x8x16xf32> -> vector<2x8x16xf32>
    "tpu.trace_stop"() : () -> ()
    %243 = vector.shape_cast %242 : vector<2x8x16xf32> to vector<16x16xf32>
    %c1_166 = arith.constant 1 : index
    %c0_167 = arith.constant 0 : index
    %c0_168 = arith.constant 0 : index
    %c0_169 = arith.constant 0 : index
    %244 = vector.load %arg13[%c1_166, %c0_167, %c0_168, %c0_169] : memref<2x2x16x32xf32, #tpu.memory_space<vmem>>, vector<1x1x16x32xf32>
    %245 = vector.shape_cast %244 : vector<1x1x16x32xf32> to vector<16x32xf32>
    %cst_170 = arith.constant dense<0.000000e+00> : vector<16x32xf32>
    %246 = tpu.matmul %243, %245, %cst_170 {dimension_numbers = #tpu.dot_dimension_numbers<[1], [0], [0], [1], [0, 0, 1, 1], [], []>} : vector<16x16xf32>, vector<16x32xf32>, vector<16x32xf32> -> vector<16x32xf32>
    %c1_171 = arith.constant 1 : index
    %c1_172 = arith.constant 1 : index
    %c0_173 = arith.constant 0 : index
    %c0_174 = arith.constant 0 : index
    %247 = vector.load %arg7[%c1_171, %c1_172, %c0_173, %c0_174] : memref<2x2x32x16xf32, #tpu.memory_space<vmem>>, vector<1x1x32x16xf32>
    %248 = vector.shape_cast %247 : vector<1x1x32x16xf32> to vector<32x16xf32>
    %cst_175 = arith.constant dense<0.000000e+00> : vector<16x16xf32>
    %249 = tpu.matmul %204, %248, %cst_175 {dimension_numbers = #tpu.dot_dimension_numbers<[1], [0], [0], [1], [0, 0, 1, 1], [], []>} : vector<16x32xf32>, vector<32x16xf32>, vector<16x16xf32> -> vector<16x16xf32>
    %c1_176 = arith.constant 1 : index
    %c1_177 = arith.constant 1 : index
    %c0_178 = arith.constant 0 : index
    %c0_179 = arith.constant 0 : index
    %250 = vector.load %arg8[%c1_176, %c1_177, %c0_178, %c0_179] : memref<2x2x1x16xf32, #tpu.memory_space<vmem>>, vector<1x1x1x16xf32>
    %251 = vector.shape_cast %250 : vector<1x1x1x16xf32> to vector<1x16xf32>
    %252 = vector.broadcast %251 : vector<1x16xf32> to vector<16x16xf32>
    %253 = arith.addf %249, %252 : vector<16x16xf32>
    %c1_180 = arith.constant 1 : index
    %c1_181 = arith.constant 1 : index
    %c0_182 = arith.constant 0 : index
    %c0_183 = arith.constant 0 : index
    %254 = vector.load %arg9[%c1_180, %c1_181, %c0_182, %c0_183] : memref<2x2x32x16xf32, #tpu.memory_space<vmem>>, vector<1x1x32x16xf32>
    %255 = vector.shape_cast %254 : vector<1x1x32x16xf32> to vector<32x16xf32>
    %cst_184 = arith.constant dense<0.000000e+00> : vector<16x16xf32>
    %256 = tpu.matmul %204, %255, %cst_184 {dimension_numbers = #tpu.dot_dimension_numbers<[1], [0], [0], [1], [0, 0, 1, 1], [], []>} : vector<16x32xf32>, vector<32x16xf32>, vector<16x16xf32> -> vector<16x16xf32>
    %c1_185 = arith.constant 1 : index
    %c1_186 = arith.constant 1 : index
    %c0_187 = arith.constant 0 : index
    %c0_188 = arith.constant 0 : index
    %257 = vector.load %arg10[%c1_185, %c1_186, %c0_187, %c0_188] : memref<2x2x1x16xf32, #tpu.memory_space<vmem>>, vector<1x1x1x16xf32>
    %258 = vector.shape_cast %257 : vector<1x1x1x16xf32> to vector<1x16xf32>
    %259 = vector.broadcast %258 : vector<1x16xf32> to vector<16x16xf32>
    %260 = arith.addf %256, %259 : vector<16x16xf32>
    %c1_189 = arith.constant 1 : index
    %c1_190 = arith.constant 1 : index
    %c0_191 = arith.constant 0 : index
    %c0_192 = arith.constant 0 : index
    %261 = vector.load %arg11[%c1_189, %c1_190, %c0_191, %c0_192] : memref<2x2x32x16xf32, #tpu.memory_space<vmem>>, vector<1x1x32x16xf32>
    %262 = vector.shape_cast %261 : vector<1x1x32x16xf32> to vector<32x16xf32>
    %cst_193 = arith.constant dense<0.000000e+00> : vector<16x16xf32>
    %263 = tpu.matmul %204, %262, %cst_193 {dimension_numbers = #tpu.dot_dimension_numbers<[1], [0], [0], [1], [0, 0, 1, 1], [], []>} : vector<16x32xf32>, vector<32x16xf32>, vector<16x16xf32> -> vector<16x16xf32>
    %c1_194 = arith.constant 1 : index
    %c1_195 = arith.constant 1 : index
    %c0_196 = arith.constant 0 : index
    %c0_197 = arith.constant 0 : index
    %264 = vector.load %arg12[%c1_194, %c1_195, %c0_196, %c0_197] : memref<2x2x1x16xf32, #tpu.memory_space<vmem>>, vector<1x1x1x16xf32>
    %265 = vector.shape_cast %264 : vector<1x1x1x16xf32> to vector<1x16xf32>
    %266 = vector.broadcast %265 : vector<1x16xf32> to vector<16x16xf32>
    %267 = arith.addf %263, %266 : vector<16x16xf32>
    %268 = vector.shape_cast %253 : vector<16x16xf32> to vector<2x8x16xf32>
    %269 = vector.shape_cast %260 : vector<16x16xf32> to vector<2x8x16xf32>
    %270 = vector.shape_cast %267 : vector<16x16xf32> to vector<2x8x16xf32>
    "tpu.trace_start"() <{level = 10 : i32, message = "bqd,bkd->bqk"}> : () -> ()
    %cst_198 = arith.constant dense<0.000000e+00> : vector<2x8x8xf32>
    %271 = tpu.matmul %268, %269, %cst_198 {dimension_numbers = #tpu.dot_dimension_numbers<[2], [2], [1], [1], [0, 0, 0, 1, 1, 1], [0], [0]>} : vector<2x8x16xf32>, vector<2x8x16xf32>, vector<2x8x8xf32> -> vector<2x8x8xf32>
    "tpu.trace_stop"() : () -> ()
    %272 = vector.broadcast %38 : vector<2x1x8xf32> to vector<2x8x8xf32>
    %273 = arith.addf %271, %272 : vector<2x8x8xf32>
    %cst_199 = arith.constant dense<0xFF800000> : vector<2x8xf32>
    %274 = vector.multi_reduction <maximumf>, %273, %cst_199 [2] : vector<2x8x8xf32> to vector<2x8xf32>
    %275 = vector.shape_cast %274 : vector<2x8xf32> to vector<2x8x1xf32>
    %276 = vector.broadcast %275 : vector<2x8x1xf32> to vector<2x8x8xf32>
    %277 = arith.subf %273, %276 : vector<2x8x8xf32>
    %278 = math.exp %277 : vector<2x8x8xf32>
    %cst_200 = arith.constant dense<0.000000e+00> : vector<2x8xf32>
    %279 = vector.multi_reduction <add>, %278, %cst_200 [2] : vector<2x8x8xf32> to vector<2x8xf32>
    %280 = vector.shape_cast %279 : vector<2x8xf32> to vector<2x8x1xf32>
    %281 = tpu.reciprocal %280 {approx = true} : vector<2x8x1xf32> -> vector<2x8x1xf32>
    %282 = vector.broadcast %281 : vector<2x8x1xf32> to vector<2x8x8xf32>
    %283 = arith.mulf %278, %282 : vector<2x8x8xf32>
    "tpu.trace_start"() <{level = 10 : i32, message = "bqk,bkd->bqd"}> : () -> ()
    %cst_201 = arith.constant dense<0.000000e+00> : vector<2x8x16xf32>
    %284 = tpu.matmul %283, %270, %cst_201 {dimension_numbers = #tpu.dot_dimension_numbers<[2], [1], [1], [2], [0, 0, 0, 1, 1, 2], [0], [0]>} : vector<2x8x8xf32>, vector<2x8x16xf32>, vector<2x8x16xf32> -> vector<2x8x16xf32>
    "tpu.trace_stop"() : () -> ()
    %285 = vector.shape_cast %284 : vector<2x8x16xf32> to vector<16x16xf32>
    %c1_202 = arith.constant 1 : index
    %c1_203 = arith.constant 1 : index
    %c0_204 = arith.constant 0 : index
    %c0_205 = arith.constant 0 : index
    %286 = vector.load %arg13[%c1_202, %c1_203, %c0_204, %c0_205] : memref<2x2x16x32xf32, #tpu.memory_space<vmem>>, vector<1x1x16x32xf32>
    %287 = vector.shape_cast %286 : vector<1x1x16x32xf32> to vector<16x32xf32>
    %cst_206 = arith.constant dense<0.000000e+00> : vector<16x32xf32>
    %288 = tpu.matmul %285, %287, %cst_206 {dimension_numbers = #tpu.dot_dimension_numbers<[1], [0], [0], [1], [0, 0, 1, 1], [], []>} : vector<16x16xf32>, vector<16x32xf32>, vector<16x32xf32> -> vector<16x32xf32>
    %289 = arith.addf %246, %288 : vector<16x32xf32>
    %c1_207 = arith.constant 1 : index
    %c0_208 = arith.constant 0 : index
    %c0_209 = arith.constant 0 : index
    %290 = vector.load %arg14[%c1_207, %c0_208, %c0_209] : memref<2x1x32xf32, #tpu.memory_space<vmem>>, vector<1x1x32xf32>
    %291 = vector.shape_cast %290 : vector<1x1x32xf32> to vector<1x32xf32>
    %292 = vector.broadcast %291 : vector<1x32xf32> to vector<16x32xf32>
    %293 = arith.addf %289, %292 : vector<16x32xf32>
    %294 = arith.addf %204, %293 : vector<16x32xf32>
    %c1_210 = arith.constant 1 : index
    %c0_211 = arith.constant 0 : index
    %c0_212 = arith.constant 0 : index
    %295 = vector.load %arg15[%c1_210, %c0_211, %c0_212] : memref<2x1x32xf32, #tpu.memory_space<vmem>>, vector<1x1x32xf32>
    %296 = vector.shape_cast %295 : vector<1x1x32xf32> to vector<1x32xf32>
    %c1_213 = arith.constant 1 : index
    %c0_214 = arith.constant 0 : index
    %c0_215 = arith.constant 0 : index
    %297 = vector.load %arg16[%c1_213, %c0_214, %c0_215] : memref<2x1x32xf32, #tpu.memory_space<vmem>>, vector<1x1x32xf32>
    %298 = vector.shape_cast %297 : vector<1x1x32xf32> to vector<1x32xf32>
    %cst_216 = arith.constant dense<0.000000e+00> : vector<16xf32>
    %299 = vector.multi_reduction <add>, %294, %cst_216 [1] : vector<16x32xf32> to vector<16xf32>
    %300 = vector.shape_cast %299 : vector<16xf32> to vector<16x1xf32>
    %cst_217 = arith.constant 3.200000e+01 : f32
    %301 = vector.broadcast %cst_217 : f32 to vector<16x1xf32>
    %302 = arith.divf %300, %301 : vector<16x1xf32>
    %303 = vector.broadcast %302 : vector<16x1xf32> to vector<16x32xf32>
    %304 = arith.subf %294, %303 : vector<16x32xf32>
    %305 = arith.mulf %304, %304 : vector<16x32xf32>
    %cst_218 = arith.constant dense<0.000000e+00> : vector<16xf32>
    %306 = vector.multi_reduction <add>, %305, %cst_218 [1] : vector<16x32xf32> to vector<16xf32>
    %307 = vector.shape_cast %306 : vector<16xf32> to vector<16x1xf32>
    %cst_219 = arith.constant 3.200000e+01 : f32
    %308 = vector.broadcast %cst_219 : f32 to vector<16x1xf32>
    %309 = arith.divf %307, %308 : vector<16x1xf32>
    %cst_220 = arith.constant 9.99999996E-13 : f32
    %310 = vector.broadcast %cst_220 : f32 to vector<16x1xf32>
    %311 = arith.addf %309, %310 : vector<16x1xf32>
    %312 = math.rsqrt %311 : vector<16x1xf32>
    %313 = vector.broadcast %312 : vector<16x1xf32> to vector<16x32xf32>
    %314 = arith.mulf %304, %313 : vector<16x32xf32>
    %315 = vector.broadcast %296 : vector<1x32xf32> to vector<16x32xf32>
    %316 = arith.mulf %314, %315 : vector<16x32xf32>
    %317 = vector.broadcast %298 : vector<1x32xf32> to vector<16x32xf32>
    %318 = arith.addf %316, %317 : vector<16x32xf32>
    %c1_221 = arith.constant 1 : index
    %c0_222 = arith.constant 0 : index
    %c0_223 = arith.constant 0 : index
    %319 = vector.load %arg17[%c1_221, %c0_222, %c0_223] : memref<2x32x64xf32, #tpu.memory_space<vmem>>, vector<1x32x64xf32>
    %320 = vector.shape_cast %319 : vector<1x32x64xf32> to vector<32x64xf32>
    %cst_224 = arith.constant dense<0.000000e+00> : vector<16x64xf32>
    %321 = tpu.matmul %318, %320, %cst_224 {dimension_numbers = #tpu.dot_dimension_numbers<[1], [0], [0], [1], [0, 0, 1, 1], [], []>} : vector<16x32xf32>, vector<32x64xf32>, vector<16x64xf32> -> vector<16x64xf32>
    %c1_225 = arith.constant 1 : index
    %c0_226 = arith.constant 0 : index
    %c0_227 = arith.constant 0 : index
    %322 = vector.load %arg18[%c1_225, %c0_226, %c0_227] : memref<2x1x64xf32, #tpu.memory_space<vmem>>, vector<1x1x64xf32>
    %323 = vector.shape_cast %322 : vector<1x1x64xf32> to vector<1x64xf32>
    %324 = vector.broadcast %323 : vector<1x64xf32> to vector<16x64xf32>
    %325 = arith.addf %321, %324 : vector<16x64xf32>
    %cst_228 = arith.constant 5.000000e-01 : f32
    %326 = vector.broadcast %cst_228 : f32 to vector<16x64xf32>
    %327 = arith.mulf %326, %325 : vector<16x64xf32>
    %cst_229 = arith.constant 4.471500e-02 : f32
    %328 = vector.broadcast %cst_229 : f32 to vector<16x64xf32>
    %329 = arith.mulf %328, %325 : vector<16x64xf32>
    %330 = arith.mulf %329, %325 : vector<16x64xf32>
    %331 = arith.mulf %330, %325 : vector<16x64xf32>
    %332 = arith.addf %325, %331 : vector<16x64xf32>
    %cst_230 = arith.constant 0.797884583 : f32
    %333 = vector.broadcast %cst_230 : f32 to vector<16x64xf32>
    %334 = arith.mulf %333, %332 : vector<16x64xf32>
    %335 = math.tanh %334 : vector<16x64xf32>
    %cst_231 = arith.constant 1.000000e+00 : f32
    %336 = vector.broadcast %cst_231 : f32 to vector<16x64xf32>
    %337 = arith.addf %336, %335 : vector<16x64xf32>
    %338 = arith.mulf %327, %337 : vector<16x64xf32>
    %c1_232 = arith.constant 1 : index
    %c0_233 = arith.constant 0 : index
    %c0_234 = arith.constant 0 : index
    %339 = vector.load %arg19[%c1_232, %c0_233, %c0_234] : memref<2x64x32xf32, #tpu.memory_space<vmem>>, vector<1x64x32xf32>
    %340 = vector.shape_cast %339 : vector<1x64x32xf32> to vector<64x32xf32>
    %cst_235 = arith.constant dense<0.000000e+00> : vector<16x32xf32>
    %341 = tpu.matmul %338, %340, %cst_235 {dimension_numbers = #tpu.dot_dimension_numbers<[1], [0], [0], [1], [0, 0, 1, 1], [], []>} : vector<16x64xf32>, vector<64x32xf32>, vector<16x32xf32> -> vector<16x32xf32>
    %c1_236 = arith.constant 1 : index
    %c0_237 = arith.constant 0 : index
    %c0_238 = arith.constant 0 : index
    %342 = vector.load %arg20[%c1_236, %c0_237, %c0_238] : memref<2x1x32xf32, #tpu.memory_space<vmem>>, vector<1x1x32xf32>
    %343 = vector.shape_cast %342 : vector<1x1x32xf32> to vector<1x32xf32>
    %344 = vector.broadcast %343 : vector<1x32xf32> to vector<16x32xf32>
    %345 = arith.addf %341, %344 : vector<16x32xf32>
    %346 = arith.addf %318, %345 : vector<16x32xf32>
    %c1_239 = arith.constant 1 : index
    %c0_240 = arith.constant 0 : index
    %c0_241 = arith.constant 0 : index
    %347 = vector.load %arg21[%c1_239, %c0_240, %c0_241] : memref<2x1x32xf32, #tpu.memory_space<vmem>>, vector<1x1x32xf32>
    %348 = vector.shape_cast %347 : vector<1x1x32xf32> to vector<1x32xf32>
    %c1_242 = arith.constant 1 : index
    %c0_243 = arith.constant 0 : index
    %c0_244 = arith.constant 0 : index
    %349 = vector.load %arg22[%c1_242, %c0_243, %c0_244] : memref<2x1x32xf32, #tpu.memory_space<vmem>>, vector<1x1x32xf32>
    %350 = vector.shape_cast %349 : vector<1x1x32xf32> to vector<1x32xf32>
    %cst_245 = arith.constant dense<0.000000e+00> : vector<16xf32>
    %351 = vector.multi_reduction <add>, %346, %cst_245 [1] : vector<16x32xf32> to vector<16xf32>
    %352 = vector.shape_cast %351 : vector<16xf32> to vector<16x1xf32>
    %cst_246 = arith.constant 3.200000e+01 : f32
    %353 = vector.broadcast %cst_246 : f32 to vector<16x1xf32>
    %354 = arith.divf %352, %353 : vector<16x1xf32>
    %355 = vector.broadcast %354 : vector<16x1xf32> to vector<16x32xf32>
    %356 = arith.subf %346, %355 : vector<16x32xf32>
    %357 = arith.mulf %356, %356 : vector<16x32xf32>
    %cst_247 = arith.constant dense<0.000000e+00> : vector<16xf32>
    %358 = vector.multi_reduction <add>, %357, %cst_247 [1] : vector<16x32xf32> to vector<16xf32>
    %359 = vector.shape_cast %358 : vector<16xf32> to vector<16x1xf32>
    %cst_248 = arith.constant 3.200000e+01 : f32
    %360 = vector.broadcast %cst_248 : f32 to vector<16x1xf32>
    %361 = arith.divf %359, %360 : vector<16x1xf32>
    %cst_249 = arith.constant 9.99999996E-13 : f32
    %362 = vector.broadcast %cst_249 : f32 to vector<16x1xf32>
    %363 = arith.addf %361, %362 : vector<16x1xf32>
    %364 = math.rsqrt %363 : vector<16x1xf32>
    %365 = vector.broadcast %364 : vector<16x1xf32> to vector<16x32xf32>
    %366 = arith.mulf %356, %365 : vector<16x32xf32>
    %367 = vector.broadcast %348 : vector<1x32xf32> to vector<16x32xf32>
    %368 = arith.mulf %366, %367 : vector<16x32xf32>
    %369 = vector.broadcast %350 : vector<1x32xf32> to vector<16x32xf32>
    %370 = arith.addf %368, %369 : vector<16x32xf32>
    %371 = vector.shape_cast %370 : vector<16x32xf32> to vector<2x8x32xf32>
    %372 = vector.extract_strided_slice %371 {offsets = [0, 0, 0], sizes = [2, 1, 32], strides = [1, 1, 1]} : vector<2x8x32xf32> to vector<2x1x32xf32>
    %373 = vector.shape_cast %372 : vector<2x1x32xf32> to vector<2x32xf32>
    %cst_250 = arith.constant 0.000000e+00 : f32
    %374 = vector.broadcast %cst_250 : f32 to vector<6x32xf32>
    %375 = tpu.concatenate %373, %374 in 0 : vector<2x32xf32>, vector<6x32xf32> -> vector<8x32xf32>
    %c0_251 = arith.constant 0 : index
    %c0_252 = arith.constant 0 : index
    %376 = vector.load %arg23[%c0_251, %c0_252] : memref<32x32xf32, #tpu.memory_space<vmem>>, vector<32x32xf32>
    %cst_253 = arith.constant dense<0.000000e+00> : vector<8x32xf32>
    %377 = tpu.matmul %375, %376, %cst_253 {dimension_numbers = #tpu.dot_dimension_numbers<[1], [0], [0], [1], [0, 0, 1, 1], [], []>} : vector<8x32xf32>, vector<32x32xf32>, vector<8x32xf32> -> vector<8x32xf32>
    %c0_254 = arith.constant 0 : index
    %c0_255 = arith.constant 0 : index
    %378 = vector.load %arg24[%c0_254, %c0_255] : memref<1x32xf32, #tpu.memory_space<vmem>>, vector<1x32xf32>
    %379 = vector.broadcast %378 : vector<1x32xf32> to vector<8x32xf32>
    %380 = arith.addf %377, %379 : vector<8x32xf32>
    %381 = math.tanh %380 : vector<8x32xf32>
    %c0_256 = arith.constant 0 : index
    %c0_257 = arith.constant 0 : index
    %382 = vector.load %arg25[%c0_256, %c0_257] : memref<32x32xf32, #tpu.memory_space<vmem>>, vector<32x32xf32>
    %cst_258 = arith.constant dense<0.000000e+00> : vector<8x32xf32>
    %383 = tpu.matmul %381, %382, %cst_258 {dimension_numbers = #tpu.dot_dimension_numbers<[1], [0], [0], [1], [0, 0, 1, 1], [], []>} : vector<8x32xf32>, vector<32x32xf32>, vector<8x32xf32> -> vector<8x32xf32>
    %c0_259 = arith.constant 0 : index
    %c0_260 = arith.constant 0 : index
    %384 = vector.load %arg26[%c0_259, %c0_260] : memref<1x32xf32, #tpu.memory_space<vmem>>, vector<1x32xf32>
    %385 = vector.broadcast %384 : vector<1x32xf32> to vector<8x32xf32>
    %386 = arith.addf %383, %385 : vector<8x32xf32>
    %cst_261 = arith.constant 0.000000e+00 : f32
    %387 = vector.broadcast %cst_261 : f32 to vector<8x32xf32>
    %388 = arith.maximumf %386, %387 : vector<8x32xf32>
    %c0_262 = arith.constant 0 : index
    %c0_263 = arith.constant 0 : index
    %389 = vector.load %arg27[%c0_262, %c0_263] : memref<32x16xf32, #tpu.memory_space<vmem>>, vector<32x16xf32>
    %cst_264 = arith.constant dense<0.000000e+00> : vector<8x16xf32>
    %390 = tpu.matmul %388, %389, %cst_264 {dimension_numbers = #tpu.dot_dimension_numbers<[1], [0], [0], [1], [0, 0, 1, 1], [], []>} : vector<8x32xf32>, vector<32x16xf32>, vector<8x16xf32> -> vector<8x16xf32>
    %c0_265 = arith.constant 0 : index
    %c0_266 = arith.constant 0 : index
    %391 = vector.load %arg28[%c0_265, %c0_266] : memref<1x16xf32, #tpu.memory_space<vmem>>, vector<1x16xf32>
    %392 = vector.broadcast %391 : vector<1x16xf32> to vector<8x16xf32>
    %393 = arith.addf %390, %392 : vector<8x16xf32>
    %cst_267 = arith.constant 0.000000e+00 : f32
    %394 = vector.broadcast %cst_267 : f32 to vector<8x16xf32>
    %395 = arith.maximumf %393, %394 : vector<8x16xf32>
    %c0_268 = arith.constant 0 : index
    %c0_269 = arith.constant 0 : index
    %396 = vector.load %arg29[%c0_268, %c0_269] : memref<16x128xf32, #tpu.memory_space<vmem>>, vector<16x128xf32>
    %cst_270 = arith.constant dense<0.000000e+00> : vector<8x128xf32>
    %397 = tpu.matmul %395, %396, %cst_270 {dimension_numbers = #tpu.dot_dimension_numbers<[1], [0], [0], [1], [0, 0, 1, 1], [], []>} : vector<8x16xf32>, vector<16x128xf32>, vector<8x128xf32> -> vector<8x128xf32>
    %c0_271 = arith.constant 0 : index
    %c0_272 = arith.constant 0 : index
    %398 = vector.load %arg30[%c0_271, %c0_272] : memref<1x128xf32, #tpu.memory_space<vmem>>, vector<1x128xf32>
    %399 = vector.broadcast %398 : vector<1x128xf32> to vector<8x128xf32>
    %400 = arith.addf %397, %399 : vector<8x128xf32>
    %c0_273 = arith.constant 0 : index
    %c0_274 = arith.constant 0 : index
    %401 = vector.load %arg31[%c0_273, %c0_274] : memref<8x128xf32, #tpu.memory_space<vmem>>, vector<8x128xf32>
    tpu.vector_store %arg31[%c0_273, %c0_274], %400 {strides = array<i32>} : memref<8x128xf32, #tpu.memory_space<vmem>>, vector<8x128xf32>,
    return
  }
  func.func @transform_0(%arg0: i32) -> (i32, i32) {
    %c0_i32 = arith.constant 0 : i32
    %c0_i32_0 = arith.constant 0 : i32
    %c0_i32_1 = arith.constant 0 : i32
    return %c0_i32, %c0_i32_0 : i32, i32
  }
  func.func @transform_1(%arg0: i32) -> (i32, i32, i32) {
    %c0_i32 = arith.constant 0 : i32
    %c0_i32_0 = arith.constant 0 : i32
    %c0_i32_1 = arith.constant 0 : i32
    %c0_i32_2 = arith.constant 0 : i32
    return %c0_i32, %c0_i32_0, %c0_i32_1 : i32, i32, i32
  }
  func.func @transform_2(%arg0: i32) -> (i32, i32) {
    %c0_i32 = arith.constant 0 : i32
    %c0_i32_0 = arith.constant 0 : i32
    %c0_i32_1 = arith.constant 0 : i32
    return %c0_i32, %c0_i32_0 : i32, i32
  }
  func.func @transform_3(%arg0: i32) -> (i32, i32) {
    %c0_i32 = arith.constant 0 : i32
    %c0_i32_0 = arith.constant 0 : i32
    %c0_i32_1 = arith.constant 0 : i32
    return %c0_i32, %c0_i32_0 : i32, i32
  }
  func.func @transform_4(%arg0: i32) -> (i32, i32) {
    %c0_i32 = arith.constant 0 : i32
    %c0_i32_0 = arith.constant 0 : i32
    %c0_i32_1 = arith.constant 0 : i32
    return %c0_i32, %c0_i32_0 : i32, i32
  }
  func.func @transform_5(%arg0: i32) -> (i32, i32) {
    %c0_i32 = arith.constant 0 : i32
    %c0_i32_0 = arith.constant 0 : i32
    %c0_i32_1 = arith.constant 0 : i32
    return %c0_i32, %c0_i32_0 : i32, i32
  }
  func.func @transform_6(%arg0: i32) -> (i32, i32, i32, i32) {
    %c0_i32 = arith.constant 0 : i32
    %c0_i32_0 = arith.constant 0 : i32
    %c0_i32_1 = arith.constant 0 : i32
    %c0_i32_2 = arith.constant 0 : i32
    %c0_i32_3 = arith.constant 0 : i32
    return %c0_i32, %c0_i32_0, %c0_i32_1, %c0_i32_2 : i32, i32, i32, i32
  }
  func.func @transform_7(%arg0: i32) -> (i32, i32, i32, i32) {
    %c0_i32 = arith.constant 0 : i32
    %c0_i32_0 = arith.constant 0 : i32
    %c0_i32_1 = arith.constant 0 : i32
    %c0_i32_2 = arith.constant 0 : i32
    %c0_i32_3 = arith.constant 0 : i32
    return %c0_i32, %c0_i32_0, %c0_i32_1, %c0_i32_2 : i32, i32, i32, i32
  }
  func.func @transform_8(%arg0: i32) -> (i32, i32, i32, i32) {
    %c0_i32 = arith.constant 0 : i32
    %c0_i32_0 = arith.constant 0 : i32
    %c0_i32_1 = arith.constant 0 : i32
    %c0_i32_2 = arith.constant 0 : i32
    %c0_i32_3 = arith.constant 0 : i32
    return %c0_i32, %c0_i32_0, %c0_i32_1, %c0_i32_2 : i32, i32, i32, i32
  }
  func.func @transform_9(%arg0: i32) -> (i32, i32, i32, i32) {
    %c0_i32 = arith.constant 0 : i32
    %c0_i32_0 = arith.constant 0 : i32
    %c0_i32_1 = arith.constant 0 : i32
    %c0_i32_2 = arith.constant 0 : i32
    %c0_i32_3 = arith.constant 0 : i32
    return %c0_i32, %c0_i32_0, %c0_i32_1, %c0_i32_2 : i32, i32, i32, i32
  }
  func.func @transform_10(%arg0: i32) -> (i32, i32, i32, i32) {
    %c0_i32 = arith.constant 0 : i32
    %c0_i32_0 = arith.constant 0 : i32
    %c0_i32_1 = arith.constant 0 : i32
    %c0_i32_2 = arith.constant 0 : i32
    %c0_i32_3 = arith.constant 0 : i32
    return %c0_i32, %c0_i32_0, %c0_i32_1, %c0_i32_2 : i32, i32, i32, i32
  }
  func.func @transform_11(%arg0: i32) -> (i32, i32, i32, i32) {
    %c0_i32 = arith.constant 0 : i32
    %c0_i32_0 = arith.constant 0 : i32
    %c0_i32_1 = arith.constant 0 : i32
    %c0_i32_2 = arith.constant 0 : i32
    %c0_i32_3 = arith.constant 0 : i32
    return %c0_i32, %c0_i32_0, %c0_i32_1, %c0_i32_2 : i32, i32, i32, i32
  }
  func.func @transform_12(%arg0: i32) -> (i32, i32, i32, i32) {
    %c0_i32 = arith.constant 0 : i32
    %c0_i32_0 = arith.constant 0 : i32
    %c0_i32_1 = arith.constant 0 : i32
    %c0_i32_2 = arith.constant 0 : i32
    %c0_i32_3 = arith.constant 0 : i32
    return %c0_i32, %c0_i32_0, %c0_i32_1, %c0_i32_2 : i32, i32, i32, i32
  }
  func.func @transform_13(%arg0: i32) -> (i32, i32, i32) {
    %c0_i32 = arith.constant 0 : i32
    %c0_i32_0 = arith.constant 0 : i32
    %c0_i32_1 = arith.constant 0 : i32
    %c0_i32_2 = arith.constant 0 : i32
    return %c0_i32, %c0_i32_0, %c0_i32_1 : i32, i32, i32
  }
  func.func @transform_14(%arg0: i32) -> (i32, i32, i32) {
    %c0_i32 = arith.constant 0 : i32
    %c0_i32_0 = arith.constant 0 : i32
    %c0_i32_1 = arith.constant 0 : i32
    %c0_i32_2 = arith.constant 0 : i32
    return %c0_i32, %c0_i32_0, %c0_i32_1 : i32, i32, i32
  }
  func.func @transform_15(%arg0: i32) -> (i32, i32, i32) {
    %c0_i32 = arith.constant 0 : i32
    %c0_i32_0 = arith.constant 0 : i32
    %c0_i32_1 = arith.constant 0 : i32
    %c0_i32_2 = arith.constant 0 : i32
    return %c0_i32, %c0_i32_0, %c0_i32_1 : i32, i32, i32
  }
  func.func @transform_16(%arg0: i32) -> (i32, i32, i32) {
    %c0_i32 = arith.constant 0 : i32
    %c0_i32_0 = arith.constant 0 : i32
    %c0_i32_1 = arith.constant 0 : i32
    %c0_i32_2 = arith.constant 0 : i32
    return %c0_i32, %c0_i32_0, %c0_i32_1 : i32, i32, i32
  }
  func.func @transform_17(%arg0: i32) -> (i32, i32, i32) {
    %c0_i32 = arith.constant 0 : i32
    %c0_i32_0 = arith.constant 0 : i32
    %c0_i32_1 = arith.constant 0 : i32
    %c0_i32_2 = arith.constant 0 : i32
    return %c0_i32, %c0_i32_0, %c0_i32_1 : i32, i32, i32
  }
  func.func @transform_18(%arg0: i32) -> (i32, i32, i32) {
    %c0_i32 = arith.constant 0 : i32
    %c0_i32_0 = arith.constant 0 : i32
    %c0_i32_1 = arith.constant 0 : i32
    %c0_i32_2 = arith.constant 0 : i32
    return %c0_i32, %c0_i32_0, %c0_i32_1 : i32, i32, i32
  }
  func.func @transform_19(%arg0: i32) -> (i32, i32, i32) {
    %c0_i32 = arith.constant 0 : i32
    %c0_i32_0 = arith.constant 0 : i32
    %c0_i32_1 = arith.constant 0 : i32
    %c0_i32_2 = arith.constant 0 : i32
    return %c0_i32, %c0_i32_0, %c0_i32_1 : i32, i32, i32
  }
  func.func @transform_20(%arg0: i32) -> (i32, i32, i32) {
    %c0_i32 = arith.constant 0 : i32
    %c0_i32_0 = arith.constant 0 : i32
    %c0_i32_1 = arith.constant 0 : i32
    %c0_i32_2 = arith.constant 0 : i32
    return %c0_i32, %c0_i32_0, %c0_i32_1 : i32, i32, i32
  }
  func.func @transform_21(%arg0: i32) -> (i32, i32, i32) {
    %c0_i32 = arith.constant 0 : i32
    %c0_i32_0 = arith.constant 0 : i32
    %c0_i32_1 = arith.constant 0 : i32
    %c0_i32_2 = arith.constant 0 : i32
    return %c0_i32, %c0_i32_0, %c0_i32_1 : i32, i32, i32
  }
  func.func @transform_22(%arg0: i32) -> (i32, i32) {
    %c0_i32 = arith.constant 0 : i32
    %c0_i32_0 = arith.constant 0 : i32
    %c0_i32_1 = arith.constant 0 : i32
    return %c0_i32, %c0_i32_0 : i32, i32
  }
  func.func @transform_23(%arg0: i32) -> (i32, i32) {
    %c0_i32 = arith.constant 0 : i32
    %c0_i32_0 = arith.constant 0 : i32
    %c0_i32_1 = arith.constant 0 : i32
    return %c0_i32, %c0_i32_0 : i32, i32
  }
  func.func @transform_24(%arg0: i32) -> (i32, i32) {
    %c0_i32 = arith.constant 0 : i32
    %c0_i32_0 = arith.constant 0 : i32
    %c0_i32_1 = arith.constant 0 : i32
    return %c0_i32, %c0_i32_0 : i32, i32
  }
  func.func @transform_25(%arg0: i32) -> (i32, i32) {
    %c0_i32 = arith.constant 0 : i32
    %c0_i32_0 = arith.constant 0 : i32
    %c0_i32_1 = arith.constant 0 : i32
    return %c0_i32, %c0_i32_0 : i32, i32
  }
  func.func @transform_26(%arg0: i32) -> (i32, i32) {
    %c0_i32 = arith.constant 0 : i32
    %c0_i32_0 = arith.constant 0 : i32
    %c0_i32_1 = arith.constant 0 : i32
    return %c0_i32, %c0_i32_0 : i32, i32
  }
  func.func @transform_27(%arg0: i32) -> (i32, i32) {
    %c0_i32 = arith.constant 0 : i32
    %c0_i32_0 = arith.constant 0 : i32
    %c0_i32_1 = arith.constant 0 : i32
    return %c0_i32, %c0_i32_0 : i32, i32
  }
  func.func @transform_28(%arg0: i32) -> (i32, i32) {
    %c0_i32 = arith.constant 0 : i32
    %c0_i32_0 = arith.constant 0 : i32
    %c0_i32_1 = arith.constant 0 : i32
    return %c0_i32, %c0_i32_0 : i32, i32
  }
  func.func @transform_29(%arg0: i32) -> (i32, i32) {
    %c0_i32 = arith.constant 0 : i32
    %c0_i32_0 = arith.constant 0 : i32
    %c0_i32_1 = arith.constant 0 : i32
    return %c0_i32, %c0_i32_0 : i32, i32
  }
  func.func @transform_30(%arg0: i32) -> (i32, i32) {
    %c0_i32 = arith.constant 0 : i32
    %c0_i32_0 = arith.constant 0 : i32
    %c0_i32_1 = arith.constant 0 : i32
    return %c0_i32, %c0_i32_0 : i32, i32
  }
}

</mosaic_0001>

<llo_original>
// kernel: bert_review_classifier.1
$region0: #{bert_review_classifier.1}
  #allocation0 [shape = 'u32[]', space=smem, size = 0x4, offset = 0x4, fixed_abs, tag = 'smem constant byte address 0x4 - core index']
  #allocation1 [shape = 'u32[144,128]{1,0:T(1,128)}', space=vmem, size = 0x12000, scoped, tag = 'internal scratch']
  %s0 = inlined_call_operand.smem [shape: u32[31], index: -1, kind: input, shape index: {}]
  %s1 = sld [smem:[%s0]]
  %s2 = scalar_lea.smem %s0, 1
  %s3 = sld [smem:[%s2]]
  %s4 = scalar_lea.smem %s0, 2
  %s5 = sld [smem:[%s4]]
  %s6 = scalar_lea.smem %s0, 3
  %s7 = sld [smem:[%s6]]
  %s8 = scalar_lea.smem %s0, 4
  %s9 = sld [smem:[%s8]]
  %s10 = scalar_lea.smem %s0, 5
  %s11 = sld [smem:[%s10]]
  %s12 = scalar_lea.smem %s0, 6
  %s13 = sld [smem:[%s12]]
  %s14 = scalar_lea.smem %s0, 7
  %s15 = sld [smem:[%s14]]
  %s16 = scalar_lea.smem %s0, 8
  %s17 = sld [smem:[%s16]]
  %s18 = scalar_lea.smem %s0, 9
  %s19 = sld [smem:[%s18]]
  %s20 = scalar_lea.smem %s0, 10
  %s21 = sld [smem:[%s20]]
  %s22 = scalar_lea.smem %s0, 11
  %s23 = sld [smem:[%s22]]
  %s24 = scalar_lea.smem %s0, 12
  %s25 = sld [smem:[%s24]]
  %s26 = scalar_lea.smem %s0, 13
  %s27 = sld [smem:[%s26]]
  %s28 = scalar_lea.smem %s0, 14
  %s29 = sld [smem:[%s28]]
  %s30 = scalar_lea.smem %s0, 15
  %s31 = sld [smem:[%s30]]
  %s32 = scalar_lea.smem %s0, 16
  %s33 = sld [smem:[%s32]]
  %s34 = scalar_lea.smem %s0, 17
  %s35 = sld [smem:[%s34]]
  %s36 = scalar_lea.smem %s0, 18
  %s37 = sld [smem:[%s36]]
  %s38 = scalar_lea.smem %s0, 19
  %s39 = sld [smem:[%s38]]
  %s40 = scalar_lea.smem %s0, 20
  %s41 = sld [smem:[%s40]]
  %s42 = scalar_lea.smem %s0, 21
  %s43 = sld [smem:[%s42]]
  %s44 = scalar_lea.smem %s0, 22
  %s45 = sld [smem:[%s44]]
  %s46 = scalar_lea.smem %s0, 23
  %s47 = sld [smem:[%s46]]
  %s48 = scalar_lea.smem %s0, 24
  %s49 = sld [smem:[%s48]]
  %s50 = scalar_lea.smem %s0, 25
  %s51 = sld [smem:[%s50]]
  %s52 = scalar_lea.smem %s0, 26
  %s53 = sld [smem:[%s52]]
  %s54 = scalar_lea.smem %s0, 27
  %s55 = sld [smem:[%s54]]
  %s56 = scalar_lea.smem %s0, 28
  %s57 = sld [smem:[%s56]]
  %s58 = scalar_lea.smem %s0, 29
  %s59 = sld [smem:[%s58]]
  %s60 = scalar_lea.smem %s0, 30
  %s61 = sld [smem:[%s60]]
  %s62 = sld [smem:[#allocation0]]
  $region130: #{bert_review_classifier.1} parent=0
    _
  %s64 = ssub.s32 1, %s62
  %s65 = scalar_select 0, %s64, %s62
  // Predicated region
  $region2: #{bert_review_classifier.1} parent=0 // pred_check
    _
  $region3: #{bert_review_classifier.1} parent=0 // pred_check_branch
    %67 = sbr.rel (0) target = $region5
  $region4: #{bert_review_classifier.1} parent=0 // pred_region
    _
  $region5: #{bert_review_classifier.1} parent=0 // pred_fallthru
    _
  // Predicated region
  $region6: #{bert_review_classifier.1} parent=0 // pred_check
    _
  $region7: #{bert_review_classifier.1} parent=0 // pred_check_branch
    %69 = sbr.rel (0) target = $region9
  $region8: #{bert_review_classifier.1} parent=0 // pred_region
    _
  $region9: #{bert_review_classifier.1} parent=0 // pred_fallthru
    _
  // Predicated region
  $region10: #{bert_review_classifier.1} parent=0 // pred_check
    _
  $region11: #{bert_review_classifier.1} parent=0 // pred_check_branch
    %71 = sbr.rel (0) target = $region13
  $region12: #{bert_review_classifier.1} parent=0 // pred_region
    _
  $region13: #{bert_review_classifier.1} parent=0 // pred_fallthru
    _
  // Predicated region
  $region14: #{bert_review_classifier.1} parent=0 // pred_check
    _
  $region15: #{bert_review_classifier.1} parent=0 // pred_check_branch
    %73 = sbr.rel (0) target = $region17
  $region16: #{bert_review_classifier.1} parent=0 // pred_region
    _
  $region17: #{bert_review_classifier.1} parent=0 // pred_fallthru
    _
  // Predicated region
  $region18: #{bert_review_classifier.1} parent=0 // pred_check
    _
  $region19: #{bert_review_classifier.1} parent=0 // pred_check_branch
    %75 = sbr.rel (0) target = $region21
  $region20: #{bert_review_classifier.1} parent=0 // pred_region
    _
  $region21: #{bert_review_classifier.1} parent=0 // pred_fallthru
    _
  // Predicated region
  $region22: #{bert_review_classifier.1} parent=0 // pred_check
    _
  $region23: #{bert_review_classifier.1} parent=0 // pred_check_branch
    %77 = sbr.rel (0) target = $region25
  $region24: #{bert_review_classifier.1} parent=0 // pred_region
    _
  $region25: #{bert_review_classifier.1} parent=0 // pred_fallthru
    _
  // Predicated region
  $region26: #{bert_review_classifier.1} parent=0 // pred_check
    _
  $region27: #{bert_review_classifier.1} parent=0 // pred_check_branch
    %79 = sbr.rel (0) target = $region29
  $region28: #{bert_review_classifier.1} parent=0 // pred_region
    _
  $region29: #{bert_review_classifier.1} parent=0 // pred_fallthru
    _
  // Predicated region
  $region30: #{bert_review_classifier.1} parent=0 // pred_check
    _
  $region31: #{bert_review_classifier.1} parent=0 // pred_check_branch
    %81 = sbr.rel (0) target = $region33
  $region32: #{bert_review_classifier.1} parent=0 // pred_region
    _
  $region33: #{bert_review_classifier.1} parent=0 // pred_fallthru
    _
  // Predicated region
  $region34: #{bert_review_classifier.1} parent=0 // pred_check
    _
  $region35: #{bert_review_classifier.1} parent=0 // pred_check_branch
    %83 = sbr.rel (0) target = $region37
  $region36: #{bert_review_classifier.1} parent=0 // pred_region
    _
  $region37: #{bert_review_classifier.1} parent=0 // pred_fallthru
    _
  // Predicated region
  $region38: #{bert_review_classifier.1} parent=0 // pred_check
    _
  $region39: #{bert_review_classifier.1} parent=0 // pred_check_branch
    %85 = sbr.rel (0) target = $region41
  $region40: #{bert_review_classifier.1} parent=0 // pred_region
    _
  $region41: #{bert_review_classifier.1} parent=0 // pred_fallthru
    _
  // Predicated region
  $region42: #{bert_review_classifier.1} parent=0 // pred_check
    _
  $region43: #{bert_review_classifier.1} parent=0 // pred_check_branch
    %87 = sbr.rel (0) target = $region45
  $region44: #{bert_review_classifier.1} parent=0 // pred_region
    _
  $region45: #{bert_review_classifier.1} parent=0 // pred_fallthru
    _
  // Predicated region
  $region46: #{bert_review_classifier.1} parent=0 // pred_check
    _
  $region47: #{bert_review_classifier.1} parent=0 // pred_check_branch
    %89 = sbr.rel (0) target = $region49
  $region48: #{bert_review_classifier.1} parent=0 // pred_region
    _
  $region49: #{bert_review_classifier.1} parent=0 // pred_fallthru
    _
  // Predicated region
  $region50: #{bert_review_classifier.1} parent=0 // pred_check
    _
  $region51: #{bert_review_classifier.1} parent=0 // pred_check_branch
    %91 = sbr.rel (0) target = $region53
  $region52: #{bert_review_classifier.1} parent=0 // pred_region
    _
  $region53: #{bert_review_classifier.1} parent=0 // pred_fallthru
    _
  // Predicated region
  $region54: #{bert_review_classifier.1} parent=0 // pred_check
    _
  $region55: #{bert_review_classifier.1} parent=0 // pred_check_branch
    %93 = sbr.rel (0) target = $region57
  $region56: #{bert_review_classifier.1} parent=0 // pred_region
    _
  $region57: #{bert_review_classifier.1} parent=0 // pred_fallthru
    _
  // Predicated region
  $region58: #{bert_review_classifier.1} parent=0 // pred_check
    _
  $region59: #{bert_review_classifier.1} parent=0 // pred_check_branch
    %95 = sbr.rel (0) target = $region61
  $region60: #{bert_review_classifier.1} parent=0 // pred_region
    _
  $region61: #{bert_review_classifier.1} parent=0 // pred_fallthru
    _
  // Predicated region
  $region62: #{bert_review_classifier.1} parent=0 // pred_check
    _
  $region63: #{bert_review_classifier.1} parent=0 // pred_check_branch
    %97 = sbr.rel (0) target = $region65
  $region64: #{bert_review_classifier.1} parent=0 // pred_region
    _
  $region65: #{bert_review_classifier.1} parent=0 // pred_fallthru
    _
  // Predicated region
  $region66: #{bert_review_classifier.1} parent=0 // pred_check
    _
  $region67: #{bert_review_classifier.1} parent=0 // pred_check_branch
    %99 = sbr.rel (0) target = $region69
  $region68: #{bert_review_classifier.1} parent=0 // pred_region
    _
  $region69: #{bert_review_classifier.1} parent=0 // pred_fallthru
    _
  // Predicated region
  $region70: #{bert_review_classifier.1} parent=0 // pred_check
    _
  $region71: #{bert_review_classifier.1} parent=0 // pred_check_branch
    %101 = sbr.rel (0) target = $region73
  $region72: #{bert_review_classifier.1} parent=0 // pred_region
    _
  $region73: #{bert_review_classifier.1} parent=0 // pred_fallthru
    _
  // Predicated region
  $region74: #{bert_review_classifier.1} parent=0 // pred_check
    _
  $region75: #{bert_review_classifier.1} parent=0 // pred_check_branch
    %103 = sbr.rel (0) target = $region77
  $region76: #{bert_review_classifier.1} parent=0 // pred_region
    _
  $region77: #{bert_review_classifier.1} parent=0 // pred_fallthru
    _
  // Predicated region
  $region78: #{bert_review_classifier.1} parent=0 // pred_check
    _
  $region79: #{bert_review_classifier.1} parent=0 // pred_check_branch
    %105 = sbr.rel (0) target = $region81
  $region80: #{bert_review_classifier.1} parent=0 // pred_region
    _
  $region81: #{bert_review_classifier.1} parent=0 // pred_fallthru
    _
  // Predicated region
  $region82: #{bert_review_classifier.1} parent=0 // pred_check
    _
  $region83: #{bert_review_classifier.1} parent=0 // pred_check_branch
    %107 = sbr.rel (0) target = $region85
  $region84: #{bert_review_classifier.1} parent=0 // pred_region
    _
  $region85: #{bert_review_classifier.1} parent=0 // pred_fallthru
    _
  // Predicated region
  $region86: #{bert_review_classifier.1} parent=0 // pred_check
    _
  $region87: #{bert_review_classifier.1} parent=0 // pred_check_branch
    %109 = sbr.rel (0) target = $region89
  $region88: #{bert_review_classifier.1} parent=0 // pred_region
    _
  $region89: #{bert_review_classifier.1} parent=0 // pred_fallthru
    _
  // Predicated region
  $region90: #{bert_review_classifier.1} parent=0 // pred_check
    _
  $region91: #{bert_review_classifier.1} parent=0 // pred_check_branch
    %111 = sbr.rel (0) target = $region93
  $region92: #{bert_review_classifier.1} parent=0 // pred_region
    _
  $region93: #{bert_review_classifier.1} parent=0 // pred_fallthru
    _
  // Predicated region
  $region94: #{bert_review_classifier.1} parent=0 // pred_check
    _
  $region95: #{bert_review_classifier.1} parent=0 // pred_check_branch
    %113 = sbr.rel (0) target = $region97
  $region96: #{bert_review_classifier.1} parent=0 // pred_region
    _
  $region97: #{bert_review_classifier.1} parent=0 // pred_fallthru
    _
  // Predicated region
  $region98: #{bert_review_classifier.1} parent=0 // pred_check
    _
  $region99: #{bert_review_classifier.1} parent=0 // pred_check_branch
    %115 = sbr.rel (0) target = $region101
  $region100: #{bert_review_classifier.1} parent=0 // pred_region
    _
  $region101: #{bert_review_classifier.1} parent=0 // pred_fallthru
    _
  // Predicated region
  $region102: #{bert_review_classifier.1} parent=0 // pred_check
    _
  $region103: #{bert_review_classifier.1} parent=0 // pred_check_branch
    %117 = sbr.rel (0) target = $region105
  $region104: #{bert_review_classifier.1} parent=0 // pred_region
    _
  $region105: #{bert_review_classifier.1} parent=0 // pred_fallthru
    _
  // Predicated region
  $region106: #{bert_review_classifier.1} parent=0 // pred_check
    _
  $region107: #{bert_review_classifier.1} parent=0 // pred_check_branch
    %119 = sbr.rel (0) target = $region109
  $region108: #{bert_review_classifier.1} parent=0 // pred_region
    _
  $region109: #{bert_review_classifier.1} parent=0 // pred_fallthru
    _
  // Predicated region
  $region110: #{bert_review_classifier.1} parent=0 // pred_check
    _
  $region111: #{bert_review_classifier.1} parent=0 // pred_check_branch
    %121 = sbr.rel (0) target = $region113
  $region112: #{bert_review_classifier.1} parent=0 // pred_region
    _
  $region113: #{bert_review_classifier.1} parent=0 // pred_fallthru
    _
  // Predicated region
  $region114: #{bert_review_classifier.1} parent=0 // pred_check
    _
  $region115: #{bert_review_classifier.1} parent=0 // pred_check_branch
    %123 = sbr.rel (0) target = $region117
  $region116: #{bert_review_classifier.1} parent=0 // pred_region
    _
  $region117: #{bert_review_classifier.1} parent=0 // pred_fallthru
    _
  // Predicated region
  $region118: #{bert_review_classifier.1} parent=0 // pred_check
    _
  $region119: #{bert_review_classifier.1} parent=0 // pred_check_branch
    %125 = sbr.rel (0) target = $region121
  $region120: #{bert_review_classifier.1} parent=0 // pred_region
    _
  $region121: #{bert_review_classifier.1} parent=0 // pred_fallthru
    _
  %v126 = vld [vmem:[%s1] sm:$0xff]
  %v127 = vld [vmem:[%s1 + $0x8] sm:$0xff]
  %v128 = vlaneseq
  %v129 = vand.u32 %v128, 127
  %130 = vset.pattern.permute.xlu0 0
  %131 = vperm.xlu0 %130, %v126
  %v132 = vpop.permute.xlu0 %131
  %133 = vset.pattern.permute.xlu0 0
  %134 = vperm.xlu0 %133, %v127
  %v135 = vpop.permute.xlu0 %134
  %vm136 = vcmp.eq.s32.totalorder %v132, %v129
  %vm137 = vcmp.eq.s32.totalorder %v135, %v129
  %v138 = vsel %vm136, 1.0, 0.0
  %v139 = vsel %vm137, 1.0, 0.0
  %v140 = vld [vmem:[%s5] sm:$0xff]
  %v141 = vld [vmem:[%s5 + $0x8] sm:$0xff]
  %v142 = vld [vmem:[%s5 + $0x10] sm:$0xff]
  %v143 = vld [vmem:[%s5 + $0x18] sm:$0xff]
  %v144 = vld [vmem:[%s5 + $0x20] sm:$0xff]
  %v145 = vld [vmem:[%s5 + $0x28] sm:$0xff]
  %v146 = vld [vmem:[%s5 + $0x30] sm:$0xff]
  %v147 = vld [vmem:[%s7] sm:$0xff]
  %vm148 = vcmask 457728
  %v150 = vsel %vm148, %v138, 0
  %v153 = vsel %vm148, %v139, 0
  %155 = vmatprep.subr.mxu0 0.0
  %156 = vmatpush1.msra.mxu0 %v140
  %157 = vmatprep.subr.mxu0 0.0
  %158 = vmatpush1.msra.mxu0 %v141
  %159 = vmatprep.subr.mxu0 0.0
  %160 = vmatpush1.msra.mxu0 %v142
  %161 = vmatprep.subr.mxu0 0.0
  %162 = vmatpush1.msra.mxu0 %v143
  %163 = vmatprep.subr.mxu0 0.0
  %164 = vmatpush1.msra.mxu0 %v144
  %165 = vmatprep.subr.mxu0 0.0
  %166 = vmatpush1.msra.mxu0 %v145
  %167 = vmatprep.subr.mxu0 0.0
  %168 = vmatpush1.msra.mxu0 %v146
  %169 = vmatprep.subr.mxu0 0.0
  %170 = vmatpush1.msra.mxu0 0.0
  %171 = vmatprep.subr.mxu0 0.0
  %172 = vmatpush1.msra.mxu0 0.0
  %173 = vmatprep.subr.mxu0 0.0
  %174 = vmatpush1.msra.mxu0 0.0
  %175 = vmatprep.subr.mxu0 0.0
  %176 = vmatpush1.msra.mxu0 0.0
  %177 = vmatprep.subr.mxu0 0.0
  %178 = vmatpush1.msra.mxu0 0.0
  %179 = vmatprep.subr.mxu0 0.0
  %180 = vmatpush1.msra.mxu0 0.0
  %181 = vmatprep.subr.mxu0 0.0
  %182 = vmatpush1.msra.mxu0 0.0
  %183 = vmatprep.subr.mxu0 0.0
  %184 = vmatpush1.msra.mxu0 0.0
  %185 = vmatprep.subr.mxu0 0.0
  %186 = vmatpush1.msra.mxu0 0.0
  %187 = vmatprep.subr.mxu0 0.0
  %188 = vmatpush1.msra.mxu0 0.0
  %189 = vmatprep.subr.mxu0 0.0
  %190 = vmatpush1.msra.mxu0 0.0
  %191 = vmatprep.subr.mxu0 0.0
  %192 = vmatpush1.msra.mxu0 0.0
  %193 = vmatprep.subr.mxu0 0.0
  %194 = vmatpush1.msra.mxu0 0.0
  %195 = vmatprep.subr.mxu0 0.0
  %196 = vmatpush1.msra.mxu0 0.0
  %197 = vmatprep.subr.mxu0 0.0
  %198 = vmatpush1.msra.mxu0 0.0
  %199 = vmatprep.subr.mxu0 0.0
  %200 = vmatpush1.msra.mxu0 0.0
  %201 = vmatprep.subr.mxu0 0.0
  %202 = vmatpush1.msra.mxu0 0.0
  %203 = vmatprep.subr.mxu0 0.0
  %204 = vmatpush1.msra.mxu0 0.0
  %205 = vmatprep.subr.mxu0 0.0
  %206 = vmatpush1.msra.mxu0 0.0
  %207 = vmatprep.subr.mxu0 0.0
  %208 = vmatpush1.msra.mxu0 0.0
  %209 = vmatprep.subr.mxu0 0.0
  %210 = vmatpush1.msra.mxu0 0.0
  %211 = vmatprep.subr.mxu0 0.0
  %212 = vmatpush1.msra.mxu0 0.0
  %213 = vmatprep.subr.mxu0 0.0
  %214 = vmatpush1.msra.mxu0 0.0
  %215 = vmatprep.subr.mxu0 0.0
  %216 = vmatpush1.msra.mxu0 0.0
  %217 = vmatprep.subr.mxu0 0.0
  %218 = vmatpush1.msra.mxu0 0.0
  %219 = vmatprep.mubr.f32.mxu0 0.0
  %220 = vmatmul.mubr.f32.gmra.mrb[0].mxu0 %v150
  %v221 = vpop.f32.mrb[0].mxu0
  %v222 = vadd.f32 %v147, %v221
  %v223 = vpop.f32.mrb[0].mxu0
  %224 = vmatprep.mubr.f32.mxu0 0.0
  %225 = vmatmul.mubr.f32.gmra.mrb[0].mxu0 %v153
  %v226 = vpop.f32.mrb[0].mxu0
  %v227 = vadd.f32 %v147, %v226
  %v228 = vpop.f32.mrb[0].mxu0
  %229 = vdwg.mxu0
  %v230 = vld [vmem:[%s9] sm:$0x1]
  %v231 = vld [vmem:[%s11] sm:$0x1]
  %vm232 = vcmask 261120
  %v233 = vsel %vm232, %v222, 0.0
  %234 = vadd.xlane.f32.xlu0 %v233
  %v235 = vpop.xlane.xlu0 %234
  %v236 = vsel %vm232, %v227, 0.0
  %237 = vadd.xlane.f32.xlu0 %v236
  %v238 = vpop.xlane.xlu0 %237
  %v239 = vrcp.pop 32.0
  %v240 = vmul.f32 %v235, %v239
  %v241 = vmul.f32 %v238, %v239
  %v242 = vsub.f32 %v222, %v240
  %v243 = vsub.f32 %v227, %v241
  %v244 = vmul.f32 %v242, %v242
  %v245 = vmul.f32 %v243, %v243
  %v246 = vsel %vm232, %v244, 0.0
  %247 = vadd.xlane.f32.xlu0 %v246
  %v248 = vpop.xlane.xlu0 %247
  %v249 = vsel %vm232, %v245, 0.0
  %250 = vadd.xlane.f32.xlu0 %v249
  %v251 = vpop.xlane.xlu0 %250
  %v252 = vmul.f32 %v248, %v239
  %v253 = vmul.f32 %v251, %v239
  %v254 = vadd.f32 %v252, 1e-12
  %v255 = vadd.f32 %v253, 1e-12
  %v256 = vrsqrt.pop %v254
  %v257 = vrsqrt.pop %v255
  %v258 = vmul.f32 %v242, %v256
  %v259 = vmul.f32 %v243, %v257
  %v261 = vlaneseq
  %v262 = vshrl.u32 %v261, 7
  %v263 = vsub.s32 0, %v262
  %v264 = vrot.slane %v230, %v263
  %v266 = vmul.f32 %v258, %v264
  %v267 = vmul.f32 %v259, %v264
  %v269 = vlaneseq
  %v270 = vshrl.u32 %v269, 7
  %v271 = vsub.s32 0, %v270
  %v272 = vrot.slane %v231, %v271
  %v274 = vadd.f32 %v266, %v272
  %v275 = vadd.f32 %v267, %v272
  %v276 = vld [vmem:[%s3] sm:$0x1]
  %v277 = vld [vmem:[%s3 + $0x1] sm:$0x1]
  %v278 = vsub.f32 1.0, %v276
  %v279 = vsub.f32 1.0, %v277
  %v280 = vmul.f32 %v278, -10000.0
  %v281 = vmul.f32 %v279, -10000.0
  %v282 = vld [vmem:[%s13] sm:$0xff]
  %v283 = vld [vmem:[%s13 + $0x8] sm:$0xff]
  %v284 = vld [vmem:[%s13 + $0x10] sm:$0xff]
  %v285 = vld [vmem:[%s13 + $0x18] sm:$0xff]
  %v286 = vld [vmem:[%s15] sm:$0x1]
  %v288 = vlaneseq
  %v289 = vshrl.u32 %v288, 7
  %v290 = vsub.s32 0, %v289
  %v291 = vrot.slane %v286, %v290
  %v294 = vsel %vm232, %v274, 0
  %v297 = vsel %vm232, %v275, 0
  %299 = vmatprep.subr.mxu0 0.0
  %300 = vmatpush1.msra.mxu0 %v282
  %301 = vmatprep.subr.mxu0 0.0
  %302 = vmatpush1.msra.mxu0 %v283
  %303 = vmatprep.subr.mxu0 0.0
  %304 = vmatpush1.msra.mxu0 %v284
  %305 = vmatprep.subr.mxu0 0.0
  %306 = vmatpush1.msra.mxu0 %v285
  %307 = vmatprep.subr.mxu0 0.0
  %308 = vmatpush1.msra.mxu0 0.0
  %309 = vmatprep.subr.mxu0 0.0
  %310 = vmatpush1.msra.mxu0 0.0
  %311 = vmatprep.subr.mxu0 0.0
  %312 = vmatpush1.msra.mxu0 0.0
  %313 = vmatprep.subr.mxu0 0.0
  %314 = vmatpush1.msra.mxu0 0.0
  %315 = vmatprep.subr.mxu0 0.0
  %316 = vmatpush1.msra.mxu0 0.0
  %317 = vmatprep.subr.mxu0 0.0
  %318 = vmatpush1.msra.mxu0 0.0
  %319 = vmatprep.subr.mxu0 0.0
  %320 = vmatpush1.msra.mxu0 0.0
  %321 = vmatprep.subr.mxu0 0.0
  %322 = vmatpush1.msra.mxu0 0.0
  %323 = vmatprep.subr.mxu0 0.0
  %324 = vmatpush1.msra.mxu0 0.0
  %325 = vmatprep.subr.mxu0 0.0
  %326 = vmatpush1.msra.mxu0 0.0
  %327 = vmatprep.subr.mxu0 0.0
  %328 = vmatpush1.msra.mxu0 0.0
  %329 = vmatprep.subr.mxu0 0.0
  %330 = vmatpush1.msra.mxu0 0.0
  %331 = vmatprep.subr.mxu0 0.0
  %332 = vmatpush1.msra.mxu0 0.0
  %333 = vmatprep.subr.mxu0 0.0
  %334 = vmatpush1.msra.mxu0 0.0
  %335 = vmatprep.subr.mxu0 0.0
  %336 = vmatpush1.msra.mxu0 0.0
  %337 = vmatprep.subr.mxu0 0.0
  %338 = vmatpush1.msra.mxu0 0.0
  %339 = vmatprep.subr.mxu0 0.0
  %340 = vmatpush1.msra.mxu0 0.0
  %341 = vmatprep.subr.mxu0 0.0
  %342 = vmatpush1.msra.mxu0 0.0
  %343 = vmatprep.subr.mxu0 0.0
  %344 = vmatpush1.msra.mxu0 0.0
  %345 = vmatprep.subr.mxu0 0.0
  %346 = vmatpush1.msra.mxu0 0.0
  %347 = vmatprep.subr.mxu0 0.0
  %348 = vmatpush1.msra.mxu0 0.0
  %349 = vmatprep.subr.mxu0 0.0
  %350 = vmatpush1.msra.mxu0 0.0
  %351 = vmatprep.subr.mxu0 0.0
  %352 = vmatpush1.msra.mxu0 0.0
  %353 = vmatprep.subr.mxu0 0.0
  %354 = vmatpush1.msra.mxu0 0.0
  %355 = vmatprep.subr.mxu0 0.0
  %356 = vmatpush1.msra.mxu0 0.0
  %357 = vmatprep.subr.mxu0 0.0
  %358 = vmatpush1.msra.mxu0 0.0
  %359 = vmatprep.subr.mxu0 0.0
  %360 = vmatpush1.msra.mxu0 0.0
  %361 = vmatprep.subr.mxu0 0.0
  %362 = vmatpush1.msra.mxu0 0.0
  %363 = vmatprep.mubr.f32.mxu0 0.0
  %364 = vmatmul.mubr.f32.gmra.mrb[0].mxu0 %v294
  %v365 = vpop.f32.mrb[0].mxu0
  %v366 = vadd.f32 %v291, %v365
  %v367 = vpop.f32.mrb[0].mxu0
  %368 = vmatprep.mubr.f32.mxu0 0.0
  %369 = vmatmul.mubr.f32.gmra.mrb[0].mxu0 %v297
  %v370 = vpop.f32.mrb[0].mxu0
  %v371 = vadd.f32 %v291, %v370
  %v372 = vpop.f32.mrb[0].mxu0
  %373 = vdwg.mxu0
  %v374 = vld [vmem:[%s17] sm:$0xff]
  %v375 = vld [vmem:[%s17 + $0x8] sm:$0xff]
  %v376 = vld [vmem:[%s17 + $0x10] sm:$0xff]
  %v377 = vld [vmem:[%s17 + $0x18] sm:$0xff]
  %v378 = vld [vmem:[%s19] sm:$0x1]
  %v380 = vlaneseq
  %v381 = vshrl.u32 %v380, 7
  %v382 = vsub.s32 0, %v381
  %v383 = vrot.slane %v378, %v382
  %385 = vmatprep.subr.mxu0 0.0
  %386 = vmatpush1.msra.mxu0 %v374
  %387 = vmatprep.subr.mxu0 0.0
  %388 = vmatpush1.msra.mxu0 %v375
  %389 = vmatprep.subr.mxu0 0.0
  %390 = vmatpush1.msra.mxu0 %v376
  %391 = vmatprep.subr.mxu0 0.0
  %392 = vmatpush1.msra.mxu0 %v377
  %393 = vmatprep.subr.mxu0 0.0
  %394 = vmatpush1.msra.mxu0 0.0
  %395 = vmatprep.subr.mxu0 0.0
  %396 = vmatpush1.msra.mxu0 0.0
  %397 = vmatprep.subr.mxu0 0.0
  %398 = vmatpush1.msra.mxu0 0.0
  %399 = vmatprep.subr.mxu0 0.0
  %400 = vmatpush1.msra.mxu0 0.0
  %401 = vmatprep.subr.mxu0 0.0
  %402 = vmatpush1.msra.mxu0 0.0
  %403 = vmatprep.subr.mxu0 0.0
  %404 = vmatpush1.msra.mxu0 0.0
  %405 = vmatprep.subr.mxu0 0.0
  %406 = vmatpush1.msra.mxu0 0.0
  %407 = vmatprep.subr.mxu0 0.0
  %408 = vmatpush1.msra.mxu0 0.0
  %409 = vmatprep.subr.mxu0 0.0
  %410 = vmatpush1.msra.mxu0 0.0
  %411 = vmatprep.subr.mxu0 0.0
  %412 = vmatpush1.msra.mxu0 0.0
  %413 = vmatprep.subr.mxu0 0.0
  %414 = vmatpush1.msra.mxu0 0.0
  %415 = vmatprep.subr.mxu0 0.0
  %416 = vmatpush1.msra.mxu0 0.0
  %417 = vmatprep.subr.mxu0 0.0
  %418 = vmatpush1.msra.mxu0 0.0
  %419 = vmatprep.subr.mxu0 0.0
  %420 = vmatpush1.msra.mxu0 0.0
  %421 = vmatprep.subr.mxu0 0.0
  %422 = vmatpush1.msra.mxu0 0.0
  %423 = vmatprep.subr.mxu0 0.0
  %424 = vmatpush1.msra.mxu0 0.0
  %425 = vmatprep.subr.mxu0 0.0
  %426 = vmatpush1.msra.mxu0 0.0
  %427 = vmatprep.subr.mxu0 0.0
  %428 = vmatpush1.msra.mxu0 0.0
  %429 = vmatprep.subr.mxu0 0.0
  %430 = vmatpush1.msra.mxu0 0.0
  %431 = vmatprep.subr.mxu0 0.0
  %432 = vmatpush1.msra.mxu0 0.0
  %433 = vmatprep.subr.mxu0 0.0
  %434 = vmatpush1.msra.mxu0 0.0
  %435 = vmatprep.subr.mxu0 0.0
  %436 = vmatpush1.msra.mxu0 0.0
  %437 = vmatprep.subr.mxu0 0.0
  %438 = vmatpush1.msra.mxu0 0.0
  %439 = vmatprep.subr.mxu0 0.0
  %440 = vmatpush1.msra.mxu0 0.0
  %441 = vmatprep.subr.mxu0 0.0
  %442 = vmatpush1.msra.mxu0 0.0
  %443 = vmatprep.subr.mxu0 0.0
  %444 = vmatpush1.msra.mxu0 0.0
  %445 = vmatprep.subr.mxu0 0.0
  %446 = vmatpush1.msra.mxu0 0.0
  %447 = vmatprep.subr.mxu0 0.0
  %448 = vmatpush1.msra.mxu0 0.0
  %449 = vmatprep.mubr.f32.mxu0 0.0
  %450 = vmatmul.mubr.f32.gmra.mrb[0].mxu0 %v294
  %v451 = vpop.f32.mrb[0].mxu0
  %v452 = vadd.f32 %v383, %v451
  %v453 = vpop.f32.mrb[0].mxu0
  %454 = vmatprep.mubr.f32.mxu0 0.0
  %455 = vmatmul.mubr.f32.gmra.mrb[0].mxu0 %v297
  %v456 = vpop.f32.mrb[0].mxu0
  %v457 = vadd.f32 %v383, %v456
  %v458 = vpop.f32.mrb[0].mxu0
  %459 = vdwg.mxu0
  %v460 = vld [vmem:[%s21] sm:$0xff]
  %v461 = vld [vmem:[%s21 + $0x8] sm:$0xff]
  %v462 = vld [vmem:[%s21 + $0x10] sm:$0xff]
  %v463 = vld [vmem:[%s21 + $0x18] sm:$0xff]
  %v464 = vld [vmem:[%s23] sm:$0x1]
  %v466 = vlaneseq
  %v467 = vshrl.u32 %v466, 7
  %v468 = vsub.s32 0, %v467
  %v469 = vrot.slane %v464, %v468
  %471 = vmatprep.subr.mxu0 0.0
  %472 = vmatpush1.msra.mxu0 %v460
  %473 = vmatprep.subr.mxu0 0.0
  %474 = vmatpush1.msra.mxu0 %v461
  %475 = vmatprep.subr.mxu0 0.0
  %476 = vmatpush1.msra.mxu0 %v462
  %477 = vmatprep.subr.mxu0 0.0
  %478 = vmatpush1.msra.mxu0 %v463
  %479 = vmatprep.subr.mxu0 0.0
  %480 = vmatpush1.msra.mxu0 0.0
  %481 = vmatprep.subr.mxu0 0.0
  %482 = vmatpush1.msra.mxu0 0.0
  %483 = vmatprep.subr.mxu0 0.0
  %484 = vmatpush1.msra.mxu0 0.0
  %485 = vmatprep.subr.mxu0 0.0
  %486 = vmatpush1.msra.mxu0 0.0
  %487 = vmatprep.subr.mxu0 0.0
  %488 = vmatpush1.msra.mxu0 0.0
  %489 = vmatprep.subr.mxu0 0.0
  %490 = vmatpush1.msra.mxu0 0.0
  %491 = vmatprep.subr.mxu0 0.0
  %492 = vmatpush1.msra.mxu0 0.0
  %493 = vmatprep.subr.mxu0 0.0
  %494 = vmatpush1.msra.mxu0 0.0
  %495 = vmatprep.subr.mxu0 0.0
  %496 = vmatpush1.msra.mxu0 0.0
  %497 = vmatprep.subr.mxu0 0.0
  %498 = vmatpush1.msra.mxu0 0.0
  %499 = vmatprep.subr.mxu0 0.0
  %500 = vmatpush1.msra.mxu0 0.0
  %501 = vmatprep.subr.mxu0 0.0
  %502 = vmatpush1.msra.mxu0 0.0
  %503 = vmatprep.subr.mxu0 0.0
  %504 = vmatpush1.msra.mxu0 0.0
  %505 = vmatprep.subr.mxu0 0.0
  %506 = vmatpush1.msra.mxu0 0.0
  %507 = vmatprep.subr.mxu0 0.0
  %508 = vmatpush1.msra.mxu0 0.0
  %509 = vmatprep.subr.mxu0 0.0
  %510 = vmatpush1.msra.mxu0 0.0
  %511 = vmatprep.subr.mxu0 0.0
  %512 = vmatpush1.msra.mxu0 0.0
  %513 = vmatprep.subr.mxu0 0.0
  %514 = vmatpush1.msra.mxu0 0.0
  %515 = vmatprep.subr.mxu0 0.0
  %516 = vmatpush1.msra.mxu0 0.0
  %517 = vmatprep.subr.mxu0 0.0
  %518 = vmatpush1.msra.mxu0 0.0
  %519 = vmatprep.subr.mxu0 0.0
  %520 = vmatpush1.msra.mxu0 0.0
  %521 = vmatprep.subr.mxu0 0.0
  %522 = vmatpush1.msra.mxu0 0.0
  %523 = vmatprep.subr.mxu0 0.0
  %524 = vmatpush1.msra.mxu0 0.0
  %525 = vmatprep.subr.mxu0 0.0
  %526 = vmatpush1.msra.mxu0 0.0
  %527 = vmatprep.subr.mxu0 0.0
  %528 = vmatpush1.msra.mxu0 0.0
  %529 = vmatprep.subr.mxu0 0.0
  %530 = vmatpush1.msra.mxu0 0.0
  %531 = vmatprep.subr.mxu0 0.0
  %532 = vmatpush1.msra.mxu0 0.0
  %533 = vmatprep.subr.mxu0 0.0
  %534 = vmatpush1.msra.mxu0 0.0
  %535 = vmatprep.mubr.f32.mxu0 0.0
  %536 = vmatmul.mubr.f32.gmra.mrb[0].mxu0 %v294
  %v537 = vpop.f32.mrb[0].mxu0
  %v538 = vadd.f32 %v469, %v537
  %v539 = vpop.f32.mrb[0].mxu0
  %540 = vmatprep.mubr.f32.mxu0 0.0
  %541 = vmatmul.mubr.f32.gmra.mrb[0].mxu0 %v297
  %v542 = vpop.f32.mrb[0].mxu0
  %v543 = vadd.f32 %v469, %v542
  %v544 = vpop.f32.mrb[0].mxu0
  %545 = vdwg.mxu0
  %v548 = vlaneseq
  %v549 = vshrl.u32 %v548, 7
  %v550 = vsub.s32 0, %v549
  %v551 = vrot.slane %v280, %v550
  %v552 = vlaneseq
  %v553 = vshrl.u32 %v552, 7
  %v554 = vsub.s32 0, %v553
  %v555 = vrot.slane %v281, %v554
  %vm558 = vcmask 130048
  %v560 = vsel %vm558, %v366, 0
  %v563 = vsel %vm558, %v452, 0
  %565 = vmatprep.subr.mxu0 0.0
  %566 = vmatpush1.xpose.msra.mxu0 %v563
  %567 = vmatprep.subr.mxu0 0.0
  %568 = vmatpush1.xpose.msra.mxu0 0.0
  %569 = vmatprep.subr.mxu0 0.0
  %570 = vmatpush1.xpose.msra.mxu0 0.0
  %571 = vmatprep.subr.mxu0 0.0
  %572 = vmatpush1.xpose.msra.mxu0 0.0
  %573 = vmatprep.subr.mxu0 0.0
  %574 = vmatpush1.xpose.msra.mxu0 0.0
  %575 = vmatprep.subr.mxu0 0.0
  %576 = vmatpush1.xpose.msra.mxu0 0.0
  %577 = vmatprep.subr.mxu0 0.0
  %578 = vmatpush1.xpose.msra.mxu0 0.0
  %579 = vmatprep.subr.mxu0 0.0
  %580 = vmatpush1.xpose.msra.mxu0 0.0
  %581 = vmatprep.subr.mxu0 0.0
  %582 = vmatpush1.xpose.msra.mxu0 0.0
  %583 = vmatprep.subr.mxu0 0.0
  %584 = vmatpush1.xpose.msra.mxu0 0.0
  %585 = vmatprep.subr.mxu0 0.0
  %586 = vmatpush1.xpose.msra.mxu0 0.0
  %587 = vmatprep.subr.mxu0 0.0
  %588 = vmatpush1.xpose.msra.mxu0 0.0
  %589 = vmatprep.subr.mxu0 0.0
  %590 = vmatpush1.xpose.msra.mxu0 0.0
  %591 = vmatprep.subr.mxu0 0.0
  %592 = vmatpush1.xpose.msra.mxu0 0.0
  %593 = vmatprep.subr.mxu0 0.0
  %594 = vmatpush1.xpose.msra.mxu0 0.0
  %595 = vmatprep.subr.mxu0 0.0
  %596 = vmatpush1.xpose.msra.mxu0 0.0
  %597 = vmatprep.subr.mxu0 0.0
  %598 = vmatpush1.xpose.msra.mxu0 0.0
  %599 = vmatprep.subr.mxu0 0.0
  %600 = vmatpush1.xpose.msra.mxu0 0.0
  %601 = vmatprep.subr.mxu0 0.0
  %602 = vmatpush1.xpose.msra.mxu0 0.0
  %603 = vmatprep.subr.mxu0 0.0
  %604 = vmatpush1.xpose.msra.mxu0 0.0
  %605 = vmatprep.subr.mxu0 0.0
  %606 = vmatpush1.xpose.msra.mxu0 0.0
  %607 = vmatprep.subr.mxu0 0.0
  %608 = vmatpush1.xpose.msra.mxu0 0.0
  %609 = vmatprep.subr.mxu0 0.0
  %610 = vmatpush1.xpose.msra.mxu0 0.0
  %611 = vmatprep.subr.mxu0 0.0
  %612 = vmatpush1.xpose.msra.mxu0 0.0
  %613 = vmatprep.subr.mxu0 0.0
  %614 = vmatpush1.xpose.msra.mxu0 0.0
  %615 = vmatprep.subr.mxu0 0.0
  %616 = vmatpush1.xpose.msra.mxu0 0.0
  %617 = vmatprep.subr.mxu0 0.0
  %618 = vmatpush1.xpose.msra.mxu0 0.0
  %619 = vmatprep.subr.mxu0 0.0
  %620 = vmatpush1.xpose.msra.mxu0 0.0
  %621 = vmatprep.subr.mxu0 0.0
  %622 = vmatpush1.xpose.msra.mxu0 0.0
  %623 = vmatprep.subr.mxu0 0.0
  %624 = vmatpush1.xpose.msra.mxu0 0.0
  %625 = vmatprep.subr.mxu0 0.0
  %626 = vmatpush1.xpose.msra.mxu0 0.0
  %627 = vmatprep.subr.mxu0 0.0
  %628 = vmatpush1.xpose.msra.mxu0 0.0
  %629 = vmatprep.mubr.f32.mxu0 0.0
  %630 = vmatmul.mubr.f32.gmra.mrb[0].mxu0 %v560
  %v631 = vpop.f32.mrb[0].mxu0
  %v632 = vadd.f32 %v551, %v631
  %v633 = vpop.f32.mrb[0].mxu0
  %634 = vdwg.mxu0
  %v636 = vsel %vm558, %v371, 0
  %v639 = vsel %vm558, %v457, 0
  %641 = vmatprep.subr.mxu0 0.0
  %642 = vmatpush1.xpose.msra.mxu0 %v639
  %643 = vmatprep.subr.mxu0 0.0
  %644 = vmatpush1.xpose.msra.mxu0 0.0
  %645 = vmatprep.subr.mxu0 0.0
  %646 = vmatpush1.xpose.msra.mxu0 0.0
  %647 = vmatprep.subr.mxu0 0.0
  %648 = vmatpush1.xpose.msra.mxu0 0.0
  %649 = vmatprep.subr.mxu0 0.0
  %650 = vmatpush1.xpose.msra.mxu0 0.0
  %651 = vmatprep.subr.mxu0 0.0
  %652 = vmatpush1.xpose.msra.mxu0 0.0
  %653 = vmatprep.subr.mxu0 0.0
  %654 = vmatpush1.xpose.msra.mxu0 0.0
  %655 = vmatprep.subr.mxu0 0.0
  %656 = vmatpush1.xpose.msra.mxu0 0.0
  %657 = vmatprep.subr.mxu0 0.0
  %658 = vmatpush1.xpose.msra.mxu0 0.0
  %659 = vmatprep.subr.mxu0 0.0
  %660 = vmatpush1.xpose.msra.mxu0 0.0
  %661 = vmatprep.subr.mxu0 0.0
  %662 = vmatpush1.xpose.msra.mxu0 0.0
  %663 = vmatprep.subr.mxu0 0.0
  %664 = vmatpush1.xpose.msra.mxu0 0.0
  %665 = vmatprep.subr.mxu0 0.0
  %666 = vmatpush1.xpose.msra.mxu0 0.0
  %667 = vmatprep.subr.mxu0 0.0
  %668 = vmatpush1.xpose.msra.mxu0 0.0
  %669 = vmatprep.subr.mxu0 0.0
  %670 = vmatpush1.xpose.msra.mxu0 0.0
  %671 = vmatprep.subr.mxu0 0.0
  %672 = vmatpush1.xpose.msra.mxu0 0.0
  %673 = vmatprep.subr.mxu0 0.0
  %674 = vmatpush1.xpose.msra.mxu0 0.0
  %675 = vmatprep.subr.mxu0 0.0
  %676 = vmatpush1.xpose.msra.mxu0 0.0
  %677 = vmatprep.subr.mxu0 0.0
  %678 = vmatpush1.xpose.msra.mxu0 0.0
  %679 = vmatprep.subr.mxu0 0.0
  %680 = vmatpush1.xpose.msra.mxu0 0.0
  %681 = vmatprep.subr.mxu0 0.0
  %682 = vmatpush1.xpose.msra.mxu0 0.0
  %683 = vmatprep.subr.mxu0 0.0
  %684 = vmatpush1.xpose.msra.mxu0 0.0
  %685 = vmatprep.subr.mxu0 0.0
  %686 = vmatpush1.xpose.msra.mxu0 0.0
  %687 = vmatprep.subr.mxu0 0.0
  %688 = vmatpush1.xpose.msra.mxu0 0.0
  %689 = vmatprep.subr.mxu0 0.0
  %690 = vmatpush1.xpose.msra.mxu0 0.0
  %691 = vmatprep.subr.mxu0 0.0
  %692 = vmatpush1.xpose.msra.mxu0 0.0
  %693 = vmatprep.subr.mxu0 0.0
  %694 = vmatpush1.xpose.msra.mxu0 0.0
  %695 = vmatprep.subr.mxu0 0.0
  %696 = vmatpush1.xpose.msra.mxu0 0.0
  %697 = vmatprep.subr.mxu0 0.0
  %698 = vmatpush1.xpose.msra.mxu0 0.0
  %699 = vmatprep.subr.mxu0 0.0
  %700 = vmatpush1.xpose.msra.mxu0 0.0
  %701 = vmatprep.subr.mxu0 0.0
  %702 = vmatpush1.xpose.msra.mxu0 0.0
  %703 = vmatprep.subr.mxu0 0.0
  %704 = vmatpush1.xpose.msra.mxu0 0.0
  %705 = vmatprep.mubr.f32.mxu0 0.0
  %706 = vmatmul.mubr.f32.gmra.mrb[0].mxu0 %v636
  %v707 = vpop.f32.mrb[0].mxu0
  %v708 = vadd.f32 %v555, %v707
  %v709 = vpop.f32.mrb[0].mxu0
  %710 = vdwg.mxu0
  %vm711 = vcmask 64512
  %v712 = vsel %vm711, %v632, -inf
  %713 = vmax.xlane.f32.xlu0 %v712
  %v714 = vpop.xlane.xlu0 %713
  %v715 = vsel %vm711, %v708, -inf
  %716 = vmax.xlane.f32.xlu0 %v715
  %v717 = vpop.xlane.xlu0 %716
  %v718 = vsub.f32 %v632, %v714
  %v719 = vsub.f32 %v708, %v717
  %v720 = vmul.f32 %v718, 1.442695
  %v721 = vpow.pop %v720
  %v722 = vmul.f32 %v719, 1.442695
  %v723 = vpow.pop %v722
  %v724 = vsel %vm711, %v721, 0.0
  %725 = vadd.xlane.f32.xlu0 %v724
  %v726 = vpop.xlane.xlu0 %725
  %v727 = vsel %vm711, %v723, 0.0
  %728 = vadd.xlane.f32.xlu0 %v727
  %v729 = vpop.xlane.xlu0 %728
  %v730 = vrcp.pop %v726
  %v731 = vrcp.pop %v729
  %v732 = vmul.f32 %v721, %v730
  %v733 = vmul.f32 %v723, %v731
  %v735 = vsel %vm711, %v732, 0
  %737 = vmatprep.subr.mxu0 0.0
  %738 = vmatpush1.msra.mxu0 %v538
  %739 = vmatprep.subr.mxu0 0.0
  %740 = vmatpush1.msra.mxu0 0.0
  %741 = vmatprep.subr.mxu0 0.0
  %742 = vmatpush1.msra.mxu0 0.0
  %743 = vmatprep.subr.mxu0 0.0
  %744 = vmatpush1.msra.mxu0 0.0
  %745 = vmatprep.subr.mxu0 0.0
  %746 = vmatpush1.msra.mxu0 0.0
  %747 = vmatprep.subr.mxu0 0.0
  %748 = vmatpush1.msra.mxu0 0.0
  %749 = vmatprep.subr.mxu0 0.0
  %750 = vmatpush1.msra.mxu0 0.0
  %751 = vmatprep.subr.mxu0 0.0
  %752 = vmatpush1.msra.mxu0 0.0
  %753 = vmatprep.subr.mxu0 0.0
  %754 = vmatpush1.msra.mxu0 0.0
  %755 = vmatprep.subr.mxu0 0.0
  %756 = vmatpush1.msra.mxu0 0.0
  %757 = vmatprep.subr.mxu0 0.0
  %758 = vmatpush1.msra.mxu0 0.0
  %759 = vmatprep.subr.mxu0 0.0
  %760 = vmatpush1.msra.mxu0 0.0
  %761 = vmatprep.subr.mxu0 0.0
  %762 = vmatpush1.msra.mxu0 0.0
  %763 = vmatprep.subr.mxu0 0.0
  %764 = vmatpush1.msra.mxu0 0.0
  %765 = vmatprep.subr.mxu0 0.0
  %766 = vmatpush1.msra.mxu0 0.0
  %767 = vmatprep.subr.mxu0 0.0
  %768 = vmatpush1.msra.mxu0 0.0
  %769 = vmatprep.subr.mxu0 0.0
  %770 = vmatpush1.msra.mxu0 0.0
  %771 = vmatprep.subr.mxu0 0.0
  %772 = vmatpush1.msra.mxu0 0.0
  %773 = vmatprep.subr.mxu0 0.0
  %774 = vmatpush1.msra.mxu0 0.0
  %775 = vmatprep.subr.mxu0 0.0
  %776 = vmatpush1.msra.mxu0 0.0
  %777 = vmatprep.subr.mxu0 0.0
  %778 = vmatpush1.msra.mxu0 0.0
  %779 = vmatprep.subr.mxu0 0.0
  %780 = vmatpush1.msra.mxu0 0.0
  %781 = vmatprep.subr.mxu0 0.0
  %782 = vmatpush1.msra.mxu0 0.0
  %783 = vmatprep.subr.mxu0 0.0
  %784 = vmatpush1.msra.mxu0 0.0
  %785 = vmatprep.subr.mxu0 0.0
  %786 = vmatpush1.msra.mxu0 0.0
  %787 = vmatprep.subr.mxu0 0.0
  %788 = vmatpush1.msra.mxu0 0.0
  %789 = vmatprep.subr.mxu0 0.0
  %790 = vmatpush1.msra.mxu0 0.0
  %791 = vmatprep.subr.mxu0 0.0
  %792 = vmatpush1.msra.mxu0 0.0
  %793 = vmatprep.subr.mxu0 0.0
  %794 = vmatpush1.msra.mxu0 0.0
  %795 = vmatprep.subr.mxu0 0.0
  %796 = vmatpush1.msra.mxu0 0.0
  %797 = vmatprep.subr.mxu0 0.0
  %798 = vmatpush1.msra.mxu0 0.0
  %799 = vmatprep.subr.mxu0 0.0
  %800 = vmatpush1.msra.mxu0 0.0
  %801 = vmatprep.mubr.f32.mxu0 0.0
  %802 = vmatmul.mubr.f32.gmra.mrb[0].mxu0 %v735
  %v803 = vpop.f32.mrb[0].mxu0
  %v804 = vadd.f32 0.0, %v803
  %v805 = vpop.f32.mrb[0].mxu0
  %806 = vdwg.mxu0
  %v808 = vsel %vm711, %v733, 0
  %810 = vmatprep.subr.mxu0 0.0
  %811 = vmatpush1.msra.mxu0 %v543
  %812 = vmatprep.subr.mxu0 0.0
  %813 = vmatpush1.msra.mxu0 0.0
  %814 = vmatprep.subr.mxu0 0.0
  %815 = vmatpush1.msra.mxu0 0.0
  %816 = vmatprep.subr.mxu0 0.0
  %817 = vmatpush1.msra.mxu0 0.0
  %818 = vmatprep.subr.mxu0 0.0
  %819 = vmatpush1.msra.mxu0 0.0
  %820 = vmatprep.subr.mxu0 0.0
  %821 = vmatpush1.msra.mxu0 0.0
  %822 = vmatprep.subr.mxu0 0.0
  %823 = vmatpush1.msra.mxu0 0.0
  %824 = vmatprep.subr.mxu0 0.0
  %825 = vmatpush1.msra.mxu0 0.0
  %826 = vmatprep.subr.mxu0 0.0
  %827 = vmatpush1.msra.mxu0 0.0
  %828 = vmatprep.subr.mxu0 0.0
  %829 = vmatpush1.msra.mxu0 0.0
  %830 = vmatprep.subr.mxu0 0.0
  %831 = vmatpush1.msra.mxu0 0.0
  %832 = vmatprep.subr.mxu0 0.0
  %833 = vmatpush1.msra.mxu0 0.0
  %834 = vmatprep.subr.mxu0 0.0
  %835 = vmatpush1.msra.mxu0 0.0
  %836 = vmatprep.subr.mxu0 0.0
  %837 = vmatpush1.msra.mxu0 0.0
  %838 = vmatprep.subr.mxu0 0.0
  %839 = vmatpush1.msra.mxu0 0.0
  %840 = vmatprep.subr.mxu0 0.0
  %841 = vmatpush1.msra.mxu0 0.0
  %842 = vmatprep.subr.mxu0 0.0
  %843 = vmatpush1.msra.mxu0 0.0
  %844 = vmatprep.subr.mxu0 0.0
  %845 = vmatpush1.msra.mxu0 0.0
  %846 = vmatprep.subr.mxu0 0.0
  %847 = vmatpush1.msra.mxu0 0.0
  %848 = vmatprep.subr.mxu0 0.0
  %849 = vmatpush1.msra.mxu0 0.0
  %850 = vmatprep.subr.mxu0 0.0
  %851 = vmatpush1.msra.mxu0 0.0
  %852 = vmatprep.subr.mxu0 0.0
  %853 = vmatpush1.msra.mxu0 0.0
  %854 = vmatprep.subr.mxu0 0.0
  %855 = vmatpush1.msra.mxu0 0.0
  %856 = vmatprep.subr.mxu0 0.0
  %857 = vmatpush1.msra.mxu0 0.0
  %858 = vmatprep.subr.mxu0 0.0
  %859 = vmatpush1.msra.mxu0 0.0
  %860 = vmatprep.subr.mxu0 0.0
  %861 = vmatpush1.msra.mxu0 0.0
  %862 = vmatprep.subr.mxu0 0.0
  %863 = vmatpush1.msra.mxu0 0.0
  %864 = vmatprep.subr.mxu0 0.0
  %865 = vmatpush1.msra.mxu0 0.0
  %866 = vmatprep.subr.mxu0 0.0
  %867 = vmatpush1.msra.mxu0 0.0
  %868 = vmatprep.subr.mxu0 0.0
  %869 = vmatpush1.msra.mxu0 0.0
  %870 = vmatprep.subr.mxu0 0.0
  %871 = vmatpush1.msra.mxu0 0.0
  %872 = vmatprep.subr.mxu0 0.0
  %873 = vmatpush1.msra.mxu0 0.0
  %874 = vmatprep.mubr.f32.mxu0 0.0
  %875 = vmatmul.mubr.f32.gmra.mrb[0].mxu0 %v808
  %v876 = vpop.f32.mrb[0].mxu0
  %v877 = vadd.f32 0.0, %v876
  %v878 = vpop.f32.mrb[0].mxu0
  %879 = vdwg.mxu0
  %v880 = vld [vmem:[%s25] sm:$0xff]
  %v881 = vld [vmem:[%s25 + $0x8] sm:$0xff]
  %s882 = scalar_lea.vmem %s13, 32
  %v883 = vld [vmem:[%s882] sm:$0xff]
  %v884 = vld [vmem:[%s882 + $0x8] sm:$0xff]
  %v885 = vld [vmem:[%s882 + $0x10] sm:$0xff]
  %v886 = vld [vmem:[%s882 + $0x18] sm:$0xff]
  %s887 = scalar_lea.vmem %s15, 1
  %v888 = vld [vmem:[%s887] sm:$0x1]
  %v890 = vlaneseq
  %v891 = vshrl.u32 %v890, 7
  %v892 = vsub.s32 0, %v891
  %v893 = vrot.slane %v888, %v892
  %895 = vmatprep.subr.mxu0 0.0
  %896 = vmatpush1.msra.mxu0 %v883
  %897 = vmatprep.subr.mxu0 0.0
  %898 = vmatpush1.msra.mxu0 %v884
  %899 = vmatprep.subr.mxu0 0.0
  %900 = vmatpush1.msra.mxu0 %v885
  %901 = vmatprep.subr.mxu0 0.0
  %902 = vmatpush1.msra.mxu0 %v886
  %903 = vmatprep.subr.mxu0 0.0
  %904 = vmatpush1.msra.mxu0 0.0
  %905 = vmatprep.subr.mxu0 0.0
  %906 = vmatpush1.msra.mxu0 0.0
  %907 = vmatprep.subr.mxu0 0.0
  %908 = vmatpush1.msra.mxu0 0.0
  %909 = vmatprep.subr.mxu0 0.0
  %910 = vmatpush1.msra.mxu0 0.0
  %911 = vmatprep.subr.mxu0 0.0
  %912 = vmatpush1.msra.mxu0 0.0
  %913 = vmatprep.subr.mxu0 0.0
  %914 = vmatpush1.msra.mxu0 0.0
  %915 = vmatprep.subr.mxu0 0.0
  %916 = vmatpush1.msra.mxu0 0.0
  %917 = vmatprep.subr.mxu0 0.0
  %918 = vmatpush1.msra.mxu0 0.0
  %919 = vmatprep.subr.mxu0 0.0
  %920 = vmatpush1.msra.mxu0 0.0
  %921 = vmatprep.subr.mxu0 0.0
  %922 = vmatpush1.msra.mxu0 0.0
  %923 = vmatprep.subr.mxu0 0.0
  %924 = vmatpush1.msra.mxu0 0.0
  %925 = vmatprep.subr.mxu0 0.0
  %926 = vmatpush1.msra.mxu0 0.0
  %927 = vmatprep.subr.mxu0 0.0
  %928 = vmatpush1.msra.mxu0 0.0
  %929 = vmatprep.subr.mxu0 0.0
  %930 = vmatpush1.msra.mxu0 0.0
  %931 = vmatprep.subr.mxu0 0.0
  %932 = vmatpush1.msra.mxu0 0.0
  %933 = vmatprep.subr.mxu0 0.0
  %934 = vmatpush1.msra.mxu0 0.0
  %935 = vmatprep.subr.mxu0 0.0
  %936 = vmatpush1.msra.mxu0 0.0
  %937 = vmatprep.subr.mxu0 0.0
  %938 = vmatpush1.msra.mxu0 0.0
  %939 = vmatprep.subr.mxu0 0.0
  %940 = vmatpush1.msra.mxu0 0.0
  %941 = vmatprep.subr.mxu0 0.0
  %942 = vmatpush1.msra.mxu0 0.0
  %943 = vmatprep.subr.mxu0 0.0
  %944 = vmatpush1.msra.mxu0 0.0
  %945 = vmatprep.subr.mxu0 0.0
  %946 = vmatpush1.msra.mxu0 0.0
  %947 = vmatprep.subr.mxu0 0.0
  %948 = vmatpush1.msra.mxu0 0.0
  %949 = vmatprep.subr.mxu0 0.0
  %950 = vmatpush1.msra.mxu0 0.0
  %951 = vmatprep.subr.mxu0 0.0
  %952 = vmatpush1.msra.mxu0 0.0
  %953 = vmatprep.subr.mxu0 0.0
  %954 = vmatpush1.msra.mxu0 0.0
  %955 = vmatprep.subr.mxu0 0.0
  %956 = vmatpush1.msra.mxu0 0.0
  %957 = vmatprep.subr.mxu0 0.0
  %958 = vmatpush1.msra.mxu0 0.0
  %959 = vmatprep.mubr.f32.mxu0 0.0
  %960 = vmatmul.mubr.f32.gmra.mrb[0].mxu0 %v294
  %v961 = vpop.f32.mrb[0].mxu0
  %v962 = vadd.f32 %v893, %v961
  %v963 = vpop.f32.mrb[0].mxu0
  %964 = vmatprep.mubr.f32.mxu0 0.0
  %965 = vmatmul.mubr.f32.gmra.mrb[0].mxu0 %v297
  %v966 = vpop.f32.mrb[0].mxu0
  %v967 = vadd.f32 %v893, %v966
  %v968 = vpop.f32.mrb[0].mxu0
  %969 = vdwg.mxu0
  %s970 = scalar_lea.vmem %s17, 32
  %v971 = vld [vmem:[%s970] sm:$0xff]
  %v972 = vld [vmem:[%s970 + $0x8] sm:$0xff]
  %v973 = vld [vmem:[%s970 + $0x10] sm:$0xff]
  %v974 = vld [vmem:[%s970 + $0x18] sm:$0xff]
  %s975 = scalar_lea.vmem %s19, 1
  %v976 = vld [vmem:[%s975] sm:$0x1]
  %v978 = vlaneseq
  %v979 = vshrl.u32 %v978, 7
  %v980 = vsub.s32 0, %v979
  %v981 = vrot.slane %v976, %v980
  %983 = vmatprep.subr.mxu0 0.0
  %984 = vmatpush1.msra.mxu0 %v971
  %985 = vmatprep.subr.mxu0 0.0
  %986 = vmatpush1.msra.mxu0 %v972
  %987 = vmatprep.subr.mxu0 0.0
  %988 = vmatpush1.msra.mxu0 %v973
  %989 = vmatprep.subr.mxu0 0.0
  %990 = vmatpush1.msra.mxu0 %v974
  %991 = vmatprep.subr.mxu0 0.0
  %992 = vmatpush1.msra.mxu0 0.0
  %993 = vmatprep.subr.mxu0 0.0
  %994 = vmatpush1.msra.mxu0 0.0
  %995 = vmatprep.subr.mxu0 0.0
  %996 = vmatpush1.msra.mxu0 0.0
  %997 = vmatprep.subr.mxu0 0.0
  %998 = vmatpush1.msra.mxu0 0.0
  %999 = vmatprep.subr.mxu0 0.0
  %1000 = vmatpush1.msra.mxu0 0.0
  %1001 = vmatprep.subr.mxu0 0.0
  %1002 = vmatpush1.msra.mxu0 0.0
  %1003 = vmatprep.subr.mxu0 0.0
  %1004 = vmatpush1.msra.mxu0 0.0
  %1005 = vmatprep.subr.mxu0 0.0
  %1006 = vmatpush1.msra.mxu0 0.0
  %1007 = vmatprep.subr.mxu0 0.0
  %1008 = vmatpush1.msra.mxu0 0.0
  %1009 = vmatprep.subr.mxu0 0.0
  %1010 = vmatpush1.msra.mxu0 0.0
  %1011 = vmatprep.subr.mxu0 0.0
  %1012 = vmatpush1.msra.mxu0 0.0
  %1013 = vmatprep.subr.mxu0 0.0
  %1014 = vmatpush1.msra.mxu0 0.0
  %1015 = vmatprep.subr.mxu0 0.0
  %1016 = vmatpush1.msra.mxu0 0.0
  %1017 = vmatprep.subr.mxu0 0.0
  %1018 = vmatpush1.msra.mxu0 0.0
  %1019 = vmatprep.subr.mxu0 0.0
  %1020 = vmatpush1.msra.mxu0 0.0
  %1021 = vmatprep.subr.mxu0 0.0
  %1022 = vmatpush1.msra.mxu0 0.0
  %1023 = vmatprep.subr.mxu0 0.0
  %1024 = vmatpush1.msra.mxu0 0.0
  %1025 = vmatprep.subr.mxu0 0.0
  %1026 = vmatpush1.msra.mxu0 0.0
  %1027 = vmatprep.subr.mxu0 0.0
  %1028 = vmatpush1.msra.mxu0 0.0
  %1029 = vmatprep.subr.mxu0 0.0
  %1030 = vmatpush1.msra.mxu0 0.0
  %1031 = vmatprep.subr.mxu0 0.0
  %1032 = vmatpush1.msra.mxu0 0.0
  %1033 = vmatprep.subr.mxu0 0.0
  %1034 = vmatpush1.msra.mxu0 0.0
  %1035 = vmatprep.subr.mxu0 0.0
  %1036 = vmatpush1.msra.mxu0 0.0
  %1037 = vmatprep.subr.mxu0 0.0
  %1038 = vmatpush1.msra.mxu0 0.0
  %1039 = vmatprep.subr.mxu0 0.0
  %1040 = vmatpush1.msra.mxu0 0.0
  %1041 = vmatprep.subr.mxu0 0.0
  %1042 = vmatpush1.msra.mxu0 0.0
  %1043 = vmatprep.subr.mxu0 0.0
  %1044 = vmatpush1.msra.mxu0 0.0
  %1045 = vmatprep.subr.mxu0 0.0
  %1046 = vmatpush1.msra.mxu0 0.0
  %1047 = vmatprep.mubr.f32.mxu0 0.0
  %1048 = vmatmul.mubr.f32.gmra.mrb[0].mxu0 %v294
  %v1049 = vpop.f32.mrb[0].mxu0
  %v1050 = vadd.f32 %v981, %v1049
  %v1051 = vpop.f32.mrb[0].mxu0
  %1052 = vmatprep.mubr.f32.mxu0 0.0
  %1053 = vmatmul.mubr.f32.gmra.mrb[0].mxu0 %v297
  %v1054 = vpop.f32.mrb[0].mxu0
  %v1055 = vadd.f32 %v981, %v1054
  %v1056 = vpop.f32.mrb[0].mxu0
  %1057 = vdwg.mxu0
  %s1058 = scalar_lea.vmem %s21, 32
  %v1059 = vld [vmem:[%s1058] sm:$0xff]
  %v1060 = vld [vmem:[%s1058 + $0x8] sm:$0xff]
  %v1061 = vld [vmem:[%s1058 + $0x10] sm:$0xff]
  %v1062 = vld [vmem:[%s1058 + $0x18] sm:$0xff]
  %s1063 = scalar_lea.vmem %s23, 1
  %v1064 = vld [vmem:[%s1063] sm:$0x1]
  %v1066 = vlaneseq
  %v1067 = vshrl.u32 %v1066, 7
  %v1068 = vsub.s32 0, %v1067
  %v1069 = vrot.slane %v1064, %v1068
  %1071 = vmatprep.subr.mxu0 0.0
  %1072 = vmatpush1.msra.mxu0 %v1059
  %1073 = vmatprep.subr.mxu0 0.0
  %1074 = vmatpush1.msra.mxu0 %v1060
  %1075 = vmatprep.subr.mxu0 0.0
  %1076 = vmatpush1.msra.mxu0 %v1061
  %1077 = vmatprep.subr.mxu0 0.0
  %1078 = vmatpush1.msra.mxu0 %v1062
  %1079 = vmatprep.subr.mxu0 0.0
  %1080 = vmatpush1.msra.mxu0 0.0
  %1081 = vmatprep.subr.mxu0 0.0
  %1082 = vmatpush1.msra.mxu0 0.0
  %1083 = vmatprep.subr.mxu0 0.0
  %1084 = vmatpush1.msra.mxu0 0.0
  %1085 = vmatprep.subr.mxu0 0.0
  %1086 = vmatpush1.msra.mxu0 0.0
  %1087 = vmatprep.subr.mxu0 0.0
  %1088 = vmatpush1.msra.mxu0 0.0
  %1089 = vmatprep.subr.mxu0 0.0
  %1090 = vmatpush1.msra.mxu0 0.0
  %1091 = vmatprep.subr.mxu0 0.0
  %1092 = vmatpush1.msra.mxu0 0.0
  %1093 = vmatprep.subr.mxu0 0.0
  %1094 = vmatpush1.msra.mxu0 0.0
  %1095 = vmatprep.subr.mxu0 0.0
  %1096 = vmatpush1.msra.mxu0 0.0
  %1097 = vmatprep.subr.mxu0 0.0
  %1098 = vmatpush1.msra.mxu0 0.0
  %1099 = vmatprep.subr.mxu0 0.0
  %1100 = vmatpush1.msra.mxu0 0.0
  %1101 = vmatprep.subr.mxu0 0.0
  %1102 = vmatpush1.msra.mxu0 0.0
  %1103 = vmatprep.subr.mxu0 0.0
  %1104 = vmatpush1.msra.mxu0 0.0
  %1105 = vmatprep.subr.mxu0 0.0
  %1106 = vmatpush1.msra.mxu0 0.0
  %1107 = vmatprep.subr.mxu0 0.0
  %1108 = vmatpush1.msra.mxu0 0.0
  %1109 = vmatprep.subr.mxu0 0.0
  %1110 = vmatpush1.msra.mxu0 0.0
  %1111 = vmatprep.subr.mxu0 0.0
  %1112 = vmatpush1.msra.mxu0 0.0
  %1113 = vmatprep.subr.mxu0 0.0
  %1114 = vmatpush1.msra.mxu0 0.0
  %1115 = vmatprep.subr.mxu0 0.0
  %1116 = vmatpush1.msra.mxu0 0.0
  %1117 = vmatprep.subr.mxu0 0.0
  %1118 = vmatpush1.msra.mxu0 0.0
  %1119 = vmatprep.subr.mxu0 0.0
  %1120 = vmatpush1.msra.mxu0 0.0
  %1121 = vmatprep.subr.mxu0 0.0
  %1122 = vmatpush1.msra.mxu0 0.0
  %1123 = vmatprep.subr.mxu0 0.0
  %1124 = vmatpush1.msra.mxu0 0.0
  %1125 = vmatprep.subr.mxu0 0.0
  %1126 = vmatpush1.msra.mxu0 0.0
  %1127 = vmatprep.subr.mxu0 0.0
  %1128 = vmatpush1.msra.mxu0 0.0
  %1129 = vmatprep.subr.mxu0 0.0
  %1130 = vmatpush1.msra.mxu0 0.0
  %1131 = vmatprep.subr.mxu0 0.0
  %1132 = vmatpush1.msra.mxu0 0.0
  %1133 = vmatprep.subr.mxu0 0.0
  %1134 = vmatpush1.msra.mxu0 0.0
  %1135 = vmatprep.mubr.f32.mxu0 0.0
  %1136 = vmatmul.mubr.f32.gmra.mrb[0].mxu0 %v294
  %v1137 = vpop.f32.mrb[0].mxu0
  %v1138 = vadd.f32 %v1069, %v1137
  %v1139 = vpop.f32.mrb[0].mxu0
  %1140 = vmatprep.mubr.f32.mxu0 0.0
  %1141 = vmatmul.mubr.f32.gmra.mrb[0].mxu0 %v297
  %v1142 = vpop.f32.mrb[0].mxu0
  %v1143 = vadd.f32 %v1069, %v1142
  %v1144 = vpop.f32.mrb[0].mxu0
  %1145 = vdwg.mxu0
  %v1147 = vsel %vm558, %v962, 0
  %v1150 = vsel %vm558, %v1050, 0
  %1152 = vmatprep.subr.mxu0 0.0
  %1153 = vmatpush1.xpose.msra.mxu0 %v1150
  %1154 = vmatprep.subr.mxu0 0.0
  %1155 = vmatpush1.xpose.msra.mxu0 0.0
  %1156 = vmatprep.subr.mxu0 0.0
  %1157 = vmatpush1.xpose.msra.mxu0 0.0
  %1158 = vmatprep.subr.mxu0 0.0
  %1159 = vmatpush1.xpose.msra.mxu0 0.0
  %1160 = vmatprep.subr.mxu0 0.0
  %1161 = vmatpush1.xpose.msra.mxu0 0.0
  %1162 = vmatprep.subr.mxu0 0.0
  %1163 = vmatpush1.xpose.msra.mxu0 0.0
  %1164 = vmatprep.subr.mxu0 0.0
  %1165 = vmatpush1.xpose.msra.mxu0 0.0
  %1166 = vmatprep.subr.mxu0 0.0
  %1167 = vmatpush1.xpose.msra.mxu0 0.0
  %1168 = vmatprep.subr.mxu0 0.0
  %1169 = vmatpush1.xpose.msra.mxu0 0.0
  %1170 = vmatprep.subr.mxu0 0.0
  %1171 = vmatpush1.xpose.msra.mxu0 0.0
  %1172 = vmatprep.subr.mxu0 0.0
  %1173 = vmatpush1.xpose.msra.mxu0 0.0
  %1174 = vmatprep.subr.mxu0 0.0
  %1175 = vmatpush1.xpose.msra.mxu0 0.0
  %1176 = vmatprep.subr.mxu0 0.0
  %1177 = vmatpush1.xpose.msra.mxu0 0.0
  %1178 = vmatprep.subr.mxu0 0.0
  %1179 = vmatpush1.xpose.msra.mxu0 0.0
  %1180 = vmatprep.subr.mxu0 0.0
  %1181 = vmatpush1.xpose.msra.mxu0 0.0
  %1182 = vmatprep.subr.mxu0 0.0
  %1183 = vmatpush1.xpose.msra.mxu0 0.0
  %1184 = vmatprep.subr.mxu0 0.0
  %1185 = vmatpush1.xpose.msra.mxu0 0.0
  %1186 = vmatprep.subr.mxu0 0.0
  %1187 = vmatpush1.xpose.msra.mxu0 0.0
  %1188 = vmatprep.subr.mxu0 0.0
  %1189 = vmatpush1.xpose.msra.mxu0 0.0
  %1190 = vmatprep.subr.mxu0 0.0
  %1191 = vmatpush1.xpose.msra.mxu0 0.0
  %1192 = vmatprep.subr.mxu0 0.0
  %1193 = vmatpush1.xpose.msra.mxu0 0.0
  %1194 = vmatprep.subr.mxu0 0.0
  %1195 = vmatpush1.xpose.msra.mxu0 0.0
  %1196 = vmatprep.subr.mxu0 0.0
  %1197 = vmatpush1.xpose.msra.mxu0 0.0
  %1198 = vmatprep.subr.mxu0 0.0
  %1199 = vmatpush1.xpose.msra.mxu0 0.0
  %1200 = vmatprep.subr.mxu0 0.0
  %1201 = vmatpush1.xpose.msra.mxu0 0.0
  %1202 = vmatprep.subr.mxu0 0.0
  %1203 = vmatpush1.xpose.msra.mxu0 0.0
  %1204 = vmatprep.subr.mxu0 0.0
  %1205 = vmatpush1.xpose.msra.mxu0 0.0
  %1206 = vmatprep.subr.mxu0 0.0
  %1207 = vmatpush1.xpose.msra.mxu0 0.0
  %1208 = vmatprep.subr.mxu0 0.0
  %1209 = vmatpush1.xpose.msra.mxu0 0.0
  %1210 = vmatprep.subr.mxu0 0.0
  %1211 = vmatpush1.xpose.msra.mxu0 0.0
  %1212 = vmatprep.subr.mxu0 0.0
  %1213 = vmatpush1.xpose.msra.mxu0 0.0
  %1214 = vmatprep.subr.mxu0 0.0
  %1215 = vmatpush1.xpose.msra.mxu0 0.0
  %1216 = vmatprep.mubr.f32.mxu0 0.0
  %1217 = vmatmul.mubr.f32.gmra.mrb[0].mxu0 %v1147
  %v1218 = vpop.f32.mrb[0].mxu0
  %v1219 = vadd.f32 %v551, %v1218
  %v1220 = vpop.f32.mrb[0].mxu0
  %1221 = vdwg.mxu0
  %v1223 = vsel %vm558, %v967, 0
  %v1226 = vsel %vm558, %v1055, 0
  %1228 = vmatprep.subr.mxu0 0.0
  %1229 = vmatpush1.xpose.msra.mxu0 %v1226
  %1230 = vmatprep.subr.mxu0 0.0
  %1231 = vmatpush1.xpose.msra.mxu0 0.0
  %1232 = vmatprep.subr.mxu0 0.0
  %1233 = vmatpush1.xpose.msra.mxu0 0.0
  %1234 = vmatprep.subr.mxu0 0.0
  %1235 = vmatpush1.xpose.msra.mxu0 0.0
  %1236 = vmatprep.subr.mxu0 0.0
  %1237 = vmatpush1.xpose.msra.mxu0 0.0
  %1238 = vmatprep.subr.mxu0 0.0
  %1239 = vmatpush1.xpose.msra.mxu0 0.0
  %1240 = vmatprep.subr.mxu0 0.0
  %1241 = vmatpush1.xpose.msra.mxu0 0.0
  %1242 = vmatprep.subr.mxu0 0.0
  %1243 = vmatpush1.xpose.msra.mxu0 0.0
  %1244 = vmatprep.subr.mxu0 0.0
  %1245 = vmatpush1.xpose.msra.mxu0 0.0
  %1246 = vmatprep.subr.mxu0 0.0
  %1247 = vmatpush1.xpose.msra.mxu0 0.0
  %1248 = vmatprep.subr.mxu0 0.0
  %1249 = vmatpush1.xpose.msra.mxu0 0.0
  %1250 = vmatprep.subr.mxu0 0.0
  %1251 = vmatpush1.xpose.msra.mxu0 0.0
  %1252 = vmatprep.subr.mxu0 0.0
  %1253 = vmatpush1.xpose.msra.mxu0 0.0
  %1254 = vmatprep.subr.mxu0 0.0
  %1255 = vmatpush1.xpose.msra.mxu0 0.0
  %1256 = vmatprep.subr.mxu0 0.0
  %1257 = vmatpush1.xpose.msra.mxu0 0.0
  %1258 = vmatprep.subr.mxu0 0.0
  %1259 = vmatpush1.xpose.msra.mxu0 0.0
  %1260 = vmatprep.subr.mxu0 0.0
  %1261 = vmatpush1.xpose.msra.mxu0 0.0
  %1262 = vmatprep.subr.mxu0 0.0
  %1263 = vmatpush1.xpose.msra.mxu0 0.0
  %1264 = vmatprep.subr.mxu0 0.0
  %1265 = vmatpush1.xpose.msra.mxu0 0.0
  %1266 = vmatprep.subr.mxu0 0.0
  %1267 = vmatpush1.xpose.msra.mxu0 0.0
  %1268 = vmatprep.subr.mxu0 0.0
  %1269 = vmatpush1.xpose.msra.mxu0 0.0
  %1270 = vmatprep.subr.mxu0 0.0
  %1271 = vmatpush1.xpose.msra.mxu0 0.0
  %1272 = vmatprep.subr.mxu0 0.0
  %1273 = vmatpush1.xpose.msra.mxu0 0.0
  %1274 = vmatprep.subr.mxu0 0.0
  %1275 = vmatpush1.xpose.msra.mxu0 0.0
  %1276 = vmatprep.subr.mxu0 0.0
  %1277 = vmatpush1.xpose.msra.mxu0 0.0
  %1278 = vmatprep.subr.mxu0 0.0
  %1279 = vmatpush1.xpose.msra.mxu0 0.0
  %1280 = vmatprep.subr.mxu0 0.0
  %1281 = vmatpush1.xpose.msra.mxu0 0.0
  %1282 = vmatprep.subr.mxu0 0.0
  %1283 = vmatpush1.xpose.msra.mxu0 0.0
  %1284 = vmatprep.subr.mxu0 0.0
  %1285 = vmatpush1.xpose.msra.mxu0 0.0
  %1286 = vmatprep.subr.mxu0 0.0
  %1287 = vmatpush1.xpose.msra.mxu0 0.0
  %1288 = vmatprep.subr.mxu0 0.0
  %1289 = vmatpush1.xpose.msra.mxu0 0.0
  %1290 = vmatprep.subr.mxu0 0.0
  %1291 = vmatpush1.xpose.msra.mxu0 0.0
  %1292 = vmatprep.mubr.f32.mxu0 0.0
  %1293 = vmatmul.mubr.f32.gmra.mrb[0].mxu0 %v1223
  %v1294 = vpop.f32.mrb[0].mxu0
  %v1295 = vadd.f32 %v555, %v1294
  %v1296 = vpop.f32.mrb[0].mxu0
  %1297 = vdwg.mxu0
  %v1298 = vsel %vm711, %v1219, -inf
  %1299 = vmax.xlane.f32.xlu0 %v1298
  %v1300 = vpop.xlane.xlu0 %1299
  %v1301 = vsel %vm711, %v1295, -inf
  %1302 = vmax.xlane.f32.xlu0 %v1301
  %v1303 = vpop.xlane.xlu0 %1302
  %v1304 = vsub.f32 %v1219, %v1300
  %v1305 = vsub.f32 %v1295, %v1303
  %v1306 = vmul.f32 %v1304, 1.442695
  %v1307 = vpow.pop %v1306
  %v1308 = vmul.f32 %v1305, 1.442695
  %v1309 = vpow.pop %v1308
  %v1310 = vsel %vm711, %v1307, 0.0
  %1311 = vadd.xlane.f32.xlu0 %v1310
  %v1312 = vpop.xlane.xlu0 %1311
  %v1313 = vsel %vm711, %v1309, 0.0
  %1314 = vadd.xlane.f32.xlu0 %v1313
  %v1315 = vpop.xlane.xlu0 %1314
  %v1316 = vrcp.pop %v1312
  %v1317 = vrcp.pop %v1315
  %v1318 = vmul.f32 %v1307, %v1316
  %v1319 = vmul.f32 %v1309, %v1317
  %v1321 = vsel %vm711, %v1318, 0
  %1323 = vmatprep.subr.mxu0 0.0
  %1324 = vmatpush1.msra.mxu0 %v1138
  %1325 = vmatprep.subr.mxu0 0.0
  %1326 = vmatpush1.msra.mxu0 0.0
  %1327 = vmatprep.subr.mxu0 0.0
  %1328 = vmatpush1.msra.mxu0 0.0
  %1329 = vmatprep.subr.mxu0 0.0
  %1330 = vmatpush1.msra.mxu0 0.0
  %1331 = vmatprep.subr.mxu0 0.0
  %1332 = vmatpush1.msra.mxu0 0.0
  %1333 = vmatprep.subr.mxu0 0.0
  %1334 = vmatpush1.msra.mxu0 0.0
  %1335 = vmatprep.subr.mxu0 0.0
  %1336 = vmatpush1.msra.mxu0 0.0
  %1337 = vmatprep.subr.mxu0 0.0
  %1338 = vmatpush1.msra.mxu0 0.0
  %1339 = vmatprep.subr.mxu0 0.0
  %1340 = vmatpush1.msra.mxu0 0.0
  %1341 = vmatprep.subr.mxu0 0.0
  %1342 = vmatpush1.msra.mxu0 0.0
  %1343 = vmatprep.subr.mxu0 0.0
  %1344 = vmatpush1.msra.mxu0 0.0
  %1345 = vmatprep.subr.mxu0 0.0
  %1346 = vmatpush1.msra.mxu0 0.0
  %1347 = vmatprep.subr.mxu0 0.0
  %1348 = vmatpush1.msra.mxu0 0.0
  %1349 = vmatprep.subr.mxu0 0.0
  %1350 = vmatpush1.msra.mxu0 0.0
  %1351 = vmatprep.subr.mxu0 0.0
  %1352 = vmatpush1.msra.mxu0 0.0
  %1353 = vmatprep.subr.mxu0 0.0
  %1354 = vmatpush1.msra.mxu0 0.0
  %1355 = vmatprep.subr.mxu0 0.0
  %1356 = vmatpush1.msra.mxu0 0.0
  %1357 = vmatprep.subr.mxu0 0.0
  %1358 = vmatpush1.msra.mxu0 0.0
  %1359 = vmatprep.subr.mxu0 0.0
  %1360 = vmatpush1.msra.mxu0 0.0
  %1361 = vmatprep.subr.mxu0 0.0
  %1362 = vmatpush1.msra.mxu0 0.0
  %1363 = vmatprep.subr.mxu0 0.0
  %1364 = vmatpush1.msra.mxu0 0.0
  %1365 = vmatprep.subr.mxu0 0.0
  %1366 = vmatpush1.msra.mxu0 0.0
  %1367 = vmatprep.subr.mxu0 0.0
  %1368 = vmatpush1.msra.mxu0 0.0
  %1369 = vmatprep.subr.mxu0 0.0
  %1370 = vmatpush1.msra.mxu0 0.0
  %1371 = vmatprep.subr.mxu0 0.0
  %1372 = vmatpush1.msra.mxu0 0.0
  %1373 = vmatprep.subr.mxu0 0.0
  %1374 = vmatpush1.msra.mxu0 0.0
  %1375 = vmatprep.subr.mxu0 0.0
  %1376 = vmatpush1.msra.mxu0 0.0
  %1377 = vmatprep.subr.mxu0 0.0
  %1378 = vmatpush1.msra.mxu0 0.0
  %1379 = vmatprep.subr.mxu0 0.0
  %1380 = vmatpush1.msra.mxu0 0.0
  %1381 = vmatprep.subr.mxu0 0.0
  %1382 = vmatpush1.msra.mxu0 0.0
  %1383 = vmatprep.subr.mxu0 0.0
  %1384 = vmatpush1.msra.mxu0 0.0
  %1385 = vmatprep.subr.mxu0 0.0
  %1386 = vmatpush1.msra.mxu0 0.0
  %1387 = vmatprep.mubr.f32.mxu0 0.0
  %1388 = vmatmul.mubr.f32.gmra.mrb[0].mxu0 %v1321
  %v1389 = vpop.f32.mrb[0].mxu0
  %v1390 = vadd.f32 0.0, %v1389
  %v1391 = vpop.f32.mrb[0].mxu0
  %1392 = vdwg.mxu0
  %v1394 = vsel %vm711, %v1319, 0
  %1396 = vmatprep.subr.mxu0 0.0
  %1397 = vmatpush1.msra.mxu0 %v1143
  %1398 = vmatprep.subr.mxu0 0.0
  %1399 = vmatpush1.msra.mxu0 0.0
  %1400 = vmatprep.subr.mxu0 0.0
  %1401 = vmatpush1.msra.mxu0 0.0
  %1402 = vmatprep.subr.mxu0 0.0
  %1403 = vmatpush1.msra.mxu0 0.0
  %1404 = vmatprep.subr.mxu0 0.0
  %1405 = vmatpush1.msra.mxu0 0.0
  %1406 = vmatprep.subr.mxu0 0.0
  %1407 = vmatpush1.msra.mxu0 0.0
  %1408 = vmatprep.subr.mxu0 0.0
  %1409 = vmatpush1.msra.mxu0 0.0
  %1410 = vmatprep.subr.mxu0 0.0
  %1411 = vmatpush1.msra.mxu0 0.0
  %1412 = vmatprep.subr.mxu0 0.0
  %1413 = vmatpush1.msra.mxu0 0.0
  %1414 = vmatprep.subr.mxu0 0.0
  %1415 = vmatpush1.msra.mxu0 0.0
  %1416 = vmatprep.subr.mxu0 0.0
  %1417 = vmatpush1.msra.mxu0 0.0
  %1418 = vmatprep.subr.mxu0 0.0
  %1419 = vmatpush1.msra.mxu0 0.0
  %1420 = vmatprep.subr.mxu0 0.0
  %1421 = vmatpush1.msra.mxu0 0.0
  %1422 = vmatprep.subr.mxu0 0.0
  %1423 = vmatpush1.msra.mxu0 0.0
  %1424 = vmatprep.subr.mxu0 0.0
  %1425 = vmatpush1.msra.mxu0 0.0
  %1426 = vmatprep.subr.mxu0 0.0
  %1427 = vmatpush1.msra.mxu0 0.0
  %1428 = vmatprep.subr.mxu0 0.0
  %1429 = vmatpush1.msra.mxu0 0.0
  %1430 = vmatprep.subr.mxu0 0.0
  %1431 = vmatpush1.msra.mxu0 0.0
  %1432 = vmatprep.subr.mxu0 0.0
  %1433 = vmatpush1.msra.mxu0 0.0
  %1434 = vmatprep.subr.mxu0 0.0
  %1435 = vmatpush1.msra.mxu0 0.0
  %1436 = vmatprep.subr.mxu0 0.0
  %1437 = vmatpush1.msra.mxu0 0.0
  %1438 = vmatprep.subr.mxu0 0.0
  %1439 = vmatpush1.msra.mxu0 0.0
  %1440 = vmatprep.subr.mxu0 0.0
  %1441 = vmatpush1.msra.mxu0 0.0
  %1442 = vmatprep.subr.mxu0 0.0
  %1443 = vmatpush1.msra.mxu0 0.0
  %1444 = vmatprep.subr.mxu0 0.0
  %1445 = vmatpush1.msra.mxu0 0.0
  %1446 = vmatprep.subr.mxu0 0.0
  %1447 = vmatpush1.msra.mxu0 0.0
  %1448 = vmatprep.subr.mxu0 0.0
  %1449 = vmatpush1.msra.mxu0 0.0
  %1450 = vmatprep.subr.mxu0 0.0
  %1451 = vmatpush1.msra.mxu0 0.0
  %1452 = vmatprep.subr.mxu0 0.0
  %1453 = vmatpush1.msra.mxu0 0.0
  %1454 = vmatprep.subr.mxu0 0.0
  %1455 = vmatpush1.msra.mxu0 0.0
  %1456 = vmatprep.subr.mxu0 0.0
  %1457 = vmatpush1.msra.mxu0 0.0
  %1458 = vmatprep.subr.mxu0 0.0
  %1459 = vmatpush1.msra.mxu0 0.0
  %1460 = vmatprep.mubr.f32.mxu0 0.0
  %1461 = vmatmul.mubr.f32.gmra.mrb[0].mxu0 %v1394
  %v1462 = vpop.f32.mrb[0].mxu0
  %v1463 = vadd.f32 0.0, %v1462
  %v1464 = vpop.f32.mrb[0].mxu0
  %1465 = vdwg.mxu0
  %s1466 = scalar_lea.vmem %s25, 16
  %v1467 = vld [vmem:[%s1466] sm:$0xff]
  %v1468 = vld [vmem:[%s1466 + $0x8] sm:$0xff]
  %v1470 = vsel %vm558, %v1390, 0
  %v1473 = vsel %vm558, %v1463, 0
  %1475 = vmatprep.subr.mxu0 0.0
  %1476 = vmatpush1.msra.mxu0 %v1467
  %1477 = vmatprep.subr.mxu0 0.0
  %1478 = vmatpush1.msra.mxu0 %v1468
  %1479 = vmatprep.subr.mxu0 0.0
  %1480 = vmatpush1.msra.mxu0 0.0
  %1481 = vmatprep.subr.mxu0 0.0
  %1482 = vmatpush1.msra.mxu0 0.0
  %1483 = vmatprep.subr.mxu0 0.0
  %1484 = vmatpush1.msra.mxu0 0.0
  %1485 = vmatprep.subr.mxu0 0.0
  %1486 = vmatpush1.msra.mxu0 0.0
  %1487 = vmatprep.subr.mxu0 0.0
  %1488 = vmatpush1.msra.mxu0 0.0
  %1489 = vmatprep.subr.mxu0 0.0
  %1490 = vmatpush1.msra.mxu0 0.0
  %1491 = vmatprep.subr.mxu0 0.0
  %1492 = vmatpush1.msra.mxu0 0.0
  %1493 = vmatprep.subr.mxu0 0.0
  %1494 = vmatpush1.msra.mxu0 0.0
  %1495 = vmatprep.subr.mxu0 0.0
  %1496 = vmatpush1.msra.mxu0 0.0
  %1497 = vmatprep.subr.mxu0 0.0
  %1498 = vmatpush1.msra.mxu0 0.0
  %1499 = vmatprep.subr.mxu0 0.0
  %1500 = vmatpush1.msra.mxu0 0.0
  %1501 = vmatprep.subr.mxu0 0.0
  %1502 = vmatpush1.msra.mxu0 0.0
  %1503 = vmatprep.subr.mxu0 0.0
  %1504 = vmatpush1.msra.mxu0 0.0
  %1505 = vmatprep.subr.mxu0 0.0
  %1506 = vmatpush1.msra.mxu0 0.0
  %1507 = vmatprep.subr.mxu0 0.0
  %1508 = vmatpush1.msra.mxu0 0.0
  %1509 = vmatprep.subr.mxu0 0.0
  %1510 = vmatpush1.msra.mxu0 0.0
  %1511 = vmatprep.subr.mxu0 0.0
  %1512 = vmatpush1.msra.mxu0 0.0
  %1513 = vmatprep.subr.mxu0 0.0
  %1514 = vmatpush1.msra.mxu0 0.0
  %1515 = vmatprep.subr.mxu0 0.0
  %1516 = vmatpush1.msra.mxu0 0.0
  %1517 = vmatprep.subr.mxu0 0.0
  %1518 = vmatpush1.msra.mxu0 0.0
  %1519 = vmatprep.subr.mxu0 0.0
  %1520 = vmatpush1.msra.mxu0 0.0
  %1521 = vmatprep.subr.mxu0 0.0
  %1522 = vmatpush1.msra.mxu0 0.0
  %1523 = vmatprep.subr.mxu0 0.0
  %1524 = vmatpush1.msra.mxu0 0.0
  %1525 = vmatprep.subr.mxu0 0.0
  %1526 = vmatpush1.msra.mxu0 0.0
  %1527 = vmatprep.subr.mxu0 0.0
  %1528 = vmatpush1.msra.mxu0 0.0
  %1529 = vmatprep.subr.mxu0 0.0
  %1530 = vmatpush1.msra.mxu0 0.0
  %1531 = vmatprep.subr.mxu0 0.0
  %1532 = vmatpush1.msra.mxu0 0.0
  %1533 = vmatprep.subr.mxu0 0.0
  %1534 = vmatpush1.msra.mxu0 0.0
  %1535 = vmatprep.subr.mxu0 0.0
  %1536 = vmatpush1.msra.mxu0 0.0
  %1537 = vmatprep.subr.mxu0 0.0
  %1538 = vmatpush1.msra.mxu0 0.0
  %1539 = vmatprep.mubr.f32.mxu0 0.0
  %1540 = vmatmul.mubr.f32.gmra.mrb[0].mxu0 %v1470
  %v1541 = vpop.f32.mrb[0].mxu0
  %v1542 = vadd.f32 0.0, %v1541
  %v1543 = vpop.f32.mrb[0].mxu0
  %1544 = vmatprep.mubr.f32.mxu0 0.0
  %1545 = vmatmul.mubr.f32.gmra.mrb[0].mxu0 %v1473
  %v1546 = vpop.f32.mrb[0].mxu0
  %v1547 = vadd.f32 0.0, %v1546
  %v1548 = vpop.f32.mrb[0].mxu0
  %1549 = vdwg.mxu0
  %v1551 = vsel %vm558, %v804, 0
  %v1554 = vsel %vm558, %v877, 0
  %1556 = vmatprep.subr.mxu0 0.0
  %1557 = vmatpush1.msra.mxu0 %v880
  %1558 = vmatprep.subr.mxu0 0.0
  %1559 = vmatpush1.msra.mxu0 %v881
  %1560 = vmatprep.subr.mxu0 0.0
  %1561 = vmatpush1.msra.mxu0 0.0
  %1562 = vmatprep.subr.mxu0 0.0
  %1563 = vmatpush1.msra.mxu0 0.0
  %1564 = vmatprep.subr.mxu0 0.0
  %1565 = vmatpush1.msra.mxu0 0.0
  %1566 = vmatprep.subr.mxu0 0.0
  %1567 = vmatpush1.msra.mxu0 0.0
  %1568 = vmatprep.subr.mxu0 0.0
  %1569 = vmatpush1.msra.mxu0 0.0
  %1570 = vmatprep.subr.mxu0 0.0
  %1571 = vmatpush1.msra.mxu0 0.0
  %1572 = vmatprep.subr.mxu0 0.0
  %1573 = vmatpush1.msra.mxu0 0.0
  %1574 = vmatprep.subr.mxu0 0.0
  %1575 = vmatpush1.msra.mxu0 0.0
  %1576 = vmatprep.subr.mxu0 0.0
  %1577 = vmatpush1.msra.mxu0 0.0
  %1578 = vmatprep.subr.mxu0 0.0
  %1579 = vmatpush1.msra.mxu0 0.0
  %1580 = vmatprep.subr.mxu0 0.0
  %1581 = vmatpush1.msra.mxu0 0.0
  %1582 = vmatprep.subr.mxu0 0.0
  %1583 = vmatpush1.msra.mxu0 0.0
  %1584 = vmatprep.subr.mxu0 0.0
  %1585 = vmatpush1.msra.mxu0 0.0
  %1586 = vmatprep.subr.mxu0 0.0
  %1587 = vmatpush1.msra.mxu0 0.0
  %1588 = vmatprep.subr.mxu0 0.0
  %1589 = vmatpush1.msra.mxu0 0.0
  %1590 = vmatprep.subr.mxu0 0.0
  %1591 = vmatpush1.msra.mxu0 0.0
  %1592 = vmatprep.subr.mxu0 0.0
  %1593 = vmatpush1.msra.mxu0 0.0
  %1594 = vmatprep.subr.mxu0 0.0
  %1595 = vmatpush1.msra.mxu0 0.0
  %1596 = vmatprep.subr.mxu0 0.0
  %1597 = vmatpush1.msra.mxu0 0.0
  %1598 = vmatprep.subr.mxu0 0.0
  %1599 = vmatpush1.msra.mxu0 0.0
  %1600 = vmatprep.subr.mxu0 0.0
  %1601 = vmatpush1.msra.mxu0 0.0
  %1602 = vmatprep.subr.mxu0 0.0
  %1603 = vmatpush1.msra.mxu0 0.0
  %1604 = vmatprep.subr.mxu0 0.0
  %1605 = vmatpush1.msra.mxu0 0.0
  %1606 = vmatprep.subr.mxu0 0.0
  %1607 = vmatpush1.msra.mxu0 0.0
  %1608 = vmatprep.subr.mxu0 0.0
  %1609 = vmatpush1.msra.mxu0 0.0
  %1610 = vmatprep.subr.mxu0 0.0
  %1611 = vmatpush1.msra.mxu0 0.0
  %1612 = vmatprep.subr.mxu0 0.0
  %1613 = vmatpush1.msra.mxu0 0.0
  %1614 = vmatprep.subr.mxu0 0.0
  %1615 = vmatpush1.msra.mxu0 0.0
  %1616 = vmatprep.subr.mxu0 0.0
  %1617 = vmatpush1.msra.mxu0 0.0
  %1618 = vmatprep.subr.mxu0 0.0
  %1619 = vmatpush1.msra.mxu0 0.0
  %1620 = vmatprep.mubr.f32.mxu0 0.0
  %1621 = vmatmul.mubr.f32.gmra.mrb[0].mxu0 %v1551
  %v1622 = vpop.f32.mrb[0].mxu0
  %v1623 = vadd.f32 %v1542, %v1622
  %v1624 = vpop.f32.mrb[0].mxu0
  %1625 = vmatprep.mubr.f32.mxu0 0.0
  %1626 = vmatmul.mubr.f32.gmra.mrb[0].mxu0 %v1554
  %v1627 = vpop.f32.mrb[0].mxu0
  %v1628 = vadd.f32 %v1547, %v1627
  %v1629 = vpop.f32.mrb[0].mxu0
  %1630 = vdwg.mxu0
  %v1631 = vld [vmem:[%s27] sm:$0x1]
  %v1633 = vlaneseq
  %v1634 = vshrl.u32 %v1633, 7
  %v1635 = vsub.s32 0, %v1634
  %v1636 = vrot.slane %v1631, %v1635
  %v1638 = vadd.f32 %v1623, %v1636
  %v1639 = vadd.f32 %v1628, %v1636
  %v1640 = vadd.f32 %v274, %v1638
  %v1641 = vadd.f32 %v275, %v1639
  %v1642 = vld [vmem:[%s29] sm:$0x1]
  %v1643 = vld [vmem:[%s31] sm:$0x1]
  %v1644 = vsel %vm232, %v1640, 0.0
  %1645 = vadd.xlane.f32.xlu0 %v1644
  %v1646 = vpop.xlane.xlu0 %1645
  %v1647 = vsel %vm232, %v1641, 0.0
  %1648 = vadd.xlane.f32.xlu0 %v1647
  %v1649 = vpop.xlane.xlu0 %1648
  %v1650 = vmul.f32 %v1646, %v239
  %v1651 = vmul.f32 %v1649, %v239
  %v1652 = vsub.f32 %v1640, %v1650
  %v1653 = vsub.f32 %v1641, %v1651
  %v1654 = vmul.f32 %v1652, %v1652
  %v1655 = vmul.f32 %v1653, %v1653
  %v1656 = vsel %vm232, %v1654, 0.0
  %1657 = vadd.xlane.f32.xlu0 %v1656
  %v1658 = vpop.xlane.xlu0 %1657
  %v1659 = vsel %vm232, %v1655, 0.0
  %1660 = vadd.xlane.f32.xlu0 %v1659
  %v1661 = vpop.xlane.xlu0 %1660
  %v1662 = vmul.f32 %v1658, %v239
  %v1663 = vmul.f32 %v1661, %v239
  %v1664 = vadd.f32 %v1662, 1e-12
  %v1665 = vadd.f32 %v1663, 1e-12
  %v1666 = vrsqrt.pop %v1664
  %v1667 = vrsqrt.pop %v1665
  %v1668 = vmul.f32 %v1652, %v1666
  %v1669 = vmul.f32 %v1653, %v1667
  %v1671 = vlaneseq
  %v1672 = vshrl.u32 %v1671, 7
  %v1673 = vsub.s32 0, %v1672
  %v1674 = vrot.slane %v1642, %v1673
  %v1676 = vmul.f32 %v1668, %v1674
  %v1677 = vmul.f32 %v1669, %v1674
  %v1679 = vlaneseq
  %v1680 = vshrl.u32 %v1679, 7
  %v1681 = vsub.s32 0, %v1680
  %v1682 = vrot.slane %v1643, %v1681
  %v1684 = vadd.f32 %v1676, %v1682
  %v1685 = vadd.f32 %v1677, %v1682
  %v1686 = vld [vmem:[%s33] sm:$0xff]
  %v1687 = vld [vmem:[%s33 + $0x8] sm:$0xff]
  %v1688 = vld [vmem:[%s33 + $0x10] sm:$0xff]
  %v1689 = vld [vmem:[%s33 + $0x18] sm:$0xff]
  %v1690 = vld [vmem:[%s35] sm:$0x1]
  %v1692 = vlaneseq
  %v1693 = vshrl.u32 %v1692, 7
  %v1694 = vsub.s32 0, %v1693
  %v1695 = vrot.slane %v1690, %v1694
  %v1698 = vsel %vm232, %v1684, 0
  %v1701 = vsel %vm232, %v1685, 0
  %1703 = vmatprep.subr.mxu0 0.0
  %1704 = vmatpush1.msra.mxu0 %v1686
  %1705 = vmatprep.subr.mxu0 0.0
  %1706 = vmatpush1.msra.mxu0 %v1687
  %1707 = vmatprep.subr.mxu0 0.0
  %1708 = vmatpush1.msra.mxu0 %v1688
  %1709 = vmatprep.subr.mxu0 0.0
  %1710 = vmatpush1.msra.mxu0 %v1689
  %1711 = vmatprep.subr.mxu0 0.0
  %1712 = vmatpush1.msra.mxu0 0.0
  %1713 = vmatprep.subr.mxu0 0.0
  %1714 = vmatpush1.msra.mxu0 0.0
  %1715 = vmatprep.subr.mxu0 0.0
  %1716 = vmatpush1.msra.mxu0 0.0
  %1717 = vmatprep.subr.mxu0 0.0
  %1718 = vmatpush1.msra.mxu0 0.0
  %1719 = vmatprep.subr.mxu0 0.0
  %1720 = vmatpush1.msra.mxu0 0.0
  %1721 = vmatprep.subr.mxu0 0.0
  %1722 = vmatpush1.msra.mxu0 0.0
  %1723 = vmatprep.subr.mxu0 0.0
  %1724 = vmatpush1.msra.mxu0 0.0
  %1725 = vmatprep.subr.mxu0 0.0
  %1726 = vmatpush1.msra.mxu0 0.0
  %1727 = vmatprep.subr.mxu0 0.0
  %1728 = vmatpush1.msra.mxu0 0.0
  %1729 = vmatprep.subr.mxu0 0.0
  %1730 = vmatpush1.msra.mxu0 0.0
  %1731 = vmatprep.subr.mxu0 0.0
  %1732 = vmatpush1.msra.mxu0 0.0
  %1733 = vmatprep.subr.mxu0 0.0
  %1734 = vmatpush1.msra.mxu0 0.0
  %1735 = vmatprep.subr.mxu0 0.0
  %1736 = vmatpush1.msra.mxu0 0.0
  %1737 = vmatprep.subr.mxu0 0.0
  %1738 = vmatpush1.msra.mxu0 0.0
  %1739 = vmatprep.subr.mxu0 0.0
  %1740 = vmatpush1.msra.mxu0 0.0
  %1741 = vmatprep.subr.mxu0 0.0
  %1742 = vmatpush1.msra.mxu0 0.0
  %1743 = vmatprep.subr.mxu0 0.0
  %1744 = vmatpush1.msra.mxu0 0.0
  %1745 = vmatprep.subr.mxu0 0.0
  %1746 = vmatpush1.msra.mxu0 0.0
  %1747 = vmatprep.subr.mxu0 0.0
  %1748 = vmatpush1.msra.mxu0 0.0
  %1749 = vmatprep.subr.mxu0 0.0
  %1750 = vmatpush1.msra.mxu0 0.0
  %1751 = vmatprep.subr.mxu0 0.0
  %1752 = vmatpush1.msra.mxu0 0.0
  %1753 = vmatprep.subr.mxu0 0.0
  %1754 = vmatpush1.msra.mxu0 0.0
  %1755 = vmatprep.subr.mxu0 0.0
  %1756 = vmatpush1.msra.mxu0 0.0
  %1757 = vmatprep.subr.mxu0 0.0
  %1758 = vmatpush1.msra.mxu0 0.0
  %1759 = vmatprep.subr.mxu0 0.0
  %1760 = vmatpush1.msra.mxu0 0.0
  %1761 = vmatprep.subr.mxu0 0.0
  %1762 = vmatpush1.msra.mxu0 0.0
  %1763 = vmatprep.subr.mxu0 0.0
  %1764 = vmatpush1.msra.mxu0 0.0
  %1765 = vmatprep.subr.mxu0 0.0
  %1766 = vmatpush1.msra.mxu0 0.0
  %1767 = vmatprep.mubr.f32.mxu0 0.0
  %1768 = vmatmul.mubr.f32.gmra.mrb[0].mxu0 %v1698
  %v1769 = vpop.f32.mrb[0].mxu0
  %v1770 = vadd.f32 %v1695, %v1769
  %v1771 = vpop.f32.mrb[0].mxu0
  %1772 = vmatprep.mubr.f32.mxu0 0.0
  %1773 = vmatmul.mubr.f32.gmra.mrb[0].mxu0 %v1701
  %v1774 = vpop.f32.mrb[0].mxu0
  %v1775 = vadd.f32 %v1695, %v1774
  %v1776 = vpop.f32.mrb[0].mxu0
  %1777 = vdwg.mxu0
  %v1778 = vmul.f32 %v1770, 0.5
  %v1779 = vmul.f32 %v1775, 0.5
  %v1780 = vmul.f32 %v1770, 0.044715
  %v1781 = vmul.f32 %v1775, 0.044715
  %v1782 = vmul.f32 %v1780, %v1770
  %v1783 = vmul.f32 %v1781, %v1775
  %v1784 = vmul.f32 %v1782, %v1770
  %v1785 = vmul.f32 %v1783, %v1775
  %v1786 = vadd.f32 %v1770, %v1784
  %v1787 = vadd.f32 %v1775, %v1785
  %v1788 = vmul.f32 %v1786, 0.7978846
  %v1789 = vmul.f32 %v1787, 0.7978846
  %v1790 = vtanh.pop %v1788
  %v1791 = vtanh.pop %v1789
  %v1792 = vadd.f32 %v1790, 1.0
  %v1793 = vadd.f32 %v1791, 1.0
  %v1794 = vmul.f32 %v1778, %v1792
  %v1795 = vmul.f32 %v1779, %v1793
  %v1796 = vld [vmem:[%s37] sm:$0xff]
  %v1797 = vld [vmem:[%s37 + $0x8] sm:$0xff]
  %v1798 = vld [vmem:[%s37 + $0x10] sm:$0xff]
  %v1799 = vld [vmem:[%s37 + $0x18] sm:$0xff]
  %v1800 = vld [vmem:[%s37 + $0x20] sm:$0xff]
  %v1801 = vld [vmem:[%s37 + $0x28] sm:$0xff]
  %v1802 = vld [vmem:[%s37 + $0x30] sm:$0xff]
  %v1803 = vld [vmem:[%s37 + $0x38] sm:$0xff]
  %v1804 = vld [vmem:[%s39] sm:$0x1]
  %v1806 = vlaneseq
  %v1807 = vshrl.u32 %v1806, 7
  %v1808 = vsub.s32 0, %v1807
  %v1809 = vrot.slane %v1804, %v1808
  %vm1811 = vcmask 523264
  %v1813 = vsel %vm1811, %v1794, 0
  %v1816 = vsel %vm1811, %v1795, 0
  %1818 = vmatprep.subr.mxu0 0.0
  %1819 = vmatpush1.msra.mxu0 %v1796
  %1820 = vmatprep.subr.mxu0 0.0
  %1821 = vmatpush1.msra.mxu0 %v1797
  %1822 = vmatprep.subr.mxu0 0.0
  %1823 = vmatpush1.msra.mxu0 %v1798
  %1824 = vmatprep.subr.mxu0 0.0
  %1825 = vmatpush1.msra.mxu0 %v1799
  %1826 = vmatprep.subr.mxu0 0.0
  %1827 = vmatpush1.msra.mxu0 %v1800
  %1828 = vmatprep.subr.mxu0 0.0
  %1829 = vmatpush1.msra.mxu0 %v1801
  %1830 = vmatprep.subr.mxu0 0.0
  %1831 = vmatpush1.msra.mxu0 %v1802
  %1832 = vmatprep.subr.mxu0 0.0
  %1833 = vmatpush1.msra.mxu0 %v1803
  %1834 = vmatprep.subr.mxu0 0.0
  %1835 = vmatpush1.msra.mxu0 0.0
  %1836 = vmatprep.subr.mxu0 0.0
  %1837 = vmatpush1.msra.mxu0 0.0
  %1838 = vmatprep.subr.mxu0 0.0
  %1839 = vmatpush1.msra.mxu0 0.0
  %1840 = vmatprep.subr.mxu0 0.0
  %1841 = vmatpush1.msra.mxu0 0.0
  %1842 = vmatprep.subr.mxu0 0.0
  %1843 = vmatpush1.msra.mxu0 0.0
  %1844 = vmatprep.subr.mxu0 0.0
  %1845 = vmatpush1.msra.mxu0 0.0
  %1846 = vmatprep.subr.mxu0 0.0
  %1847 = vmatpush1.msra.mxu0 0.0
  %1848 = vmatprep.subr.mxu0 0.0
  %1849 = vmatpush1.msra.mxu0 0.0
  %1850 = vmatprep.subr.mxu0 0.0
  %1851 = vmatpush1.msra.mxu0 0.0
  %1852 = vmatprep.subr.mxu0 0.0
  %1853 = vmatpush1.msra.mxu0 0.0
  %1854 = vmatprep.subr.mxu0 0.0
  %1855 = vmatpush1.msra.mxu0 0.0
  %1856 = vmatprep.subr.mxu0 0.0
  %1857 = vmatpush1.msra.mxu0 0.0
  %1858 = vmatprep.subr.mxu0 0.0
  %1859 = vmatpush1.msra.mxu0 0.0
  %1860 = vmatprep.subr.mxu0 0.0
  %1861 = vmatpush1.msra.mxu0 0.0
  %1862 = vmatprep.subr.mxu0 0.0
  %1863 = vmatpush1.msra.mxu0 0.0
  %1864 = vmatprep.subr.mxu0 0.0
  %1865 = vmatpush1.msra.mxu0 0.0
  %1866 = vmatprep.subr.mxu0 0.0
  %1867 = vmatpush1.msra.mxu0 0.0
  %1868 = vmatprep.subr.mxu0 0.0
  %1869 = vmatpush1.msra.mxu0 0.0
  %1870 = vmatprep.subr.mxu0 0.0
  %1871 = vmatpush1.msra.mxu0 0.0
  %1872 = vmatprep.subr.mxu0 0.0
  %1873 = vmatpush1.msra.mxu0 0.0
  %1874 = vmatprep.subr.mxu0 0.0
  %1875 = vmatpush1.msra.mxu0 0.0
  %1876 = vmatprep.subr.mxu0 0.0
  %1877 = vmatpush1.msra.mxu0 0.0
  %1878 = vmatprep.subr.mxu0 0.0
  %1879 = vmatpush1.msra.mxu0 0.0
  %1880 = vmatprep.subr.mxu0 0.0
  %1881 = vmatpush1.msra.mxu0 0.0
  %1882 = vmatprep.mubr.f32.mxu0 0.0
  %1883 = vmatmul.mubr.f32.gmra.mrb[0].mxu0 %v1813
  %v1884 = vpop.f32.mrb[0].mxu0
  %v1885 = vadd.f32 %v1809, %v1884
  %v1886 = vpop.f32.mrb[0].mxu0
  %1887 = vmatprep.mubr.f32.mxu0 0.0
  %1888 = vmatmul.mubr.f32.gmra.mrb[0].mxu0 %v1816
  %v1889 = vpop.f32.mrb[0].mxu0
  %v1890 = vadd.f32 %v1809, %v1889
  %v1891 = vpop.f32.mrb[0].mxu0
  %1892 = vdwg.mxu0
  %v1893 = vadd.f32 %v1684, %v1885
  %v1894 = vadd.f32 %v1685, %v1890
  %v1895 = vld [vmem:[%s41] sm:$0x1]
  %v1896 = vld [vmem:[%s43] sm:$0x1]
  %v1897 = vsel %vm232, %v1893, 0.0
  %1898 = vadd.xlane.f32.xlu0 %v1897
  %v1899 = vpop.xlane.xlu0 %1898
  %v1900 = vsel %vm232, %v1894, 0.0
  %1901 = vadd.xlane.f32.xlu0 %v1900
  %v1902 = vpop.xlane.xlu0 %1901
  %v1903 = vmul.f32 %v1899, %v239
  %v1904 = vmul.f32 %v1902, %v239
  %v1905 = vsub.f32 %v1893, %v1903
  %v1906 = vsub.f32 %v1894, %v1904
  %v1907 = vmul.f32 %v1905, %v1905
  %v1908 = vmul.f32 %v1906, %v1906
  %v1909 = vsel %vm232, %v1907, 0.0
  %1910 = vadd.xlane.f32.xlu0 %v1909
  %v1911 = vpop.xlane.xlu0 %1910
  %v1912 = vsel %vm232, %v1908, 0.0
  %1913 = vadd.xlane.f32.xlu0 %v1912
  %v1914 = vpop.xlane.xlu0 %1913
  %v1915 = vmul.f32 %v1911, %v239
  %v1916 = vmul.f32 %v1914, %v239
  %v1917 = vadd.f32 %v1915, 1e-12
  %v1918 = vadd.f32 %v1916, 1e-12
  %v1919 = vrsqrt.pop %v1917
  %v1920 = vrsqrt.pop %v1918
  %v1921 = vmul.f32 %v1905, %v1919
  %v1922 = vmul.f32 %v1906, %v1920
  %v1924 = vlaneseq
  %v1925 = vshrl.u32 %v1924, 7
  %v1926 = vsub.s32 0, %v1925
  %v1927 = vrot.slane %v1895, %v1926
  %v1929 = vmul.f32 %v1921, %v1927
  %v1930 = vmul.f32 %v1922, %v1927
  %v1932 = vlaneseq
  %v1933 = vshrl.u32 %v1932, 7
  %v1934 = vsub.s32 0, %v1933
  %v1935 = vrot.slane %v1896, %v1934
  %v1937 = vadd.f32 %v1929, %v1935
  %v1938 = vadd.f32 %v1930, %v1935
  %s1939 = scalar_lea.vmem %s13, 64
  %v1940 = vld [vmem:[%s1939] sm:$0xff]
  %v1941 = vld [vmem:[%s1939 + $0x8] sm:$0xff]
  %v1942 = vld [vmem:[%s1939 + $0x10] sm:$0xff]
  %v1943 = vld [vmem:[%s1939 + $0x18] sm:$0xff]
  %s1944 = scalar_lea.vmem %s15, 2
  %v1945 = vld [vmem:[%s1944] sm:$0x1]
  %v1947 = vlaneseq
  %v1948 = vshrl.u32 %v1947, 7
  %v1949 = vsub.s32 0, %v1948
  %v1950 = vrot.slane %v1945, %v1949
  %v1953 = vsel %vm232, %v1937, 0
  %v1956 = vsel %vm232, %v1938, 0
  %1958 = vmatprep.subr.mxu0 0.0
  %1959 = vmatpush1.msra.mxu0 %v1940
  %1960 = vmatprep.subr.mxu0 0.0
  %1961 = vmatpush1.msra.mxu0 %v1941
  %1962 = vmatprep.subr.mxu0 0.0
  %1963 = vmatpush1.msra.mxu0 %v1942
  %1964 = vmatprep.subr.mxu0 0.0
  %1965 = vmatpush1.msra.mxu0 %v1943
  %1966 = vmatprep.subr.mxu0 0.0
  %1967 = vmatpush1.msra.mxu0 0.0
  %1968 = vmatprep.subr.mxu0 0.0
  %1969 = vmatpush1.msra.mxu0 0.0
  %1970 = vmatprep.subr.mxu0 0.0
  %1971 = vmatpush1.msra.mxu0 0.0
  %1972 = vmatprep.subr.mxu0 0.0
  %1973 = vmatpush1.msra.mxu0 0.0
  %1974 = vmatprep.subr.mxu0 0.0
  %1975 = vmatpush1.msra.mxu0 0.0
  %1976 = vmatprep.subr.mxu0 0.0
  %1977 = vmatpush1.msra.mxu0 0.0
  %1978 = vmatprep.subr.mxu0 0.0
  %1979 = vmatpush1.msra.mxu0 0.0
  %1980 = vmatprep.subr.mxu0 0.0
  %1981 = vmatpush1.msra.mxu0 0.0
  %1982 = vmatprep.subr.mxu0 0.0
  %1983 = vmatpush1.msra.mxu0 0.0
  %1984 = vmatprep.subr.mxu0 0.0
  %1985 = vmatpush1.msra.mxu0 0.0
  %1986 = vmatprep.subr.mxu0 0.0
  %1987 = vmatpush1.msra.mxu0 0.0
  %1988 = vmatprep.subr.mxu0 0.0
  %1989 = vmatpush1.msra.mxu0 0.0
  %1990 = vmatprep.subr.mxu0 0.0
  %1991 = vmatpush1.msra.mxu0 0.0
  %1992 = vmatprep.subr.mxu0 0.0
  %1993 = vmatpush1.msra.mxu0 0.0
  %1994 = vmatprep.subr.mxu0 0.0
  %1995 = vmatpush1.msra.mxu0 0.0
  %1996 = vmatprep.subr.mxu0 0.0
  %1997 = vmatpush1.msra.mxu0 0.0
  %1998 = vmatprep.subr.mxu0 0.0
  %1999 = vmatpush1.msra.mxu0 0.0
  %2000 = vmatprep.subr.mxu0 0.0
  %2001 = vmatpush1.msra.mxu0 0.0
  %2002 = vmatprep.subr.mxu0 0.0
  %2003 = vmatpush1.msra.mxu0 0.0
  %2004 = vmatprep.subr.mxu0 0.0
  %2005 = vmatpush1.msra.mxu0 0.0
  %2006 = vmatprep.subr.mxu0 0.0
  %2007 = vmatpush1.msra.mxu0 0.0
  %2008 = vmatprep.subr.mxu0 0.0
  %2009 = vmatpush1.msra.mxu0 0.0
  %2010 = vmatprep.subr.mxu0 0.0
  %2011 = vmatpush1.msra.mxu0 0.0
  %2012 = vmatprep.subr.mxu0 0.0
  %2013 = vmatpush1.msra.mxu0 0.0
  %2014 = vmatprep.subr.mxu0 0.0
  %2015 = vmatpush1.msra.mxu0 0.0
  %2016 = vmatprep.subr.mxu0 0.0
  %2017 = vmatpush1.msra.mxu0 0.0
  %2018 = vmatprep.subr.mxu0 0.0
  %2019 = vmatpush1.msra.mxu0 0.0
  %2020 = vmatprep.subr.mxu0 0.0
  %2021 = vmatpush1.msra.mxu0 0.0
  %2022 = vmatprep.mubr.f32.mxu0 0.0
  %2023 = vmatmul.mubr.f32.gmra.mrb[0].mxu0 %v1953
  %v2024 = vpop.f32.mrb[0].mxu0
  %v2025 = vadd.f32 %v1950, %v2024
  %v2026 = vpop.f32.mrb[0].mxu0
  %2027 = vmatprep.mubr.f32.mxu0 0.0
  %2028 = vmatmul.mubr.f32.gmra.mrb[0].mxu0 %v1956
  %v2029 = vpop.f32.mrb[0].mxu0
  %v2030 = vadd.f32 %v1950, %v2029
  %v2031 = vpop.f32.mrb[0].mxu0
  %2032 = vdwg.mxu0
  %s2033 = scalar_lea.vmem %s17, 64
  %v2034 = vld [vmem:[%s2033] sm:$0xff]
  %v2035 = vld [vmem:[%s2033 + $0x8] sm:$0xff]
  %v2036 = vld [vmem:[%s2033 + $0x10] sm:$0xff]
  %v2037 = vld [vmem:[%s2033 + $0x18] sm:$0xff]
  %s2038 = scalar_lea.vmem %s19, 2
  %v2039 = vld [vmem:[%s2038] sm:$0x1]
  %v2041 = vlaneseq
  %v2042 = vshrl.u32 %v2041, 7
  %v2043 = vsub.s32 0, %v2042
  %v2044 = vrot.slane %v2039, %v2043
  %2046 = vmatprep.subr.mxu0 0.0
  %2047 = vmatpush1.msra.mxu0 %v2034
  %2048 = vmatprep.subr.mxu0 0.0
  %2049 = vmatpush1.msra.mxu0 %v2035
  %2050 = vmatprep.subr.mxu0 0.0
  %2051 = vmatpush1.msra.mxu0 %v2036
  %2052 = vmatprep.subr.mxu0 0.0
  %2053 = vmatpush1.msra.mxu0 %v2037
  %2054 = vmatprep.subr.mxu0 0.0
  %2055 = vmatpush1.msra.mxu0 0.0
  %2056 = vmatprep.subr.mxu0 0.0
  %2057 = vmatpush1.msra.mxu0 0.0
  %2058 = vmatprep.subr.mxu0 0.0
  %2059 = vmatpush1.msra.mxu0 0.0
  %2060 = vmatprep.subr.mxu0 0.0
  %2061 = vmatpush1.msra.mxu0 0.0
  %2062 = vmatprep.subr.mxu0 0.0
  %2063 = vmatpush1.msra.mxu0 0.0
  %2064 = vmatprep.subr.mxu0 0.0
  %2065 = vmatpush1.msra.mxu0 0.0
  %2066 = vmatprep.subr.mxu0 0.0
  %2067 = vmatpush1.msra.mxu0 0.0
  %2068 = vmatprep.subr.mxu0 0.0
  %2069 = vmatpush1.msra.mxu0 0.0
  %2070 = vmatprep.subr.mxu0 0.0
  %2071 = vmatpush1.msra.mxu0 0.0
  %2072 = vmatprep.subr.mxu0 0.0
  %2073 = vmatpush1.msra.mxu0 0.0
  %2074 = vmatprep.subr.mxu0 0.0
  %2075 = vmatpush1.msra.mxu0 0.0
  %2076 = vmatprep.subr.mxu0 0.0
  %2077 = vmatpush1.msra.mxu0 0.0
  %2078 = vmatprep.subr.mxu0 0.0
  %2079 = vmatpush1.msra.mxu0 0.0
  %2080 = vmatprep.subr.mxu0 0.0
  %2081 = vmatpush1.msra.mxu0 0.0
  %2082 = vmatprep.subr.mxu0 0.0
  %2083 = vmatpush1.msra.mxu0 0.0
  %2084 = vmatprep.subr.mxu0 0.0
  %2085 = vmatpush1.msra.mxu0 0.0
  %2086 = vmatprep.subr.mxu0 0.0
  %2087 = vmatpush1.msra.mxu0 0.0
  %2088 = vmatprep.subr.mxu0 0.0
  %2089 = vmatpush1.msra.mxu0 0.0
  %2090 = vmatprep.subr.mxu0 0.0
  %2091 = vmatpush1.msra.mxu0 0.0
  %2092 = vmatprep.subr.mxu0 0.0
  %2093 = vmatpush1.msra.mxu0 0.0
  %2094 = vmatprep.subr.mxu0 0.0
  %2095 = vmatpush1.msra.mxu0 0.0
  %2096 = vmatprep.subr.mxu0 0.0
  %2097 = vmatpush1.msra.mxu0 0.0
  %2098 = vmatprep.subr.mxu0 0.0
  %2099 = vmatpush1.msra.mxu0 0.0
  %2100 = vmatprep.subr.mxu0 0.0
  %2101 = vmatpush1.msra.mxu0 0.0
  %2102 = vmatprep.subr.mxu0 0.0
  %2103 = vmatpush1.msra.mxu0 0.0
  %2104 = vmatprep.subr.mxu0 0.0
  %2105 = vmatpush1.msra.mxu0 0.0
  %2106 = vmatprep.subr.mxu0 0.0
  %2107 = vmatpush1.msra.mxu0 0.0
  %2108 = vmatprep.subr.mxu0 0.0
  %2109 = vmatpush1.msra.mxu0 0.0
  %2110 = vmatprep.mubr.f32.mxu0 0.0
  %2111 = vmatmul.mubr.f32.gmra.mrb[0].mxu0 %v1953
  %v2112 = vpop.f32.mrb[0].mxu0
  %v2113 = vadd.f32 %v2044, %v2112
  %v2114 = vpop.f32.mrb[0].mxu0
  %2115 = vmatprep.mubr.f32.mxu0 0.0
  %2116 = vmatmul.mubr.f32.gmra.mrb[0].mxu0 %v1956
  %v2117 = vpop.f32.mrb[0].mxu0
  %v2118 = vadd.f32 %v2044, %v2117
  %v2119 = vpop.f32.mrb[0].mxu0
  %2120 = vdwg.mxu0
  %s2121 = scalar_lea.vmem %s21, 64
  %v2122 = vld [vmem:[%s2121] sm:$0xff]
  %v2123 = vld [vmem:[%s2121 + $0x8] sm:$0xff]
  %v2124 = vld [vmem:[%s2121 + $0x10] sm:$0xff]
  %v2125 = vld [vmem:[%s2121 + $0x18] sm:$0xff]
  %s2126 = scalar_lea.vmem %s23, 2
  %v2127 = vld [vmem:[%s2126] sm:$0x1]
  %v2129 = vlaneseq
  %v2130 = vshrl.u32 %v2129, 7
  %v2131 = vsub.s32 0, %v2130
  %v2132 = vrot.slane %v2127, %v2131
  %2134 = vmatprep.subr.mxu0 0.0
  %2135 = vmatpush1.msra.mxu0 %v2122
  %2136 = vmatprep.subr.mxu0 0.0
  %2137 = vmatpush1.msra.mxu0 %v2123
  %2138 = vmatprep.subr.mxu0 0.0
  %2139 = vmatpush1.msra.mxu0 %v2124
  %2140 = vmatprep.subr.mxu0 0.0
  %2141 = vmatpush1.msra.mxu0 %v2125
  %2142 = vmatprep.subr.mxu0 0.0
  %2143 = vmatpush1.msra.mxu0 0.0
  %2144 = vmatprep.subr.mxu0 0.0
  %2145 = vmatpush1.msra.mxu0 0.0
  %2146 = vmatprep.subr.mxu0 0.0
  %2147 = vmatpush1.msra.mxu0 0.0
  %2148 = vmatprep.subr.mxu0 0.0
  %2149 = vmatpush1.msra.mxu0 0.0
  %2150 = vmatprep.subr.mxu0 0.0
  %2151 = vmatpush1.msra.mxu0 0.0
  %2152 = vmatprep.subr.mxu0 0.0
  %2153 = vmatpush1.msra.mxu0 0.0
  %2154 = vmatprep.subr.mxu0 0.0
  %2155 = vmatpush1.msra.mxu0 0.0
  %2156 = vmatprep.subr.mxu0 0.0
  %2157 = vmatpush1.msra.mxu0 0.0
  %2158 = vmatprep.subr.mxu0 0.0
  %2159 = vmatpush1.msra.mxu0 0.0
  %2160 = vmatprep.subr.mxu0 0.0
  %2161 = vmatpush1.msra.mxu0 0.0
  %2162 = vmatprep.subr.mxu0 0.0
  %2163 = vmatpush1.msra.mxu0 0.0
  %2164 = vmatprep.subr.mxu0 0.0
  %2165 = vmatpush1.msra.mxu0 0.0
  %2166 = vmatprep.subr.mxu0 0.0
  %2167 = vmatpush1.msra.mxu0 0.0
  %2168 = vmatprep.subr.mxu0 0.0
  %2169 = vmatpush1.msra.mxu0 0.0
  %2170 = vmatprep.subr.mxu0 0.0
  %2171 = vmatpush1.msra.mxu0 0.0
  %2172 = vmatprep.subr.mxu0 0.0
  %2173 = vmatpush1.msra.mxu0 0.0
  %2174 = vmatprep.subr.mxu0 0.0
  %2175 = vmatpush1.msra.mxu0 0.0
  %2176 = vmatprep.subr.mxu0 0.0
  %2177 = vmatpush1.msra.mxu0 0.0
  %2178 = vmatprep.subr.mxu0 0.0
  %2179 = vmatpush1.msra.mxu0 0.0
  %2180 = vmatprep.subr.mxu0 0.0
  %2181 = vmatpush1.msra.mxu0 0.0
  %2182 = vmatprep.subr.mxu0 0.0
  %2183 = vmatpush1.msra.mxu0 0.0
  %2184 = vmatprep.subr.mxu0 0.0
  %2185 = vmatpush1.msra.mxu0 0.0
  %2186 = vmatprep.subr.mxu0 0.0
  %2187 = vmatpush1.msra.mxu0 0.0
  %2188 = vmatprep.subr.mxu0 0.0
  %2189 = vmatpush1.msra.mxu0 0.0
  %2190 = vmatprep.subr.mxu0 0.0
  %2191 = vmatpush1.msra.mxu0 0.0
  %2192 = vmatprep.subr.mxu0 0.0
  %2193 = vmatpush1.msra.mxu0 0.0
  %2194 = vmatprep.subr.mxu0 0.0
  %2195 = vmatpush1.msra.mxu0 0.0
  %2196 = vmatprep.subr.mxu0 0.0
  %2197 = vmatpush1.msra.mxu0 0.0
  %2198 = vmatprep.mubr.f32.mxu0 0.0
  %2199 = vmatmul.mubr.f32.gmra.mrb[0].mxu0 %v1953
  %v2200 = vpop.f32.mrb[0].mxu0
  %v2201 = vadd.f32 %v2132, %v2200
  %v2202 = vpop.f32.mrb[0].mxu0
  %2203 = vmatprep.mubr.f32.mxu0 0.0
  %2204 = vmatmul.mubr.f32.gmra.mrb[0].mxu0 %v1956
  %v2205 = vpop.f32.mrb[0].mxu0
  %v2206 = vadd.f32 %v2132, %v2205
  %v2207 = vpop.f32.mrb[0].mxu0
  %2208 = vdwg.mxu0
  %v2210 = vsel %vm558, %v2025, 0
  %v2213 = vsel %vm558, %v2113, 0
  %2215 = vmatprep.subr.mxu0 0.0
  %2216 = vmatpush1.xpose.msra.mxu0 %v2213
  %2217 = vmatprep.subr.mxu0 0.0
  %2218 = vmatpush1.xpose.msra.mxu0 0.0
  %2219 = vmatprep.subr.mxu0 0.0
  %2220 = vmatpush1.xpose.msra.mxu0 0.0
  %2221 = vmatprep.subr.mxu0 0.0
  %2222 = vmatpush1.xpose.msra.mxu0 0.0
  %2223 = vmatprep.subr.mxu0 0.0
  %2224 = vmatpush1.xpose.msra.mxu0 0.0
  %2225 = vmatprep.subr.mxu0 0.0
  %2226 = vmatpush1.xpose.msra.mxu0 0.0
  %2227 = vmatprep.subr.mxu0 0.0
  %2228 = vmatpush1.xpose.msra.mxu0 0.0
  %2229 = vmatprep.subr.mxu0 0.0
  %2230 = vmatpush1.xpose.msra.mxu0 0.0
  %2231 = vmatprep.subr.mxu0 0.0
  %2232 = vmatpush1.xpose.msra.mxu0 0.0
  %2233 = vmatprep.subr.mxu0 0.0
  %2234 = vmatpush1.xpose.msra.mxu0 0.0
  %2235 = vmatprep.subr.mxu0 0.0
  %2236 = vmatpush1.xpose.msra.mxu0 0.0
  %2237 = vmatprep.subr.mxu0 0.0
  %2238 = vmatpush1.xpose.msra.mxu0 0.0
  %2239 = vmatprep.subr.mxu0 0.0
  %2240 = vmatpush1.xpose.msra.mxu0 0.0
  %2241 = vmatprep.subr.mxu0 0.0
  %2242 = vmatpush1.xpose.msra.mxu0 0.0
  %2243 = vmatprep.subr.mxu0 0.0
  %2244 = vmatpush1.xpose.msra.mxu0 0.0
  %2245 = vmatprep.subr.mxu0 0.0
  %2246 = vmatpush1.xpose.msra.mxu0 0.0
  %2247 = vmatprep.subr.mxu0 0.0
  %2248 = vmatpush1.xpose.msra.mxu0 0.0
  %2249 = vmatprep.subr.mxu0 0.0
  %2250 = vmatpush1.xpose.msra.mxu0 0.0
  %2251 = vmatprep.subr.mxu0 0.0
  %2252 = vmatpush1.xpose.msra.mxu0 0.0
  %2253 = vmatprep.subr.mxu0 0.0
  %2254 = vmatpush1.xpose.msra.mxu0 0.0
  %2255 = vmatprep.subr.mxu0 0.0
  %2256 = vmatpush1.xpose.msra.mxu0 0.0
  %2257 = vmatprep.subr.mxu0 0.0
  %2258 = vmatpush1.xpose.msra.mxu0 0.0
  %2259 = vmatprep.subr.mxu0 0.0
  %2260 = vmatpush1.xpose.msra.mxu0 0.0
  %2261 = vmatprep.subr.mxu0 0.0
  %2262 = vmatpush1.xpose.msra.mxu0 0.0
  %2263 = vmatprep.subr.mxu0 0.0
  %2264 = vmatpush1.xpose.msra.mxu0 0.0
  %2265 = vmatprep.subr.mxu0 0.0
  %2266 = vmatpush1.xpose.msra.mxu0 0.0
  %2267 = vmatprep.subr.mxu0 0.0
  %2268 = vmatpush1.xpose.msra.mxu0 0.0
  %2269 = vmatprep.subr.mxu0 0.0
  %2270 = vmatpush1.xpose.msra.mxu0 0.0
  %2271 = vmatprep.subr.mxu0 0.0
  %2272 = vmatpush1.xpose.msra.mxu0 0.0
  %2273 = vmatprep.subr.mxu0 0.0
  %2274 = vmatpush1.xpose.msra.mxu0 0.0
  %2275 = vmatprep.subr.mxu0 0.0
  %2276 = vmatpush1.xpose.msra.mxu0 0.0
  %2277 = vmatprep.subr.mxu0 0.0
  %2278 = vmatpush1.xpose.msra.mxu0 0.0
  %2279 = vmatprep.mubr.f32.mxu0 0.0
  %2280 = vmatmul.mubr.f32.gmra.mrb[0].mxu0 %v2210
  %v2281 = vpop.f32.mrb[0].mxu0
  %v2282 = vadd.f32 %v551, %v2281
  %v2283 = vpop.f32.mrb[0].mxu0
  %2284 = vdwg.mxu0
  %v2286 = vsel %vm558, %v2030, 0
  %v2289 = vsel %vm558, %v2118, 0
  %2291 = vmatprep.subr.mxu0 0.0
  %2292 = vmatpush1.xpose.msra.mxu0 %v2289
  %2293 = vmatprep.subr.mxu0 0.0
  %2294 = vmatpush1.xpose.msra.mxu0 0.0
  %2295 = vmatprep.subr.mxu0 0.0
  %2296 = vmatpush1.xpose.msra.mxu0 0.0
  %2297 = vmatprep.subr.mxu0 0.0
  %2298 = vmatpush1.xpose.msra.mxu0 0.0
  %2299 = vmatprep.subr.mxu0 0.0
  %2300 = vmatpush1.xpose.msra.mxu0 0.0
  %2301 = vmatprep.subr.mxu0 0.0
  %2302 = vmatpush1.xpose.msra.mxu0 0.0
  %2303 = vmatprep.subr.mxu0 0.0
  %2304 = vmatpush1.xpose.msra.mxu0 0.0
  %2305 = vmatprep.subr.mxu0 0.0
  %2306 = vmatpush1.xpose.msra.mxu0 0.0
  %2307 = vmatprep.subr.mxu0 0.0
  %2308 = vmatpush1.xpose.msra.mxu0 0.0
  %2309 = vmatprep.subr.mxu0 0.0
  %2310 = vmatpush1.xpose.msra.mxu0 0.0
  %2311 = vmatprep.subr.mxu0 0.0
  %2312 = vmatpush1.xpose.msra.mxu0 0.0
  %2313 = vmatprep.subr.mxu0 0.0
  %2314 = vmatpush1.xpose.msra.mxu0 0.0
  %2315 = vmatprep.subr.mxu0 0.0
  %2316 = vmatpush1.xpose.msra.mxu0 0.0
  %2317 = vmatprep.subr.mxu0 0.0
  %2318 = vmatpush1.xpose.msra.mxu0 0.0
  %2319 = vmatprep.subr.mxu0 0.0
  %2320 = vmatpush1.xpose.msra.mxu0 0.0
  %2321 = vmatprep.subr.mxu0 0.0
  %2322 = vmatpush1.xpose.msra.mxu0 0.0
  %2323 = vmatprep.subr.mxu0 0.0
  %2324 = vmatpush1.xpose.msra.mxu0 0.0
  %2325 = vmatprep.subr.mxu0 0.0
  %2326 = vmatpush1.xpose.msra.mxu0 0.0
  %2327 = vmatprep.subr.mxu0 0.0
  %2328 = vmatpush1.xpose.msra.mxu0 0.0
  %2329 = vmatprep.subr.mxu0 0.0
  %2330 = vmatpush1.xpose.msra.mxu0 0.0
  %2331 = vmatprep.subr.mxu0 0.0
  %2332 = vmatpush1.xpose.msra.mxu0 0.0
  %2333 = vmatprep.subr.mxu0 0.0
  %2334 = vmatpush1.xpose.msra.mxu0 0.0
  %2335 = vmatprep.subr.mxu0 0.0
  %2336 = vmatpush1.xpose.msra.mxu0 0.0
  %2337 = vmatprep.subr.mxu0 0.0
  %2338 = vmatpush1.xpose.msra.mxu0 0.0
  %2339 = vmatprep.subr.mxu0 0.0
  %2340 = vmatpush1.xpose.msra.mxu0 0.0
  %2341 = vmatprep.subr.mxu0 0.0
  %2342 = vmatpush1.xpose.msra.mxu0 0.0
  %2343 = vmatprep.subr.mxu0 0.0
  %2344 = vmatpush1.xpose.msra.mxu0 0.0
  %2345 = vmatprep.subr.mxu0 0.0
  %2346 = vmatpush1.xpose.msra.mxu0 0.0
  %2347 = vmatprep.subr.mxu0 0.0
  %2348 = vmatpush1.xpose.msra.mxu0 0.0
  %2349 = vmatprep.subr.mxu0 0.0
  %2350 = vmatpush1.xpose.msra.mxu0 0.0
  %2351 = vmatprep.subr.mxu0 0.0
  %2352 = vmatpush1.xpose.msra.mxu0 0.0
  %2353 = vmatprep.subr.mxu0 0.0
  %2354 = vmatpush1.xpose.msra.mxu0 0.0
  %2355 = vmatprep.mubr.f32.mxu0 0.0
  %2356 = vmatmul.mubr.f32.gmra.mrb[0].mxu0 %v2286
  %v2357 = vpop.f32.mrb[0].mxu0
  %v2358 = vadd.f32 %v555, %v2357
  %v2359 = vpop.f32.mrb[0].mxu0
  %2360 = vdwg.mxu0
  %v2361 = vsel %vm711, %v2282, -inf
  %2362 = vmax.xlane.f32.xlu0 %v2361
  %v2363 = vpop.xlane.xlu0 %2362
  %v2364 = vsel %vm711, %v2358, -inf
  %2365 = vmax.xlane.f32.xlu0 %v2364
  %v2366 = vpop.xlane.xlu0 %2365
  %v2367 = vsub.f32 %v2282, %v2363
  %v2368 = vsub.f32 %v2358, %v2366
  %v2369 = vmul.f32 %v2367, 1.442695
  %v2370 = vpow.pop %v2369
  %v2371 = vmul.f32 %v2368, 1.442695
  %v2372 = vpow.pop %v2371
  %v2373 = vsel %vm711, %v2370, 0.0
  %2374 = vadd.xlane.f32.xlu0 %v2373
  %v2375 = vpop.xlane.xlu0 %2374
  %v2376 = vsel %vm711, %v2372, 0.0
  %2377 = vadd.xlane.f32.xlu0 %v2376
  %v2378 = vpop.xlane.xlu0 %2377
  %v2379 = vrcp.pop %v2375
  %v2380 = vrcp.pop %v2378
  %v2381 = vmul.f32 %v2370, %v2379
  %v2382 = vmul.f32 %v2372, %v2380
  %v2384 = vsel %vm711, %v2381, 0
  %2386 = vmatprep.subr.mxu0 0.0
  %2387 = vmatpush1.msra.mxu0 %v2201
  %2388 = vmatprep.subr.mxu0 0.0
  %2389 = vmatpush1.msra.mxu0 0.0
  %2390 = vmatprep.subr.mxu0 0.0
  %2391 = vmatpush1.msra.mxu0 0.0
  %2392 = vmatprep.subr.mxu0 0.0
  %2393 = vmatpush1.msra.mxu0 0.0
  %2394 = vmatprep.subr.mxu0 0.0
  %2395 = vmatpush1.msra.mxu0 0.0
  %2396 = vmatprep.subr.mxu0 0.0
  %2397 = vmatpush1.msra.mxu0 0.0
  %2398 = vmatprep.subr.mxu0 0.0
  %2399 = vmatpush1.msra.mxu0 0.0
  %2400 = vmatprep.subr.mxu0 0.0
  %2401 = vmatpush1.msra.mxu0 0.0
  %2402 = vmatprep.subr.mxu0 0.0
  %2403 = vmatpush1.msra.mxu0 0.0
  %2404 = vmatprep.subr.mxu0 0.0
  %2405 = vmatpush1.msra.mxu0 0.0
  %2406 = vmatprep.subr.mxu0 0.0
  %2407 = vmatpush1.msra.mxu0 0.0
  %2408 = vmatprep.subr.mxu0 0.0
  %2409 = vmatpush1.msra.mxu0 0.0
  %2410 = vmatprep.subr.mxu0 0.0
  %2411 = vmatpush1.msra.mxu0 0.0
  %2412 = vmatprep.subr.mxu0 0.0
  %2413 = vmatpush1.msra.mxu0 0.0
  %2414 = vmatprep.subr.mxu0 0.0
  %2415 = vmatpush1.msra.mxu0 0.0
  %2416 = vmatprep.subr.mxu0 0.0
  %2417 = vmatpush1.msra.mxu0 0.0
  %2418 = vmatprep.subr.mxu0 0.0
  %2419 = vmatpush1.msra.mxu0 0.0
  %2420 = vmatprep.subr.mxu0 0.0
  %2421 = vmatpush1.msra.mxu0 0.0
  %2422 = vmatprep.subr.mxu0 0.0
  %2423 = vmatpush1.msra.mxu0 0.0
  %2424 = vmatprep.subr.mxu0 0.0
  %2425 = vmatpush1.msra.mxu0 0.0
  %2426 = vmatprep.subr.mxu0 0.0
  %2427 = vmatpush1.msra.mxu0 0.0
  %2428 = vmatprep.subr.mxu0 0.0
  %2429 = vmatpush1.msra.mxu0 0.0
  %2430 = vmatprep.subr.mxu0 0.0
  %2431 = vmatpush1.msra.mxu0 0.0
  %2432 = vmatprep.subr.mxu0 0.0
  %2433 = vmatpush1.msra.mxu0 0.0
  %2434 = vmatprep.subr.mxu0 0.0
  %2435 = vmatpush1.msra.mxu0 0.0
  %2436 = vmatprep.subr.mxu0 0.0
  %2437 = vmatpush1.msra.mxu0 0.0
  %2438 = vmatprep.subr.mxu0 0.0
  %2439 = vmatpush1.msra.mxu0 0.0
  %2440 = vmatprep.subr.mxu0 0.0
  %2441 = vmatpush1.msra.mxu0 0.0
  %2442 = vmatprep.subr.mxu0 0.0
  %2443 = vmatpush1.msra.mxu0 0.0
  %2444 = vmatprep.subr.mxu0 0.0
  %2445 = vmatpush1.msra.mxu0 0.0
  %2446 = vmatprep.subr.mxu0 0.0
  %2447 = vmatpush1.msra.mxu0 0.0
  %2448 = vmatprep.subr.mxu0 0.0
  %2449 = vmatpush1.msra.mxu0 0.0
  %2450 = vmatprep.mubr.f32.mxu0 0.0
  %2451 = vmatmul.mubr.f32.gmra.mrb[0].mxu0 %v2384
  %v2452 = vpop.f32.mrb[0].mxu0
  %v2453 = vadd.f32 0.0, %v2452
  %v2454 = vpop.f32.mrb[0].mxu0
  %2455 = vdwg.mxu0
  %v2457 = vsel %vm711, %v2382, 0
  %2459 = vmatprep.subr.mxu0 0.0
  %2460 = vmatpush1.msra.mxu0 %v2206
  %2461 = vmatprep.subr.mxu0 0.0
  %2462 = vmatpush1.msra.mxu0 0.0
  %2463 = vmatprep.subr.mxu0 0.0
  %2464 = vmatpush1.msra.mxu0 0.0
  %2465 = vmatprep.subr.mxu0 0.0
  %2466 = vmatpush1.msra.mxu0 0.0
  %2467 = vmatprep.subr.mxu0 0.0
  %2468 = vmatpush1.msra.mxu0 0.0
  %2469 = vmatprep.subr.mxu0 0.0
  %2470 = vmatpush1.msra.mxu0 0.0
  %2471 = vmatprep.subr.mxu0 0.0
  %2472 = vmatpush1.msra.mxu0 0.0
  %2473 = vmatprep.subr.mxu0 0.0
  %2474 = vmatpush1.msra.mxu0 0.0
  %2475 = vmatprep.subr.mxu0 0.0
  %2476 = vmatpush1.msra.mxu0 0.0
  %2477 = vmatprep.subr.mxu0 0.0
  %2478 = vmatpush1.msra.mxu0 0.0
  %2479 = vmatprep.subr.mxu0 0.0
  %2480 = vmatpush1.msra.mxu0 0.0
  %2481 = vmatprep.subr.mxu0 0.0
  %2482 = vmatpush1.msra.mxu0 0.0
  %2483 = vmatprep.subr.mxu0 0.0
  %2484 = vmatpush1.msra.mxu0 0.0
  %2485 = vmatprep.subr.mxu0 0.0
  %2486 = vmatpush1.msra.mxu0 0.0
  %2487 = vmatprep.subr.mxu0 0.0
  %2488 = vmatpush1.msra.mxu0 0.0
  %2489 = vmatprep.subr.mxu0 0.0
  %2490 = vmatpush1.msra.mxu0 0.0
  %2491 = vmatprep.subr.mxu0 0.0
  %2492 = vmatpush1.msra.mxu0 0.0
  %2493 = vmatprep.subr.mxu0 0.0
  %2494 = vmatpush1.msra.mxu0 0.0
  %2495 = vmatprep.subr.mxu0 0.0
  %2496 = vmatpush1.msra.mxu0 0.0
  %2497 = vmatprep.subr.mxu0 0.0
  %2498 = vmatpush1.msra.mxu0 0.0
  %2499 = vmatprep.subr.mxu0 0.0
  %2500 = vmatpush1.msra.mxu0 0.0
  %2501 = vmatprep.subr.mxu0 0.0
  %2502 = vmatpush1.msra.mxu0 0.0
  %2503 = vmatprep.subr.mxu0 0.0
  %2504 = vmatpush1.msra.mxu0 0.0
  %2505 = vmatprep.subr.mxu0 0.0
  %2506 = vmatpush1.msra.mxu0 0.0
  %2507 = vmatprep.subr.mxu0 0.0
  %2508 = vmatpush1.msra.mxu0 0.0
  %2509 = vmatprep.subr.mxu0 0.0
  %2510 = vmatpush1.msra.mxu0 0.0
  %2511 = vmatprep.subr.mxu0 0.0
  %2512 = vmatpush1.msra.mxu0 0.0
  %2513 = vmatprep.subr.mxu0 0.0
  %2514 = vmatpush1.msra.mxu0 0.0
  %2515 = vmatprep.subr.mxu0 0.0
  %2516 = vmatpush1.msra.mxu0 0.0
  %2517 = vmatprep.subr.mxu0 0.0
  %2518 = vmatpush1.msra.mxu0 0.0
  %2519 = vmatprep.subr.mxu0 0.0
  %2520 = vmatpush1.msra.mxu0 0.0
  %2521 = vmatprep.subr.mxu0 0.0
  %2522 = vmatpush1.msra.mxu0 0.0
  %2523 = vmatprep.mubr.f32.mxu0 0.0
  %2524 = vmatmul.mubr.f32.gmra.mrb[0].mxu0 %v2457
  %v2525 = vpop.f32.mrb[0].mxu0
  %v2526 = vadd.f32 0.0, %v2525
  %v2527 = vpop.f32.mrb[0].mxu0
  %2528 = vdwg.mxu0
  %s2529 = scalar_lea.vmem %s25, 32
  %v2530 = vld [vmem:[%s2529] sm:$0xff]
  %v2531 = vld [vmem:[%s2529 + $0x8] sm:$0xff]
  %s2532 = scalar_lea.vmem %s13, 96
  %v2533 = vld [vmem:[%s2532] sm:$0xff]
  %v2534 = vld [vmem:[%s2532 + $0x8] sm:$0xff]
  %v2535 = vld [vmem:[%s2532 + $0x10] sm:$0xff]
  %v2536 = vld [vmem:[%s2532 + $0x18] sm:$0xff]
  %s2537 = scalar_lea.vmem %s15, 3
  %v2538 = vld [vmem:[%s2537] sm:$0x1]
  %v2540 = vlaneseq
  %v2541 = vshrl.u32 %v2540, 7
  %v2542 = vsub.s32 0, %v2541
  %v2543 = vrot.slane %v2538, %v2542
  %2545 = vmatprep.subr.mxu0 0.0
  %2546 = vmatpush1.msra.mxu0 %v2533
  %2547 = vmatprep.subr.mxu0 0.0
  %2548 = vmatpush1.msra.mxu0 %v2534
  %2549 = vmatprep.subr.mxu0 0.0
  %2550 = vmatpush1.msra.mxu0 %v2535
  %2551 = vmatprep.subr.mxu0 0.0
  %2552 = vmatpush1.msra.mxu0 %v2536
  %2553 = vmatprep.subr.mxu0 0.0
  %2554 = vmatpush1.msra.mxu0 0.0
  %2555 = vmatprep.subr.mxu0 0.0
  %2556 = vmatpush1.msra.mxu0 0.0
  %2557 = vmatprep.subr.mxu0 0.0
  %2558 = vmatpush1.msra.mxu0 0.0
  %2559 = vmatprep.subr.mxu0 0.0
  %2560 = vmatpush1.msra.mxu0 0.0
  %2561 = vmatprep.subr.mxu0 0.0
  %2562 = vmatpush1.msra.mxu0 0.0
  %2563 = vmatprep.subr.mxu0 0.0
  %2564 = vmatpush1.msra.mxu0 0.0
  %2565 = vmatprep.subr.mxu0 0.0
  %2566 = vmatpush1.msra.mxu0 0.0
  %2567 = vmatprep.subr.mxu0 0.0
  %2568 = vmatpush1.msra.mxu0 0.0
  %2569 = vmatprep.subr.mxu0 0.0
  %2570 = vmatpush1.msra.mxu0 0.0
  %2571 = vmatprep.subr.mxu0 0.0
  %2572 = vmatpush1.msra.mxu0 0.0
  %2573 = vmatprep.subr.mxu0 0.0
  %2574 = vmatpush1.msra.mxu0 0.0
  %2575 = vmatprep.subr.mxu0 0.0
  %2576 = vmatpush1.msra.mxu0 0.0
  %2577 = vmatprep.subr.mxu0 0.0
  %2578 = vmatpush1.msra.mxu0 0.0
  %2579 = vmatprep.subr.mxu0 0.0
  %2580 = vmatpush1.msra.mxu0 0.0
  %2581 = vmatprep.subr.mxu0 0.0
  %2582 = vmatpush1.msra.mxu0 0.0
  %2583 = vmatprep.subr.mxu0 0.0
  %2584 = vmatpush1.msra.mxu0 0.0
  %2585 = vmatprep.subr.mxu0 0.0
  %2586 = vmatpush1.msra.mxu0 0.0
  %2587 = vmatprep.subr.mxu0 0.0
  %2588 = vmatpush1.msra.mxu0 0.0
  %2589 = vmatprep.subr.mxu0 0.0
  %2590 = vmatpush1.msra.mxu0 0.0
  %2591 = vmatprep.subr.mxu0 0.0
  %2592 = vmatpush1.msra.mxu0 0.0
  %2593 = vmatprep.subr.mxu0 0.0
  %2594 = vmatpush1.msra.mxu0 0.0
  %2595 = vmatprep.subr.mxu0 0.0
  %2596 = vmatpush1.msra.mxu0 0.0
  %2597 = vmatprep.subr.mxu0 0.0
  %2598 = vmatpush1.msra.mxu0 0.0
  %2599 = vmatprep.subr.mxu0 0.0
  %2600 = vmatpush1.msra.mxu0 0.0
  %2601 = vmatprep.subr.mxu0 0.0
  %2602 = vmatpush1.msra.mxu0 0.0
  %2603 = vmatprep.subr.mxu0 0.0
  %2604 = vmatpush1.msra.mxu0 0.0
  %2605 = vmatprep.subr.mxu0 0.0
  %2606 = vmatpush1.msra.mxu0 0.0
  %2607 = vmatprep.subr.mxu0 0.0
  %2608 = vmatpush1.msra.mxu0 0.0
  %2609 = vmatprep.mubr.f32.mxu0 0.0
  %2610 = vmatmul.mubr.f32.gmra.mrb[0].mxu0 %v1953
  %v2611 = vpop.f32.mrb[0].mxu0
  %v2612 = vadd.f32 %v2543, %v2611
  %v2613 = vpop.f32.mrb[0].mxu0
  %2614 = vmatprep.mubr.f32.mxu0 0.0
  %2615 = vmatmul.mubr.f32.gmra.mrb[0].mxu0 %v1956
  %v2616 = vpop.f32.mrb[0].mxu0
  %v2617 = vadd.f32 %v2543, %v2616
  %v2618 = vpop.f32.mrb[0].mxu0
  %2619 = vdwg.mxu0
  %s2620 = scalar_lea.vmem %s17, 96
  %v2621 = vld [vmem:[%s2620] sm:$0xff]
  %v2622 = vld [vmem:[%s2620 + $0x8] sm:$0xff]
  %v2623 = vld [vmem:[%s2620 + $0x10] sm:$0xff]
  %v2624 = vld [vmem:[%s2620 + $0x18] sm:$0xff]
  %s2625 = scalar_lea.vmem %s19, 3
  %v2626 = vld [vmem:[%s2625] sm:$0x1]
  %v2628 = vlaneseq
  %v2629 = vshrl.u32 %v2628, 7
  %v2630 = vsub.s32 0, %v2629
  %v2631 = vrot.slane %v2626, %v2630
  %2633 = vmatprep.subr.mxu0 0.0
  %2634 = vmatpush1.msra.mxu0 %v2621
  %2635 = vmatprep.subr.mxu0 0.0
  %2636 = vmatpush1.msra.mxu0 %v2622
  %2637 = vmatprep.subr.mxu0 0.0
  %2638 = vmatpush1.msra.mxu0 %v2623
  %2639 = vmatprep.subr.mxu0 0.0
  %2640 = vmatpush1.msra.mxu0 %v2624
  %2641 = vmatprep.subr.mxu0 0.0
  %2642 = vmatpush1.msra.mxu0 0.0
  %2643 = vmatprep.subr.mxu0 0.0
  %2644 = vmatpush1.msra.mxu0 0.0
  %2645 = vmatprep.subr.mxu0 0.0
  %2646 = vmatpush1.msra.mxu0 0.0
  %2647 = vmatprep.subr.mxu0 0.0
  %2648 = vmatpush1.msra.mxu0 0.0
  %2649 = vmatprep.subr.mxu0 0.0
  %2650 = vmatpush1.msra.mxu0 0.0
  %2651 = vmatprep.subr.mxu0 0.0
  %2652 = vmatpush1.msra.mxu0 0.0
  %2653 = vmatprep.subr.mxu0 0.0
  %2654 = vmatpush1.msra.mxu0 0.0
  %2655 = vmatprep.subr.mxu0 0.0
  %2656 = vmatpush1.msra.mxu0 0.0
  %2657 = vmatprep.subr.mxu0 0.0
  %2658 = vmatpush1.msra.mxu0 0.0
  %2659 = vmatprep.subr.mxu0 0.0
  %2660 = vmatpush1.msra.mxu0 0.0
  %2661 = vmatprep.subr.mxu0 0.0
  %2662 = vmatpush1.msra.mxu0 0.0
  %2663 = vmatprep.subr.mxu0 0.0
  %2664 = vmatpush1.msra.mxu0 0.0
  %2665 = vmatprep.subr.mxu0 0.0
  %2666 = vmatpush1.msra.mxu0 0.0
  %2667 = vmatprep.subr.mxu0 0.0
  %2668 = vmatpush1.msra.mxu0 0.0
  %2669 = vmatprep.subr.mxu0 0.0
  %2670 = vmatpush1.msra.mxu0 0.0
  %2671 = vmatprep.subr.mxu0 0.0
  %2672 = vmatpush1.msra.mxu0 0.0
  %2673 = vmatprep.subr.mxu0 0.0
  %2674 = vmatpush1.msra.mxu0 0.0
  %2675 = vmatprep.subr.mxu0 0.0
  %2676 = vmatpush1.msra.mxu0 0.0
  %2677 = vmatprep.subr.mxu0 0.0
  %2678 = vmatpush1.msra.mxu0 0.0
  %2679 = vmatprep.subr.mxu0 0.0
  %2680 = vmatpush1.msra.mxu0 0.0
  %2681 = vmatprep.subr.mxu0 0.0
  %2682 = vmatpush1.msra.mxu0 0.0
  %2683 = vmatprep.subr.mxu0 0.0
  %2684 = vmatpush1.msra.mxu0 0.0
  %2685 = vmatprep.subr.mxu0 0.0
  %2686 = vmatpush1.msra.mxu0 0.0
  %2687 = vmatprep.subr.mxu0 0.0
  %2688 = vmatpush1.msra.mxu0 0.0
  %2689 = vmatprep.subr.mxu0 0.0
  %2690 = vmatpush1.msra.mxu0 0.0
  %2691 = vmatprep.subr.mxu0 0.0
  %2692 = vmatpush1.msra.mxu0 0.0
  %2693 = vmatprep.subr.mxu0 0.0
  %2694 = vmatpush1.msra.mxu0 0.0
  %2695 = vmatprep.subr.mxu0 0.0
  %2696 = vmatpush1.msra.mxu0 0.0
  %2697 = vmatprep.mubr.f32.mxu0 0.0
  %2698 = vmatmul.mubr.f32.gmra.mrb[0].mxu0 %v1953
  %v2699 = vpop.f32.mrb[0].mxu0
  %v2700 = vadd.f32 %v2631, %v2699
  %v2701 = vpop.f32.mrb[0].mxu0
  %2702 = vmatprep.mubr.f32.mxu0 0.0
  %2703 = vmatmul.mubr.f32.gmra.mrb[0].mxu0 %v1956
  %v2704 = vpop.f32.mrb[0].mxu0
  %v2705 = vadd.f32 %v2631, %v2704
  %v2706 = vpop.f32.mrb[0].mxu0
  %2707 = vdwg.mxu0
  %s2708 = scalar_lea.vmem %s21, 96
  %v2709 = vld [vmem:[%s2708] sm:$0xff]
  %v2710 = vld [vmem:[%s2708 + $0x8] sm:$0xff]
  %v2711 = vld [vmem:[%s2708 + $0x10] sm:$0xff]
  %v2712 = vld [vmem:[%s2708 + $0x18] sm:$0xff]
  %s2713 = scalar_lea.vmem %s23, 3
  %v2714 = vld [vmem:[%s2713] sm:$0x1]
  %v2716 = vlaneseq
  %v2717 = vshrl.u32 %v2716, 7
  %v2718 = vsub.s32 0, %v2717
  %v2719 = vrot.slane %v2714, %v2718
  %2721 = vmatprep.subr.mxu0 0.0
  %2722 = vmatpush1.msra.mxu0 %v2709
  %2723 = vmatprep.subr.mxu0 0.0
  %2724 = vmatpush1.msra.mxu0 %v2710
  %2725 = vmatprep.subr.mxu0 0.0
  %2726 = vmatpush1.msra.mxu0 %v2711
  %2727 = vmatprep.subr.mxu0 0.0
  %2728 = vmatpush1.msra.mxu0 %v2712
  %2729 = vmatprep.subr.mxu0 0.0
  %2730 = vmatpush1.msra.mxu0 0.0
  %2731 = vmatprep.subr.mxu0 0.0
  %2732 = vmatpush1.msra.mxu0 0.0
  %2733 = vmatprep.subr.mxu0 0.0
  %2734 = vmatpush1.msra.mxu0 0.0
  %2735 = vmatprep.subr.mxu0 0.0
  %2736 = vmatpush1.msra.mxu0 0.0
  %2737 = vmatprep.subr.mxu0 0.0
  %2738 = vmatpush1.msra.mxu0 0.0
  %2739 = vmatprep.subr.mxu0 0.0
  %2740 = vmatpush1.msra.mxu0 0.0
  %2741 = vmatprep.subr.mxu0 0.0
  %2742 = vmatpush1.msra.mxu0 0.0
  %2743 = vmatprep.subr.mxu0 0.0
  %2744 = vmatpush1.msra.mxu0 0.0
  %2745 = vmatprep.subr.mxu0 0.0
  %2746 = vmatpush1.msra.mxu0 0.0
  %2747 = vmatprep.subr.mxu0 0.0
  %2748 = vmatpush1.msra.mxu0 0.0
  %2749 = vmatprep.subr.mxu0 0.0
  %2750 = vmatpush1.msra.mxu0 0.0
  %2751 = vmatprep.subr.mxu0 0.0
  %2752 = vmatpush1.msra.mxu0 0.0
  %2753 = vmatprep.subr.mxu0 0.0
  %2754 = vmatpush1.msra.mxu0 0.0
  %2755 = vmatprep.subr.mxu0 0.0
  %2756 = vmatpush1.msra.mxu0 0.0
  %2757 = vmatprep.subr.mxu0 0.0
  %2758 = vmatpush1.msra.mxu0 0.0
  %2759 = vmatprep.subr.mxu0 0.0
  %2760 = vmatpush1.msra.mxu0 0.0
  %2761 = vmatprep.subr.mxu0 0.0
  %2762 = vmatpush1.msra.mxu0 0.0
  %2763 = vmatprep.subr.mxu0 0.0
  %2764 = vmatpush1.msra.mxu0 0.0
  %2765 = vmatprep.subr.mxu0 0.0
  %2766 = vmatpush1.msra.mxu0 0.0
  %2767 = vmatprep.subr.mxu0 0.0
  %2768 = vmatpush1.msra.mxu0 0.0
  %2769 = vmatprep.subr.mxu0 0.0
  %2770 = vmatpush1.msra.mxu0 0.0
  %2771 = vmatprep.subr.mxu0 0.0
  %2772 = vmatpush1.msra.mxu0 0.0
  %2773 = vmatprep.subr.mxu0 0.0
  %2774 = vmatpush1.msra.mxu0 0.0
  %2775 = vmatprep.subr.mxu0 0.0
  %2776 = vmatpush1.msra.mxu0 0.0
  %2777 = vmatprep.subr.mxu0 0.0
  %2778 = vmatpush1.msra.mxu0 0.0
  %2779 = vmatprep.subr.mxu0 0.0
  %2780 = vmatpush1.msra.mxu0 0.0
  %2781 = vmatprep.subr.mxu0 0.0
  %2782 = vmatpush1.msra.mxu0 0.0
  %2783 = vmatprep.subr.mxu0 0.0
  %2784 = vmatpush1.msra.mxu0 0.0
  %2785 = vmatprep.mubr.f32.mxu0 0.0
  %2786 = vmatmul.mubr.f32.gmra.mrb[0].mxu0 %v1953
  %v2787 = vpop.f32.mrb[0].mxu0
  %v2788 = vadd.f32 %v2719, %v2787
  %v2789 = vpop.f32.mrb[0].mxu0
  %2790 = vmatprep.mubr.f32.mxu0 0.0
  %2791 = vmatmul.mubr.f32.gmra.mrb[0].mxu0 %v1956
  %v2792 = vpop.f32.mrb[0].mxu0
  %v2793 = vadd.f32 %v2719, %v2792
  %v2794 = vpop.f32.mrb[0].mxu0
  %2795 = vdwg.mxu0
  %v2797 = vsel %vm558, %v2612, 0
  %v2800 = vsel %vm558, %v2700, 0
  %2802 = vmatprep.subr.mxu0 0.0
  %2803 = vmatpush1.xpose.msra.mxu0 %v2800
  %2804 = vmatprep.subr.mxu0 0.0
  %2805 = vmatpush1.xpose.msra.mxu0 0.0
  %2806 = vmatprep.subr.mxu0 0.0
  %2807 = vmatpush1.xpose.msra.mxu0 0.0
  %2808 = vmatprep.subr.mxu0 0.0
  %2809 = vmatpush1.xpose.msra.mxu0 0.0
  %2810 = vmatprep.subr.mxu0 0.0
  %2811 = vmatpush1.xpose.msra.mxu0 0.0
  %2812 = vmatprep.subr.mxu0 0.0
  %2813 = vmatpush1.xpose.msra.mxu0 0.0
  %2814 = vmatprep.subr.mxu0 0.0
  %2815 = vmatpush1.xpose.msra.mxu0 0.0
  %2816 = vmatprep.subr.mxu0 0.0
  %2817 = vmatpush1.xpose.msra.mxu0 0.0
  %2818 = vmatprep.subr.mxu0 0.0
  %2819 = vmatpush1.xpose.msra.mxu0 0.0
  %2820 = vmatprep.subr.mxu0 0.0
  %2821 = vmatpush1.xpose.msra.mxu0 0.0
  %2822 = vmatprep.subr.mxu0 0.0
  %2823 = vmatpush1.xpose.msra.mxu0 0.0
  %2824 = vmatprep.subr.mxu0 0.0
  %2825 = vmatpush1.xpose.msra.mxu0 0.0
  %2826 = vmatprep.subr.mxu0 0.0
  %2827 = vmatpush1.xpose.msra.mxu0 0.0
  %2828 = vmatprep.subr.mxu0 0.0
  %2829 = vmatpush1.xpose.msra.mxu0 0.0
  %2830 = vmatprep.subr.mxu0 0.0
  %2831 = vmatpush1.xpose.msra.mxu0 0.0
  %2832 = vmatprep.subr.mxu0 0.0
  %2833 = vmatpush1.xpose.msra.mxu0 0.0
  %2834 = vmatprep.subr.mxu0 0.0
  %2835 = vmatpush1.xpose.msra.mxu0 0.0
  %2836 = vmatprep.subr.mxu0 0.0
  %2837 = vmatpush1.xpose.msra.mxu0 0.0
  %2838 = vmatprep.subr.mxu0 0.0
  %2839 = vmatpush1.xpose.msra.mxu0 0.0
  %2840 = vmatprep.subr.mxu0 0.0
  %2841 = vmatpush1.xpose.msra.mxu0 0.0
  %2842 = vmatprep.subr.mxu0 0.0
  %2843 = vmatpush1.xpose.msra.mxu0 0.0
  %2844 = vmatprep.subr.mxu0 0.0
  %2845 = vmatpush1.xpose.msra.mxu0 0.0
  %2846 = vmatprep.subr.mxu0 0.0
  %2847 = vmatpush1.xpose.msra.mxu0 0.0
  %2848 = vmatprep.subr.mxu0 0.0
  %2849 = vmatpush1.xpose.msra.mxu0 0.0
  %2850 = vmatprep.subr.mxu0 0.0
  %2851 = vmatpush1.xpose.msra.mxu0 0.0
  %2852 = vmatprep.subr.mxu0 0.0
  %2853 = vmatpush1.xpose.msra.mxu0 0.0
  %2854 = vmatprep.subr.mxu0 0.0
  %2855 = vmatpush1.xpose.msra.mxu0 0.0
  %2856 = vmatprep.subr.mxu0 0.0
  %2857 = vmatpush1.xpose.msra.mxu0 0.0
  %2858 = vmatprep.subr.mxu0 0.0
  %2859 = vmatpush1.xpose.msra.mxu0 0.0
  %2860 = vmatprep.subr.mxu0 0.0
  %2861 = vmatpush1.xpose.msra.mxu0 0.0
  %2862 = vmatprep.subr.mxu0 0.0
  %2863 = vmatpush1.xpose.msra.mxu0 0.0
  %2864 = vmatprep.subr.mxu0 0.0
  %2865 = vmatpush1.xpose.msra.mxu0 0.0
  %2866 = vmatprep.mubr.f32.mxu0 0.0
  %2867 = vmatmul.mubr.f32.gmra.mrb[0].mxu0 %v2797
  %v2868 = vpop.f32.mrb[0].mxu0
  %v2869 = vadd.f32 %v551, %v2868
  %v2870 = vpop.f32.mrb[0].mxu0
  %2871 = vdwg.mxu0
  %v2873 = vsel %vm558, %v2617, 0
  %v2876 = vsel %vm558, %v2705, 0
  %2878 = vmatprep.subr.mxu0 0.0
  %2879 = vmatpush1.xpose.msra.mxu0 %v2876
  %2880 = vmatprep.subr.mxu0 0.0
  %2881 = vmatpush1.xpose.msra.mxu0 0.0
  %2882 = vmatprep.subr.mxu0 0.0
  %2883 = vmatpush1.xpose.msra.mxu0 0.0
  %2884 = vmatprep.subr.mxu0 0.0
  %2885 = vmatpush1.xpose.msra.mxu0 0.0
  %2886 = vmatprep.subr.mxu0 0.0
  %2887 = vmatpush1.xpose.msra.mxu0 0.0
  %2888 = vmatprep.subr.mxu0 0.0
  %2889 = vmatpush1.xpose.msra.mxu0 0.0
  %2890 = vmatprep.subr.mxu0 0.0
  %2891 = vmatpush1.xpose.msra.mxu0 0.0
  %2892 = vmatprep.subr.mxu0 0.0
  %2893 = vmatpush1.xpose.msra.mxu0 0.0
  %2894 = vmatprep.subr.mxu0 0.0
  %2895 = vmatpush1.xpose.msra.mxu0 0.0
  %2896 = vmatprep.subr.mxu0 0.0
  %2897 = vmatpush1.xpose.msra.mxu0 0.0
  %2898 = vmatprep.subr.mxu0 0.0
  %2899 = vmatpush1.xpose.msra.mxu0 0.0
  %2900 = vmatprep.subr.mxu0 0.0
  %2901 = vmatpush1.xpose.msra.mxu0 0.0
  %2902 = vmatprep.subr.mxu0 0.0
  %2903 = vmatpush1.xpose.msra.mxu0 0.0
  %2904 = vmatprep.subr.mxu0 0.0
  %2905 = vmatpush1.xpose.msra.mxu0 0.0
  %2906 = vmatprep.subr.mxu0 0.0
  %2907 = vmatpush1.xpose.msra.mxu0 0.0
  %2908 = vmatprep.subr.mxu0 0.0
  %2909 = vmatpush1.xpose.msra.mxu0 0.0
  %2910 = vmatprep.subr.mxu0 0.0
  %2911 = vmatpush1.xpose.msra.mxu0 0.0
  %2912 = vmatprep.subr.mxu0 0.0
  %2913 = vmatpush1.xpose.msra.mxu0 0.0
  %2914 = vmatprep.subr.mxu0 0.0
  %2915 = vmatpush1.xpose.msra.mxu0 0.0
  %2916 = vmatprep.subr.mxu0 0.0
  %2917 = vmatpush1.xpose.msra.mxu0 0.0
  %2918 = vmatprep.subr.mxu0 0.0
  %2919 = vmatpush1.xpose.msra.mxu0 0.0
  %2920 = vmatprep.subr.mxu0 0.0
  %2921 = vmatpush1.xpose.msra.mxu0 0.0
  %2922 = vmatprep.subr.mxu0 0.0
  %2923 = vmatpush1.xpose.msra.mxu0 0.0
  %2924 = vmatprep.subr.mxu0 0.0
  %2925 = vmatpush1.xpose.msra.mxu0 0.0
  %2926 = vmatprep.subr.mxu0 0.0
  %2927 = vmatpush1.xpose.msra.mxu0 0.0
  %2928 = vmatprep.subr.mxu0 0.0
  %2929 = vmatpush1.xpose.msra.mxu0 0.0
  %2930 = vmatprep.subr.mxu0 0.0
  %2931 = vmatpush1.xpose.msra.mxu0 0.0
  %2932 = vmatprep.subr.mxu0 0.0
  %2933 = vmatpush1.xpose.msra.mxu0 0.0
  %2934 = vmatprep.subr.mxu0 0.0
  %2935 = vmatpush1.xpose.msra.mxu0 0.0
  %2936 = vmatprep.subr.mxu0 0.0
  %2937 = vmatpush1.xpose.msra.mxu0 0.0
  %2938 = vmatprep.subr.mxu0 0.0
  %2939 = vmatpush1.xpose.msra.mxu0 0.0
  %2940 = vmatprep.subr.mxu0 0.0
  %2941 = vmatpush1.xpose.msra.mxu0 0.0
  %2942 = vmatprep.mubr.f32.mxu0 0.0
  %2943 = vmatmul.mubr.f32.gmra.mrb[0].mxu0 %v2873
  %v2944 = vpop.f32.mrb[0].mxu0
  %v2945 = vadd.f32 %v555, %v2944
  %v2946 = vpop.f32.mrb[0].mxu0
  %2947 = vdwg.mxu0
  %v2948 = vsel %vm711, %v2869, -inf
  %2949 = vmax.xlane.f32.xlu0 %v2948
  %v2950 = vpop.xlane.xlu0 %2949
  %v2951 = vsel %vm711, %v2945, -inf
  %2952 = vmax.xlane.f32.xlu0 %v2951
  %v2953 = vpop.xlane.xlu0 %2952
  %v2954 = vsub.f32 %v2869, %v2950
  %v2955 = vsub.f32 %v2945, %v2953
  %v2956 = vmul.f32 %v2954, 1.442695
  %v2957 = vpow.pop %v2956
  %v2958 = vmul.f32 %v2955, 1.442695
  %v2959 = vpow.pop %v2958
  %v2960 = vsel %vm711, %v2957, 0.0
  %2961 = vadd.xlane.f32.xlu0 %v2960
  %v2962 = vpop.xlane.xlu0 %2961
  %v2963 = vsel %vm711, %v2959, 0.0
  %2964 = vadd.xlane.f32.xlu0 %v2963
  %v2965 = vpop.xlane.xlu0 %2964
  %v2966 = vrcp.pop %v2962
  %v2967 = vrcp.pop %v2965
  %v2968 = vmul.f32 %v2957, %v2966
  %v2969 = vmul.f32 %v2959, %v2967
  %v2971 = vsel %vm711, %v2968, 0
  %2973 = vmatprep.subr.mxu0 0.0
  %2974 = vmatpush1.msra.mxu0 %v2788
  %2975 = vmatprep.subr.mxu0 0.0
  %2976 = vmatpush1.msra.mxu0 0.0
  %2977 = vmatprep.subr.mxu0 0.0
  %2978 = vmatpush1.msra.mxu0 0.0
  %2979 = vmatprep.subr.mxu0 0.0
  %2980 = vmatpush1.msra.mxu0 0.0
  %2981 = vmatprep.subr.mxu0 0.0
  %2982 = vmatpush1.msra.mxu0 0.0
  %2983 = vmatprep.subr.mxu0 0.0
  %2984 = vmatpush1.msra.mxu0 0.0
  %2985 = vmatprep.subr.mxu0 0.0
  %2986 = vmatpush1.msra.mxu0 0.0
  %2987 = vmatprep.subr.mxu0 0.0
  %2988 = vmatpush1.msra.mxu0 0.0
  %2989 = vmatprep.subr.mxu0 0.0
  %2990 = vmatpush1.msra.mxu0 0.0
  %2991 = vmatprep.subr.mxu0 0.0
  %2992 = vmatpush1.msra.mxu0 0.0
  %2993 = vmatprep.subr.mxu0 0.0
  %2994 = vmatpush1.msra.mxu0 0.0
  %2995 = vmatprep.subr.mxu0 0.0
  %2996 = vmatpush1.msra.mxu0 0.0
  %2997 = vmatprep.subr.mxu0 0.0
  %2998 = vmatpush1.msra.mxu0 0.0
  %2999 = vmatprep.subr.mxu0 0.0
  %3000 = vmatpush1.msra.mxu0 0.0
  %3001 = vmatprep.subr.mxu0 0.0
  %3002 = vmatpush1.msra.mxu0 0.0
  %3003 = vmatprep.subr.mxu0 0.0
  %3004 = vmatpush1.msra.mxu0 0.0
  %3005 = vmatprep.subr.mxu0 0.0
  %3006 = vmatpush1.msra.mxu0 0.0
  %3007 = vmatprep.subr.mxu0 0.0
  %3008 = vmatpush1.msra.mxu0 0.0
  %3009 = vmatprep.subr.mxu0 0.0
  %3010 = vmatpush1.msra.mxu0 0.0
  %3011 = vmatprep.subr.mxu0 0.0
  %3012 = vmatpush1.msra.mxu0 0.0
  %3013 = vmatprep.subr.mxu0 0.0
  %3014 = vmatpush1.msra.mxu0 0.0
  %3015 = vmatprep.subr.mxu0 0.0
  %3016 = vmatpush1.msra.mxu0 0.0
  %3017 = vmatprep.subr.mxu0 0.0
  %3018 = vmatpush1.msra.mxu0 0.0
  %3019 = vmatprep.subr.mxu0 0.0
  %3020 = vmatpush1.msra.mxu0 0.0
  %3021 = vmatprep.subr.mxu0 0.0
  %3022 = vmatpush1.msra.mxu0 0.0
  %3023 = vmatprep.subr.mxu0 0.0
  %3024 = vmatpush1.msra.mxu0 0.0
  %3025 = vmatprep.subr.mxu0 0.0
  %3026 = vmatpush1.msra.mxu0 0.0
  %3027 = vmatprep.subr.mxu0 0.0
  %3028 = vmatpush1.msra.mxu0 0.0
  %3029 = vmatprep.subr.mxu0 0.0
  %3030 = vmatpush1.msra.mxu0 0.0
  %3031 = vmatprep.subr.mxu0 0.0
  %3032 = vmatpush1.msra.mxu0 0.0
  %3033 = vmatprep.subr.mxu0 0.0
  %3034 = vmatpush1.msra.mxu0 0.0
  %3035 = vmatprep.subr.mxu0 0.0
  %3036 = vmatpush1.msra.mxu0 0.0
  %3037 = vmatprep.mubr.f32.mxu0 0.0
  %3038 = vmatmul.mubr.f32.gmra.mrb[0].mxu0 %v2971
  %v3039 = vpop.f32.mrb[0].mxu0
  %v3040 = vadd.f32 0.0, %v3039
  %v3041 = vpop.f32.mrb[0].mxu0
  %3042 = vdwg.mxu0
  %v3044 = vsel %vm711, %v2969, 0
  %3046 = vmatprep.subr.mxu0 0.0
  %3047 = vmatpush1.msra.mxu0 %v2793
  %3048 = vmatprep.subr.mxu0 0.0
  %3049 = vmatpush1.msra.mxu0 0.0
  %3050 = vmatprep.subr.mxu0 0.0
  %3051 = vmatpush1.msra.mxu0 0.0
  %3052 = vmatprep.subr.mxu0 0.0
  %3053 = vmatpush1.msra.mxu0 0.0
  %3054 = vmatprep.subr.mxu0 0.0
  %3055 = vmatpush1.msra.mxu0 0.0
  %3056 = vmatprep.subr.mxu0 0.0
  %3057 = vmatpush1.msra.mxu0 0.0
  %3058 = vmatprep.subr.mxu0 0.0
  %3059 = vmatpush1.msra.mxu0 0.0
  %3060 = vmatprep.subr.mxu0 0.0
  %3061 = vmatpush1.msra.mxu0 0.0
  %3062 = vmatprep.subr.mxu0 0.0
  %3063 = vmatpush1.msra.mxu0 0.0
  %3064 = vmatprep.subr.mxu0 0.0
  %3065 = vmatpush1.msra.mxu0 0.0
  %3066 = vmatprep.subr.mxu0 0.0
  %3067 = vmatpush1.msra.mxu0 0.0
  %3068 = vmatprep.subr.mxu0 0.0
  %3069 = vmatpush1.msra.mxu0 0.0
  %3070 = vmatprep.subr.mxu0 0.0
  %3071 = vmatpush1.msra.mxu0 0.0
  %3072 = vmatprep.subr.mxu0 0.0
  %3073 = vmatpush1.msra.mxu0 0.0
  %3074 = vmatprep.subr.mxu0 0.0
  %3075 = vmatpush1.msra.mxu0 0.0
  %3076 = vmatprep.subr.mxu0 0.0
  %3077 = vmatpush1.msra.mxu0 0.0
  %3078 = vmatprep.subr.mxu0 0.0
  %3079 = vmatpush1.msra.mxu0 0.0
  %3080 = vmatprep.subr.mxu0 0.0
  %3081 = vmatpush1.msra.mxu0 0.0
  %3082 = vmatprep.subr.mxu0 0.0
  %3083 = vmatpush1.msra.mxu0 0.0
  %3084 = vmatprep.subr.mxu0 0.0
  %3085 = vmatpush1.msra.mxu0 0.0
  %3086 = vmatprep.subr.mxu0 0.0
  %3087 = vmatpush1.msra.mxu0 0.0
  %3088 = vmatprep.subr.mxu0 0.0
  %3089 = vmatpush1.msra.mxu0 0.0
  %3090 = vmatprep.subr.mxu0 0.0
  %3091 = vmatpush1.msra.mxu0 0.0
  %3092 = vmatprep.subr.mxu0 0.0
  %3093 = vmatpush1.msra.mxu0 0.0
  %3094 = vmatprep.subr.mxu0 0.0
  %3095 = vmatpush1.msra.mxu0 0.0
  %3096 = vmatprep.subr.mxu0 0.0
  %3097 = vmatpush1.msra.mxu0 0.0
  %3098 = vmatprep.subr.mxu0 0.0
  %3099 = vmatpush1.msra.mxu0 0.0
  %3100 = vmatprep.subr.mxu0 0.0
  %3101 = vmatpush1.msra.mxu0 0.0
  %3102 = vmatprep.subr.mxu0 0.0
  %3103 = vmatpush1.msra.mxu0 0.0
  %3104 = vmatprep.subr.mxu0 0.0
  %3105 = vmatpush1.msra.mxu0 0.0
  %3106 = vmatprep.subr.mxu0 0.0
  %3107 = vmatpush1.msra.mxu0 0.0
  %3108 = vmatprep.subr.mxu0 0.0
  %3109 = vmatpush1.msra.mxu0 0.0
  %3110 = vmatprep.mubr.f32.mxu0 0.0
  %3111 = vmatmul.mubr.f32.gmra.mrb[0].mxu0 %v3044
  %v3112 = vpop.f32.mrb[0].mxu0
  %v3113 = vadd.f32 0.0, %v3112
  %v3114 = vpop.f32.mrb[0].mxu0
  %3115 = vdwg.mxu0
  %s3116 = scalar_lea.vmem %s25, 48
  %v3117 = vld [vmem:[%s3116] sm:$0xff]
  %v3118 = vld [vmem:[%s3116 + $0x8] sm:$0xff]
  %v3120 = vsel %vm558, %v3040, 0
  %v3123 = vsel %vm558, %v3113, 0
  %3125 = vmatprep.subr.mxu0 0.0
  %3126 = vmatpush1.msra.mxu0 %v3117
  %3127 = vmatprep.subr.mxu0 0.0
  %3128 = vmatpush1.msra.mxu0 %v3118
  %3129 = vmatprep.subr.mxu0 0.0
  %3130 = vmatpush1.msra.mxu0 0.0
  %3131 = vmatprep.subr.mxu0 0.0
  %3132 = vmatpush1.msra.mxu0 0.0
  %3133 = vmatprep.subr.mxu0 0.0
  %3134 = vmatpush1.msra.mxu0 0.0
  %3135 = vmatprep.subr.mxu0 0.0
  %3136 = vmatpush1.msra.mxu0 0.0
  %3137 = vmatprep.subr.mxu0 0.0
  %3138 = vmatpush1.msra.mxu0 0.0
  %3139 = vmatprep.subr.mxu0 0.0
  %3140 = vmatpush1.msra.mxu0 0.0
  %3141 = vmatprep.subr.mxu0 0.0
  %3142 = vmatpush1.msra.mxu0 0.0
  %3143 = vmatprep.subr.mxu0 0.0
  %3144 = vmatpush1.msra.mxu0 0.0
  %3145 = vmatprep.subr.mxu0 0.0
  %3146 = vmatpush1.msra.mxu0 0.0
  %3147 = vmatprep.subr.mxu0 0.0
  %3148 = vmatpush1.msra.mxu0 0.0
  %3149 = vmatprep.subr.mxu0 0.0
  %3150 = vmatpush1.msra.mxu0 0.0
  %3151 = vmatprep.subr.mxu0 0.0
  %3152 = vmatpush1.msra.mxu0 0.0
  %3153 = vmatprep.subr.mxu0 0.0
  %3154 = vmatpush1.msra.mxu0 0.0
  %3155 = vmatprep.subr.mxu0 0.0
  %3156 = vmatpush1.msra.mxu0 0.0
  %3157 = vmatprep.subr.mxu0 0.0
  %3158 = vmatpush1.msra.mxu0 0.0
  %3159 = vmatprep.subr.mxu0 0.0
  %3160 = vmatpush1.msra.mxu0 0.0
  %3161 = vmatprep.subr.mxu0 0.0
  %3162 = vmatpush1.msra.mxu0 0.0
  %3163 = vmatprep.subr.mxu0 0.0
  %3164 = vmatpush1.msra.mxu0 0.0
  %3165 = vmatprep.subr.mxu0 0.0
  %3166 = vmatpush1.msra.mxu0 0.0
  %3167 = vmatprep.subr.mxu0 0.0
  %3168 = vmatpush1.msra.mxu0 0.0
  %3169 = vmatprep.subr.mxu0 0.0
  %3170 = vmatpush1.msra.mxu0 0.0
  %3171 = vmatprep.subr.mxu0 0.0
  %3172 = vmatpush1.msra.mxu0 0.0
  %3173 = vmatprep.subr.mxu0 0.0
  %3174 = vmatpush1.msra.mxu0 0.0
  %3175 = vmatprep.subr.mxu0 0.0
  %3176 = vmatpush1.msra.mxu0 0.0
  %3177 = vmatprep.subr.mxu0 0.0
  %3178 = vmatpush1.msra.mxu0 0.0
  %3179 = vmatprep.subr.mxu0 0.0
  %3180 = vmatpush1.msra.mxu0 0.0
  %3181 = vmatprep.subr.mxu0 0.0
  %3182 = vmatpush1.msra.mxu0 0.0
  %3183 = vmatprep.subr.mxu0 0.0
  %3184 = vmatpush1.msra.mxu0 0.0
  %3185 = vmatprep.subr.mxu0 0.0
  %3186 = vmatpush1.msra.mxu0 0.0
  %3187 = vmatprep.subr.mxu0 0.0
  %3188 = vmatpush1.msra.mxu0 0.0
  %3189 = vmatprep.mubr.f32.mxu0 0.0
  %3190 = vmatmul.mubr.f32.gmra.mrb[0].mxu0 %v3120
  %v3191 = vpop.f32.mrb[0].mxu0
  %v3192 = vadd.f32 0.0, %v3191
  %v3193 = vpop.f32.mrb[0].mxu0
  %3194 = vmatprep.mubr.f32.mxu0 0.0
  %3195 = vmatmul.mubr.f32.gmra.mrb[0].mxu0 %v3123
  %v3196 = vpop.f32.mrb[0].mxu0
  %v3197 = vadd.f32 0.0, %v3196
  %v3198 = vpop.f32.mrb[0].mxu0
  %3199 = vdwg.mxu0
  %v3201 = vsel %vm558, %v2453, 0
  %v3204 = vsel %vm558, %v2526, 0
  %3206 = vmatprep.subr.mxu0 0.0
  %3207 = vmatpush1.msra.mxu0 %v2530
  %3208 = vmatprep.subr.mxu0 0.0
  %3209 = vmatpush1.msra.mxu0 %v2531
  %3210 = vmatprep.subr.mxu0 0.0
  %3211 = vmatpush1.msra.mxu0 0.0
  %3212 = vmatprep.subr.mxu0 0.0
  %3213 = vmatpush1.msra.mxu0 0.0
  %3214 = vmatprep.subr.mxu0 0.0
  %3215 = vmatpush1.msra.mxu0 0.0
  %3216 = vmatprep.subr.mxu0 0.0
  %3217 = vmatpush1.msra.mxu0 0.0
  %3218 = vmatprep.subr.mxu0 0.0
  %3219 = vmatpush1.msra.mxu0 0.0
  %3220 = vmatprep.subr.mxu0 0.0
  %3221 = vmatpush1.msra.mxu0 0.0
  %3222 = vmatprep.subr.mxu0 0.0
  %3223 = vmatpush1.msra.mxu0 0.0
  %3224 = vmatprep.subr.mxu0 0.0
  %3225 = vmatpush1.msra.mxu0 0.0
  %3226 = vmatprep.subr.mxu0 0.0
  %3227 = vmatpush1.msra.mxu0 0.0
  %3228 = vmatprep.subr.mxu0 0.0
  %3229 = vmatpush1.msra.mxu0 0.0
  %3230 = vmatprep.subr.mxu0 0.0
  %3231 = vmatpush1.msra.mxu0 0.0
  %3232 = vmatprep.subr.mxu0 0.0
  %3233 = vmatpush1.msra.mxu0 0.0
  %3234 = vmatprep.subr.mxu0 0.0
  %3235 = vmatpush1.msra.mxu0 0.0
  %3236 = vmatprep.subr.mxu0 0.0
  %3237 = vmatpush1.msra.mxu0 0.0
  %3238 = vmatprep.subr.mxu0 0.0
  %3239 = vmatpush1.msra.mxu0 0.0
  %3240 = vmatprep.subr.mxu0 0.0
  %3241 = vmatpush1.msra.mxu0 0.0
  %3242 = vmatprep.subr.mxu0 0.0
  %3243 = vmatpush1.msra.mxu0 0.0
  %3244 = vmatprep.subr.mxu0 0.0
  %3245 = vmatpush1.msra.mxu0 0.0
  %3246 = vmatprep.subr.mxu0 0.0
  %3247 = vmatpush1.msra.mxu0 0.0
  %3248 = vmatprep.subr.mxu0 0.0
  %3249 = vmatpush1.msra.mxu0 0.0
  %3250 = vmatprep.subr.mxu0 0.0
  %3251 = vmatpush1.msra.mxu0 0.0
  %3252 = vmatprep.subr.mxu0 0.0
  %3253 = vmatpush1.msra.mxu0 0.0
  %3254 = vmatprep.subr.mxu0 0.0
  %3255 = vmatpush1.msra.mxu0 0.0
  %3256 = vmatprep.subr.mxu0 0.0
  %3257 = vmatpush1.msra.mxu0 0.0
  %3258 = vmatprep.subr.mxu0 0.0
  %3259 = vmatpush1.msra.mxu0 0.0
  %3260 = vmatprep.subr.mxu0 0.0
  %3261 = vmatpush1.msra.mxu0 0.0
  %3262 = vmatprep.subr.mxu0 0.0
  %3263 = vmatpush1.msra.mxu0 0.0
  %3264 = vmatprep.subr.mxu0 0.0
  %3265 = vmatpush1.msra.mxu0 0.0
  %3266 = vmatprep.subr.mxu0 0.0
  %3267 = vmatpush1.msra.mxu0 0.0
  %3268 = vmatprep.subr.mxu0 0.0
  %3269 = vmatpush1.msra.mxu0 0.0
  %3270 = vmatprep.mubr.f32.mxu0 0.0
  %3271 = vmatmul.mubr.f32.gmra.mrb[0].mxu0 %v3201
  %v3272 = vpop.f32.mrb[0].mxu0
  %v3273 = vadd.f32 %v3192, %v3272
  %v3274 = vpop.f32.mrb[0].mxu0
  %3275 = vmatprep.mubr.f32.mxu0 0.0
  %3276 = vmatmul.mubr.f32.gmra.mrb[0].mxu0 %v3204
  %v3277 = vpop.f32.mrb[0].mxu0
  %v3278 = vadd.f32 %v3197, %v3277
  %v3279 = vpop.f32.mrb[0].mxu0
  %3280 = vdwg.mxu0
  %s3281 = scalar_lea.vmem %s27, 1
  %v3282 = vld [vmem:[%s3281] sm:$0x1]
  %v3284 = vlaneseq
  %v3285 = vshrl.u32 %v3284, 7
  %v3286 = vsub.s32 0, %v3285
  %v3287 = vrot.slane %v3282, %v3286
  %v3289 = vadd.f32 %v3273, %v3287
  %v3290 = vadd.f32 %v3278, %v3287
  %v3291 = vadd.f32 %v1937, %v3289
  %v3292 = vadd.f32 %v1938, %v3290
  %s3293 = scalar_lea.vmem %s29, 1
  %v3294 = vld [vmem:[%s3293] sm:$0x1]
  %s3295 = scalar_lea.vmem %s31, 1
  %v3296 = vld [vmem:[%s3295] sm:$0x1]
  %v3297 = vsel %vm232, %v3291, 0.0
  %3298 = vadd.xlane.f32.xlu0 %v3297
  %v3299 = vpop.xlane.xlu0 %3298
  %v3300 = vsel %vm232, %v3292, 0.0
  %3301 = vadd.xlane.f32.xlu0 %v3300
  %v3302 = vpop.xlane.xlu0 %3301
  %v3303 = vmul.f32 %v3299, %v239
  %v3304 = vmul.f32 %v3302, %v239
  %v3305 = vsub.f32 %v3291, %v3303
  %v3306 = vsub.f32 %v3292, %v3304
  %v3307 = vmul.f32 %v3305, %v3305
  %v3308 = vmul.f32 %v3306, %v3306
  %v3309 = vsel %vm232, %v3307, 0.0
  %3310 = vadd.xlane.f32.xlu0 %v3309
  %v3311 = vpop.xlane.xlu0 %3310
  %v3312 = vsel %vm232, %v3308, 0.0
  %3313 = vadd.xlane.f32.xlu0 %v3312
  %v3314 = vpop.xlane.xlu0 %3313
  %v3315 = vmul.f32 %v3311, %v239
  %v3316 = vmul.f32 %v3314, %v239
  %v3317 = vadd.f32 %v3315, 1e-12
  %v3318 = vadd.f32 %v3316, 1e-12
  %v3319 = vrsqrt.pop %v3317
  %v3320 = vrsqrt.pop %v3318
  %v3321 = vmul.f32 %v3305, %v3319
  %v3322 = vmul.f32 %v3306, %v3320
  %v3324 = vlaneseq
  %v3325 = vshrl.u32 %v3324, 7
  %v3326 = vsub.s32 0, %v3325
  %v3327 = vrot.slane %v3294, %v3326
  %v3329 = vmul.f32 %v3321, %v3327
  %v3330 = vmul.f32 %v3322, %v3327
  %v3332 = vlaneseq
  %v3333 = vshrl.u32 %v3332, 7
  %v3334 = vsub.s32 0, %v3333
  %v3335 = vrot.slane %v3296, %v3334
  %v3337 = vadd.f32 %v3329, %v3335
  %v3338 = vadd.f32 %v3330, %v3335
  %s3339 = scalar_lea.vmem %s33, 32
  %v3340 = vld [vmem:[%s3339] sm:$0xff]
  %v3341 = vld [vmem:[%s3339 + $0x8] sm:$0xff]
  %v3342 = vld [vmem:[%s3339 + $0x10] sm:$0xff]
  %v3343 = vld [vmem:[%s3339 + $0x18] sm:$0xff]
  %s3344 = scalar_lea.vmem %s35, 1
  %v3345 = vld [vmem:[%s3344] sm:$0x1]
  %v3347 = vlaneseq
  %v3348 = vshrl.u32 %v3347, 7
  %v3349 = vsub.s32 0, %v3348
  %v3350 = vrot.slane %v3345, %v3349
  %v3353 = vsel %vm232, %v3337, 0
  %v3356 = vsel %vm232, %v3338, 0
  %3358 = vmatprep.subr.mxu0 0.0
  %3359 = vmatpush1.msra.mxu0 %v3340
  %3360 = vmatprep.subr.mxu0 0.0
  %3361 = vmatpush1.msra.mxu0 %v3341
  %3362 = vmatprep.subr.mxu0 0.0
  %3363 = vmatpush1.msra.mxu0 %v3342
  %3364 = vmatprep.subr.mxu0 0.0
  %3365 = vmatpush1.msra.mxu0 %v3343
  %3366 = vmatprep.subr.mxu0 0.0
  %3367 = vmatpush1.msra.mxu0 0.0
  %3368 = vmatprep.subr.mxu0 0.0
  %3369 = vmatpush1.msra.mxu0 0.0
  %3370 = vmatprep.subr.mxu0 0.0
  %3371 = vmatpush1.msra.mxu0 0.0
  %3372 = vmatprep.subr.mxu0 0.0
  %3373 = vmatpush1.msra.mxu0 0.0
  %3374 = vmatprep.subr.mxu0 0.0
  %3375 = vmatpush1.msra.mxu0 0.0
  %3376 = vmatprep.subr.mxu0 0.0
  %3377 = vmatpush1.msra.mxu0 0.0
  %3378 = vmatprep.subr.mxu0 0.0
  %3379 = vmatpush1.msra.mxu0 0.0
  %3380 = vmatprep.subr.mxu0 0.0
  %3381 = vmatpush1.msra.mxu0 0.0
  %3382 = vmatprep.subr.mxu0 0.0
  %3383 = vmatpush1.msra.mxu0 0.0
  %3384 = vmatprep.subr.mxu0 0.0
  %3385 = vmatpush1.msra.mxu0 0.0
  %3386 = vmatprep.subr.mxu0 0.0
  %3387 = vmatpush1.msra.mxu0 0.0
  %3388 = vmatprep.subr.mxu0 0.0
  %3389 = vmatpush1.msra.mxu0 0.0
  %3390 = vmatprep.subr.mxu0 0.0
  %3391 = vmatpush1.msra.mxu0 0.0
  %3392 = vmatprep.subr.mxu0 0.0
  %3393 = vmatpush1.msra.mxu0 0.0
  %3394 = vmatprep.subr.mxu0 0.0
  %3395 = vmatpush1.msra.mxu0 0.0
  %3396 = vmatprep.subr.mxu0 0.0
  %3397 = vmatpush1.msra.mxu0 0.0
  %3398 = vmatprep.subr.mxu0 0.0
  %3399 = vmatpush1.msra.mxu0 0.0
  %3400 = vmatprep.subr.mxu0 0.0
  %3401 = vmatpush1.msra.mxu0 0.0
  %3402 = vmatprep.subr.mxu0 0.0
  %3403 = vmatpush1.msra.mxu0 0.0
  %3404 = vmatprep.subr.mxu0 0.0
  %3405 = vmatpush1.msra.mxu0 0.0
  %3406 = vmatprep.subr.mxu0 0.0
  %3407 = vmatpush1.msra.mxu0 0.0
  %3408 = vmatprep.subr.mxu0 0.0
  %3409 = vmatpush1.msra.mxu0 0.0
  %3410 = vmatprep.subr.mxu0 0.0
  %3411 = vmatpush1.msra.mxu0 0.0
  %3412 = vmatprep.subr.mxu0 0.0
  %3413 = vmatpush1.msra.mxu0 0.0
  %3414 = vmatprep.subr.mxu0 0.0
  %3415 = vmatpush1.msra.mxu0 0.0
  %3416 = vmatprep.subr.mxu0 0.0
  %3417 = vmatpush1.msra.mxu0 0.0
  %3418 = vmatprep.subr.mxu0 0.0
  %3419 = vmatpush1.msra.mxu0 0.0
  %3420 = vmatprep.subr.mxu0 0.0
  %3421 = vmatpush1.msra.mxu0 0.0
  %3422 = vmatprep.mubr.f32.mxu0 0.0
  %3423 = vmatmul.mubr.f32.gmra.mrb[0].mxu0 %v3353
  %v3424 = vpop.f32.mrb[0].mxu0
  %v3425 = vadd.f32 %v3350, %v3424
  %v3426 = vpop.f32.mrb[0].mxu0
  %3427 = vmatprep.mubr.f32.mxu0 0.0
  %3428 = vmatmul.mubr.f32.gmra.mrb[0].mxu0 %v3356
  %v3429 = vpop.f32.mrb[0].mxu0
  %v3430 = vadd.f32 %v3350, %v3429
  %v3431 = vpop.f32.mrb[0].mxu0
  %3432 = vdwg.mxu0
  %v3433 = vmul.f32 %v3425, 0.5
  %v3434 = vmul.f32 %v3430, 0.5
  %v3435 = vmul.f32 %v3425, 0.044715
  %v3436 = vmul.f32 %v3430, 0.044715
  %v3437 = vmul.f32 %v3435, %v3425
  %v3438 = vmul.f32 %v3436, %v3430
  %v3439 = vmul.f32 %v3437, %v3425
  %v3440 = vmul.f32 %v3438, %v3430
  %v3441 = vadd.f32 %v3425, %v3439
  %v3442 = vadd.f32 %v3430, %v3440
  %v3443 = vmul.f32 %v3441, 0.7978846
  %v3444 = vmul.f32 %v3442, 0.7978846
  %v3445 = vtanh.pop %v3443
  %v3446 = vtanh.pop %v3444
  %v3447 = vadd.f32 %v3445, 1.0
  %v3448 = vadd.f32 %v3446, 1.0
  %v3449 = vmul.f32 %v3433, %v3447
  %v3450 = vmul.f32 %v3434, %v3448
  %s3451 = scalar_lea.vmem %s37, 64
  %v3452 = vld [vmem:[%s3451] sm:$0xff]
  %v3453 = vld [vmem:[%s3451 + $0x8] sm:$0xff]
  %v3454 = vld [vmem:[%s3451 + $0x10] sm:$0xff]
  %v3455 = vld [vmem:[%s3451 + $0x18] sm:$0xff]
  %v3456 = vld [vmem:[%s3451 + $0x20] sm:$0xff]
  %v3457 = vld [vmem:[%s3451 + $0x28] sm:$0xff]
  %v3458 = vld [vmem:[%s3451 + $0x30] sm:$0xff]
  %v3459 = vld [vmem:[%s3451 + $0x38] sm:$0xff]
  %s3460 = scalar_lea.vmem %s39, 1
  %v3461 = vld [vmem:[%s3460] sm:$0x1]
  %v3463 = vlaneseq
  %v3464 = vshrl.u32 %v3463, 7
  %v3465 = vsub.s32 0, %v3464
  %v3466 = vrot.slane %v3461, %v3465
  %v3469 = vsel %vm1811, %v3449, 0
  %v3472 = vsel %vm1811, %v3450, 0
  %3474 = vmatprep.subr.mxu0 0.0
  %3475 = vmatpush1.msra.mxu0 %v3452
  %3476 = vmatprep.subr.mxu0 0.0
  %3477 = vmatpush1.msra.mxu0 %v3453
  %3478 = vmatprep.subr.mxu0 0.0
  %3479 = vmatpush1.msra.mxu0 %v3454
  %3480 = vmatprep.subr.mxu0 0.0
  %3481 = vmatpush1.msra.mxu0 %v3455
  %3482 = vmatprep.subr.mxu0 0.0
  %3483 = vmatpush1.msra.mxu0 %v3456
  %3484 = vmatprep.subr.mxu0 0.0
  %3485 = vmatpush1.msra.mxu0 %v3457
  %3486 = vmatprep.subr.mxu0 0.0
  %3487 = vmatpush1.msra.mxu0 %v3458
  %3488 = vmatprep.subr.mxu0 0.0
  %3489 = vmatpush1.msra.mxu0 %v3459
  %3490 = vmatprep.subr.mxu0 0.0
  %3491 = vmatpush1.msra.mxu0 0.0
  %3492 = vmatprep.subr.mxu0 0.0
  %3493 = vmatpush1.msra.mxu0 0.0
  %3494 = vmatprep.subr.mxu0 0.0
  %3495 = vmatpush1.msra.mxu0 0.0
  %3496 = vmatprep.subr.mxu0 0.0
  %3497 = vmatpush1.msra.mxu0 0.0
  %3498 = vmatprep.subr.mxu0 0.0
  %3499 = vmatpush1.msra.mxu0 0.0
  %3500 = vmatprep.subr.mxu0 0.0
  %3501 = vmatpush1.msra.mxu0 0.0
  %3502 = vmatprep.subr.mxu0 0.0
  %3503 = vmatpush1.msra.mxu0 0.0
  %3504 = vmatprep.subr.mxu0 0.0
  %3505 = vmatpush1.msra.mxu0 0.0
  %3506 = vmatprep.subr.mxu0 0.0
  %3507 = vmatpush1.msra.mxu0 0.0
  %3508 = vmatprep.subr.mxu0 0.0
  %3509 = vmatpush1.msra.mxu0 0.0
  %3510 = vmatprep.subr.mxu0 0.0
  %3511 = vmatpush1.msra.mxu0 0.0
  %3512 = vmatprep.subr.mxu0 0.0
  %3513 = vmatpush1.msra.mxu0 0.0
  %3514 = vmatprep.subr.mxu0 0.0
  %3515 = vmatpush1.msra.mxu0 0.0
  %3516 = vmatprep.subr.mxu0 0.0
  %3517 = vmatpush1.msra.mxu0 0.0
  %3518 = vmatprep.subr.mxu0 0.0
  %3519 = vmatpush1.msra.mxu0 0.0
  %3520 = vmatprep.subr.mxu0 0.0
  %3521 = vmatpush1.msra.mxu0 0.0
  %3522 = vmatprep.subr.mxu0 0.0
  %3523 = vmatpush1.msra.mxu0 0.0
  %3524 = vmatprep.subr.mxu0 0.0
  %3525 = vmatpush1.msra.mxu0 0.0
  %3526 = vmatprep.subr.mxu0 0.0
  %3527 = vmatpush1.msra.mxu0 0.0
  %3528 = vmatprep.subr.mxu0 0.0
  %3529 = vmatpush1.msra.mxu0 0.0
  %3530 = vmatprep.subr.mxu0 0.0
  %3531 = vmatpush1.msra.mxu0 0.0
  %3532 = vmatprep.subr.mxu0 0.0
  %3533 = vmatpush1.msra.mxu0 0.0
  %3534 = vmatprep.subr.mxu0 0.0
  %3535 = vmatpush1.msra.mxu0 0.0
  %3536 = vmatprep.subr.mxu0 0.0
  %3537 = vmatpush1.msra.mxu0 0.0
  %3538 = vmatprep.mubr.f32.mxu0 0.0
  %3539 = vmatmul.mubr.f32.gmra.mrb[0].mxu0 %v3469
  %v3540 = vpop.f32.mrb[0].mxu0
  %v3541 = vadd.f32 %v3466, %v3540
  %v3542 = vpop.f32.mrb[0].mxu0
  %3543 = vmatprep.mubr.f32.mxu0 0.0
  %3544 = vmatmul.mubr.f32.gmra.mrb[0].mxu0 %v3472
  %v3545 = vpop.f32.mrb[0].mxu0
  %v3546 = vadd.f32 %v3466, %v3545
  %v3547 = vpop.f32.mrb[0].mxu0
  %3548 = vdwg.mxu0
  %v3549 = vadd.f32 %v3337, %v3541
  %v3550 = vadd.f32 %v3338, %v3546
  %s3551 = scalar_lea.vmem %s41, 1
  %v3552 = vld [vmem:[%s3551] sm:$0x1]
  %s3553 = scalar_lea.vmem %s43, 1
  %v3554 = vld [vmem:[%s3553] sm:$0x1]
  %v3555 = vsel %vm232, %v3549, 0.0
  %3556 = vadd.xlane.f32.xlu0 %v3555
  %v3557 = vpop.xlane.xlu0 %3556
  %v3558 = vsel %vm232, %v3550, 0.0
  %3559 = vadd.xlane.f32.xlu0 %v3558
  %v3560 = vpop.xlane.xlu0 %3559
  %v3561 = vmul.f32 %v3557, %v239
  %v3562 = vmul.f32 %v3560, %v239
  %v3563 = vsub.f32 %v3549, %v3561
  %v3564 = vsub.f32 %v3550, %v3562
  %v3565 = vmul.f32 %v3563, %v3563
  %v3566 = vmul.f32 %v3564, %v3564
  %v3567 = vsel %vm232, %v3565, 0.0
  %3568 = vadd.xlane.f32.xlu0 %v3567
  %v3569 = vpop.xlane.xlu0 %3568
  %v3570 = vsel %vm232, %v3566, 0.0
  %3571 = vadd.xlane.f32.xlu0 %v3570
  %v3572 = vpop.xlane.xlu0 %3571
  %v3573 = vmul.f32 %v3569, %v239
  %v3574 = vmul.f32 %v3572, %v239
  %v3575 = vadd.f32 %v3573, 1e-12
  %v3576 = vadd.f32 %v3574, 1e-12
  %v3577 = vrsqrt.pop %v3575
  %v3578 = vrsqrt.pop %v3576
  %v3579 = vmul.f32 %v3563, %v3577
  %v3580 = vmul.f32 %v3564, %v3578
  %v3582 = vlaneseq
  %v3583 = vshrl.u32 %v3582, 7
  %v3584 = vsub.s32 0, %v3583
  %v3585 = vrot.slane %v3552, %v3584
  %v3587 = vmul.f32 %v3579, %v3585
  %v3588 = vmul.f32 %v3580, %v3585
  %v3590 = vlaneseq
  %v3591 = vshrl.u32 %v3590, 7
  %v3592 = vsub.s32 0, %v3591
  %v3593 = vrot.slane %v3554, %v3592
  %v3595 = vadd.f32 %v3587, %v3593
  %v3596 = vadd.f32 %v3588, %v3593
  %v3599 = vrot.slane %v3596, 7
  %vm3600 = vcmask 1041409
  %v3601 = vsel %vm3600, %v3599, %v3595
  %vm3603 = vcmask 1041408
  %v3604 = vsel %vm3603, %v3601, 0.0
  %v3605 = vld [vmem:[%s45] sm:$0xff]
  %v3606 = vld [vmem:[%s45 + $0x8] sm:$0xff]
  %v3607 = vld [vmem:[%s45 + $0x10] sm:$0xff]
  %v3608 = vld [vmem:[%s45 + $0x18] sm:$0xff]
  %v3609 = vld [vmem:[%s47] sm:$0x1]
  %v3611 = vlaneseq
  %v3612 = vshrl.u32 %v3611, 7
  %v3613 = vsub.s32 0, %v3612
  %v3614 = vrot.slane %v3609, %v3613
  %v3617 = vsel %vm232, %v3604, 0
  %3619 = vmatprep.subr.mxu0 0.0
  %3620 = vmatpush1.msra.mxu0 %v3605
  %3621 = vmatprep.subr.mxu0 0.0
  %3622 = vmatpush1.msra.mxu0 %v3606
  %3623 = vmatprep.subr.mxu0 0.0
  %3624 = vmatpush1.msra.mxu0 %v3607
  %3625 = vmatprep.subr.mxu0 0.0
  %3626 = vmatpush1.msra.mxu0 %v3608
  %3627 = vmatprep.subr.mxu0 0.0
  %3628 = vmatpush1.msra.mxu0 0.0
  %3629 = vmatprep.subr.mxu0 0.0
  %3630 = vmatpush1.msra.mxu0 0.0
  %3631 = vmatprep.subr.mxu0 0.0
  %3632 = vmatpush1.msra.mxu0 0.0
  %3633 = vmatprep.subr.mxu0 0.0
  %3634 = vmatpush1.msra.mxu0 0.0
  %3635 = vmatprep.subr.mxu0 0.0
  %3636 = vmatpush1.msra.mxu0 0.0
  %3637 = vmatprep.subr.mxu0 0.0
  %3638 = vmatpush1.msra.mxu0 0.0
  %3639 = vmatprep.subr.mxu0 0.0
  %3640 = vmatpush1.msra.mxu0 0.0
  %3641 = vmatprep.subr.mxu0 0.0
  %3642 = vmatpush1.msra.mxu0 0.0
  %3643 = vmatprep.subr.mxu0 0.0
  %3644 = vmatpush1.msra.mxu0 0.0
  %3645 = vmatprep.subr.mxu0 0.0
  %3646 = vmatpush1.msra.mxu0 0.0
  %3647 = vmatprep.subr.mxu0 0.0
  %3648 = vmatpush1.msra.mxu0 0.0
  %3649 = vmatprep.subr.mxu0 0.0
  %3650 = vmatpush1.msra.mxu0 0.0
  %3651 = vmatprep.subr.mxu0 0.0
  %3652 = vmatpush1.msra.mxu0 0.0
  %3653 = vmatprep.subr.mxu0 0.0
  %3654 = vmatpush1.msra.mxu0 0.0
  %3655 = vmatprep.subr.mxu0 0.0
  %3656 = vmatpush1.msra.mxu0 0.0
  %3657 = vmatprep.subr.mxu0 0.0
  %3658 = vmatpush1.msra.mxu0 0.0
  %3659 = vmatprep.subr.mxu0 0.0
  %3660 = vmatpush1.msra.mxu0 0.0
  %3661 = vmatprep.subr.mxu0 0.0
  %3662 = vmatpush1.msra.mxu0 0.0
  %3663 = vmatprep.subr.mxu0 0.0
  %3664 = vmatpush1.msra.mxu0 0.0
  %3665 = vmatprep.subr.mxu0 0.0
  %3666 = vmatpush1.msra.mxu0 0.0
  %3667 = vmatprep.subr.mxu0 0.0
  %3668 = vmatpush1.msra.mxu0 0.0
  %3669 = vmatprep.subr.mxu0 0.0
  %3670 = vmatpush1.msra.mxu0 0.0
  %3671 = vmatprep.subr.mxu0 0.0
  %3672 = vmatpush1.msra.mxu0 0.0
  %3673 = vmatprep.subr.mxu0 0.0
  %3674 = vmatpush1.msra.mxu0 0.0
  %3675 = vmatprep.subr.mxu0 0.0
  %3676 = vmatpush1.msra.mxu0 0.0
  %3677 = vmatprep.subr.mxu0 0.0
  %3678 = vmatpush1.msra.mxu0 0.0
  %3679 = vmatprep.subr.mxu0 0.0
  %3680 = vmatpush1.msra.mxu0 0.0
  %3681 = vmatprep.subr.mxu0 0.0
  %3682 = vmatpush1.msra.mxu0 0.0
  %3683 = vmatprep.mubr.f32.mxu0 0.0
  %3684 = vmatmul.mubr.f32.gmra.mrb[0].mxu0 %v3617
  %v3685 = vpop.f32.mrb[0].mxu0
  %v3686 = vadd.f32 %v3614, %v3685
  %v3687 = vpop.f32.mrb[0].mxu0
  %3688 = vdwg.mxu0
  %v3689 = vtanh.pop %v3686
  %v3690 = vld [vmem:[%s49] sm:$0xff]
  %v3691 = vld [vmem:[%s49 + $0x8] sm:$0xff]
  %v3692 = vld [vmem:[%s49 + $0x10] sm:$0xff]
  %v3693 = vld [vmem:[%s49 + $0x18] sm:$0xff]
  %v3694 = vld [vmem:[%s51] sm:$0x1]
  %v3696 = vlaneseq
  %v3697 = vshrl.u32 %v3696, 7
  %v3698 = vsub.s32 0, %v3697
  %v3699 = vrot.slane %v3694, %v3698
  %v3702 = vsel %vm232, %v3689, 0
  %3704 = vmatprep.subr.mxu0 0.0
  %3705 = vmatpush1.msra.mxu0 %v3690
  %3706 = vmatprep.subr.mxu0 0.0
  %3707 = vmatpush1.msra.mxu0 %v3691
  %3708 = vmatprep.subr.mxu0 0.0
  %3709 = vmatpush1.msra.mxu0 %v3692
  %3710 = vmatprep.subr.mxu0 0.0
  %3711 = vmatpush1.msra.mxu0 %v3693
  %3712 = vmatprep.subr.mxu0 0.0
  %3713 = vmatpush1.msra.mxu0 0.0
  %3714 = vmatprep.subr.mxu0 0.0
  %3715 = vmatpush1.msra.mxu0 0.0
  %3716 = vmatprep.subr.mxu0 0.0
  %3717 = vmatpush1.msra.mxu0 0.0
  %3718 = vmatprep.subr.mxu0 0.0
  %3719 = vmatpush1.msra.mxu0 0.0
  %3720 = vmatprep.subr.mxu0 0.0
  %3721 = vmatpush1.msra.mxu0 0.0
  %3722 = vmatprep.subr.mxu0 0.0
  %3723 = vmatpush1.msra.mxu0 0.0
  %3724 = vmatprep.subr.mxu0 0.0
  %3725 = vmatpush1.msra.mxu0 0.0
  %3726 = vmatprep.subr.mxu0 0.0
  %3727 = vmatpush1.msra.mxu0 0.0
  %3728 = vmatprep.subr.mxu0 0.0
  %3729 = vmatpush1.msra.mxu0 0.0
  %3730 = vmatprep.subr.mxu0 0.0
  %3731 = vmatpush1.msra.mxu0 0.0
  %3732 = vmatprep.subr.mxu0 0.0
  %3733 = vmatpush1.msra.mxu0 0.0
  %3734 = vmatprep.subr.mxu0 0.0
  %3735 = vmatpush1.msra.mxu0 0.0
  %3736 = vmatprep.subr.mxu0 0.0
  %3737 = vmatpush1.msra.mxu0 0.0
  %3738 = vmatprep.subr.mxu0 0.0
  %3739 = vmatpush1.msra.mxu0 0.0
  %3740 = vmatprep.subr.mxu0 0.0
  %3741 = vmatpush1.msra.mxu0 0.0
  %3742 = vmatprep.subr.mxu0 0.0
  %3743 = vmatpush1.msra.mxu0 0.0
  %3744 = vmatprep.subr.mxu0 0.0
  %3745 = vmatpush1.msra.mxu0 0.0
  %3746 = vmatprep.subr.mxu0 0.0
  %3747 = vmatpush1.msra.mxu0 0.0
  %3748 = vmatprep.subr.mxu0 0.0
  %3749 = vmatpush1.msra.mxu0 0.0
  %3750 = vmatprep.subr.mxu0 0.0
  %3751 = vmatpush1.msra.mxu0 0.0
  %3752 = vmatprep.subr.mxu0 0.0
  %3753 = vmatpush1.msra.mxu0 0.0
  %3754 = vmatprep.subr.mxu0 0.0
  %3755 = vmatpush1.msra.mxu0 0.0
  %3756 = vmatprep.subr.mxu0 0.0
  %3757 = vmatpush1.msra.mxu0 0.0
  %3758 = vmatprep.subr.mxu0 0.0
  %3759 = vmatpush1.msra.mxu0 0.0
  %3760 = vmatprep.subr.mxu0 0.0
  %3761 = vmatpush1.msra.mxu0 0.0
  %3762 = vmatprep.subr.mxu0 0.0
  %3763 = vmatpush1.msra.mxu0 0.0
  %3764 = vmatprep.subr.mxu0 0.0
  %3765 = vmatpush1.msra.mxu0 0.0
  %3766 = vmatprep.subr.mxu0 0.0
  %3767 = vmatpush1.msra.mxu0 0.0
  %3768 = vmatprep.mubr.f32.mxu0 0.0
  %3769 = vmatmul.mubr.f32.gmra.mrb[0].mxu0 %v3702
  %v3770 = vpop.f32.mrb[0].mxu0
  %v3771 = vadd.f32 %v3699, %v3770
  %v3772 = vpop.f32.mrb[0].mxu0
  %3773 = vdwg.mxu0
  %v3774 = vmax.f32 %v3771, 0.0
  %v3775 = vld [vmem:[%s53] sm:$0xff]
  %v3776 = vld [vmem:[%s53 + $0x8] sm:$0xff]
  %v3777 = vld [vmem:[%s53 + $0x10] sm:$0xff]
  %v3778 = vld [vmem:[%s53 + $0x18] sm:$0xff]
  %v3779 = vld [vmem:[%s55] sm:$0x1]
  %v3781 = vlaneseq
  %v3782 = vshrl.u32 %v3781, 7
  %v3783 = vsub.s32 0, %v3782
  %v3784 = vrot.slane %v3779, %v3783
  %v3787 = vsel %vm232, %v3774, 0
  %3789 = vmatprep.subr.mxu0 0.0
  %3790 = vmatpush1.msra.mxu0 %v3775
  %3791 = vmatprep.subr.mxu0 0.0
  %3792 = vmatpush1.msra.mxu0 %v3776
  %3793 = vmatprep.subr.mxu0 0.0
  %3794 = vmatpush1.msra.mxu0 %v3777
  %3795 = vmatprep.subr.mxu0 0.0
  %3796 = vmatpush1.msra.mxu0 %v3778
  %3797 = vmatprep.subr.mxu0 0.0
  %3798 = vmatpush1.msra.mxu0 0.0
  %3799 = vmatprep.subr.mxu0 0.0
  %3800 = vmatpush1.msra.mxu0 0.0
  %3801 = vmatprep.subr.mxu0 0.0
  %3802 = vmatpush1.msra.mxu0 0.0
  %3803 = vmatprep.subr.mxu0 0.0
  %3804 = vmatpush1.msra.mxu0 0.0
  %3805 = vmatprep.subr.mxu0 0.0
  %3806 = vmatpush1.msra.mxu0 0.0
  %3807 = vmatprep.subr.mxu0 0.0
  %3808 = vmatpush1.msra.mxu0 0.0
  %3809 = vmatprep.subr.mxu0 0.0
  %3810 = vmatpush1.msra.mxu0 0.0
  %3811 = vmatprep.subr.mxu0 0.0
  %3812 = vmatpush1.msra.mxu0 0.0
  %3813 = vmatprep.subr.mxu0 0.0
  %3814 = vmatpush1.msra.mxu0 0.0
  %3815 = vmatprep.subr.mxu0 0.0
  %3816 = vmatpush1.msra.mxu0 0.0
  %3817 = vmatprep.subr.mxu0 0.0
  %3818 = vmatpush1.msra.mxu0 0.0
  %3819 = vmatprep.subr.mxu0 0.0
  %3820 = vmatpush1.msra.mxu0 0.0
  %3821 = vmatprep.subr.mxu0 0.0
  %3822 = vmatpush1.msra.mxu0 0.0
  %3823 = vmatprep.subr.mxu0 0.0
  %3824 = vmatpush1.msra.mxu0 0.0
  %3825 = vmatprep.subr.mxu0 0.0
  %3826 = vmatpush1.msra.mxu0 0.0
  %3827 = vmatprep.subr.mxu0 0.0
  %3828 = vmatpush1.msra.mxu0 0.0
  %3829 = vmatprep.subr.mxu0 0.0
  %3830 = vmatpush1.msra.mxu0 0.0
  %3831 = vmatprep.subr.mxu0 0.0
  %3832 = vmatpush1.msra.mxu0 0.0
  %3833 = vmatprep.subr.mxu0 0.0
  %3834 = vmatpush1.msra.mxu0 0.0
  %3835 = vmatprep.subr.mxu0 0.0
  %3836 = vmatpush1.msra.mxu0 0.0
  %3837 = vmatprep.subr.mxu0 0.0
  %3838 = vmatpush1.msra.mxu0 0.0
  %3839 = vmatprep.subr.mxu0 0.0
  %3840 = vmatpush1.msra.mxu0 0.0
  %3841 = vmatprep.subr.mxu0 0.0
  %3842 = vmatpush1.msra.mxu0 0.0
  %3843 = vmatprep.subr.mxu0 0.0
  %3844 = vmatpush1.msra.mxu0 0.0
  %3845 = vmatprep.subr.mxu0 0.0
  %3846 = vmatpush1.msra.mxu0 0.0
  %3847 = vmatprep.subr.mxu0 0.0
  %3848 = vmatpush1.msra.mxu0 0.0
  %3849 = vmatprep.subr.mxu0 0.0
  %3850 = vmatpush1.msra.mxu0 0.0
  %3851 = vmatprep.subr.mxu0 0.0
  %3852 = vmatpush1.msra.mxu0 0.0
  %3853 = vmatprep.mubr.f32.mxu0 0.0
  %3854 = vmatmul.mubr.f32.gmra.mrb[0].mxu0 %v3787
  %v3855 = vpop.f32.mrb[0].mxu0
  %v3856 = vadd.f32 %v3784, %v3855
  %v3857 = vpop.f32.mrb[0].mxu0
  %3858 = vdwg.mxu0
  %v3859 = vmax.f32 %v3856, 0.0
  %v3860 = vld [vmem:[%s57] sm:$0xff]
  %v3861 = vld [vmem:[%s57 + $0x8] sm:$0xff]
  %v3862 = vld [vmem:[%s59] sm:$0x1]
  %v3864 = vlaneseq
  %v3865 = vshrl.u32 %v3864, 7
  %v3866 = vsub.s32 0, %v3865
  %v3867 = vrot.slane %v3862, %v3866
  %v3870 = vsel %vm558, %v3859, 0
  %3872 = vmatprep.subr.mxu0 0.0
  %3873 = vmatpush1.msra.mxu0 %v3860
  %3874 = vmatprep.subr.mxu0 0.0
  %3875 = vmatpush1.msra.mxu0 %v3861
  %3876 = vmatprep.subr.mxu0 0.0
  %3877 = vmatpush1.msra.mxu0 0.0
  %3878 = vmatprep.subr.mxu0 0.0
  %3879 = vmatpush1.msra.mxu0 0.0
  %3880 = vmatprep.subr.mxu0 0.0
  %3881 = vmatpush1.msra.mxu0 0.0
  %3882 = vmatprep.subr.mxu0 0.0
  %3883 = vmatpush1.msra.mxu0 0.0
  %3884 = vmatprep.subr.mxu0 0.0
  %3885 = vmatpush1.msra.mxu0 0.0
  %3886 = vmatprep.subr.mxu0 0.0
  %3887 = vmatpush1.msra.mxu0 0.0
  %3888 = vmatprep.subr.mxu0 0.0
  %3889 = vmatpush1.msra.mxu0 0.0
  %3890 = vmatprep.subr.mxu0 0.0
  %3891 = vmatpush1.msra.mxu0 0.0
  %3892 = vmatprep.subr.mxu0 0.0
  %3893 = vmatpush1.msra.mxu0 0.0
  %3894 = vmatprep.subr.mxu0 0.0
  %3895 = vmatpush1.msra.mxu0 0.0
  %3896 = vmatprep.subr.mxu0 0.0
  %3897 = vmatpush1.msra.mxu0 0.0
  %3898 = vmatprep.subr.mxu0 0.0
  %3899 = vmatpush1.msra.mxu0 0.0
  %3900 = vmatprep.subr.mxu0 0.0
  %3901 = vmatpush1.msra.mxu0 0.0
  %3902 = vmatprep.subr.mxu0 0.0
  %3903 = vmatpush1.msra.mxu0 0.0
  %3904 = vmatprep.subr.mxu0 0.0
  %3905 = vmatpush1.msra.mxu0 0.0
  %3906 = vmatprep.subr.mxu0 0.0
  %3907 = vmatpush1.msra.mxu0 0.0
  %3908 = vmatprep.subr.mxu0 0.0
  %3909 = vmatpush1.msra.mxu0 0.0
  %3910 = vmatprep.subr.mxu0 0.0
  %3911 = vmatpush1.msra.mxu0 0.0
  %3912 = vmatprep.subr.mxu0 0.0
  %3913 = vmatpush1.msra.mxu0 0.0
  %3914 = vmatprep.subr.mxu0 0.0
  %3915 = vmatpush1.msra.mxu0 0.0
  %3916 = vmatprep.subr.mxu0 0.0
  %3917 = vmatpush1.msra.mxu0 0.0
  %3918 = vmatprep.subr.mxu0 0.0
  %3919 = vmatpush1.msra.mxu0 0.0
  %3920 = vmatprep.subr.mxu0 0.0
  %3921 = vmatpush1.msra.mxu0 0.0
  %3922 = vmatprep.subr.mxu0 0.0
  %3923 = vmatpush1.msra.mxu0 0.0
  %3924 = vmatprep.subr.mxu0 0.0
  %3925 = vmatpush1.msra.mxu0 0.0
  %3926 = vmatprep.subr.mxu0 0.0
  %3927 = vmatpush1.msra.mxu0 0.0
  %3928 = vmatprep.subr.mxu0 0.0
  %3929 = vmatpush1.msra.mxu0 0.0
  %3930 = vmatprep.subr.mxu0 0.0
  %3931 = vmatpush1.msra.mxu0 0.0
  %3932 = vmatprep.subr.mxu0 0.0
  %3933 = vmatpush1.msra.mxu0 0.0
  %3934 = vmatprep.subr.mxu0 0.0
  %3935 = vmatpush1.msra.mxu0 0.0
  %3936 = vmatprep.mubr.f32.mxu0 0.0
  %3937 = vmatmul.mubr.f32.gmra.mrb[0].mxu0 %v3870
  %v3938 = vpop.f32.mrb[0].mxu0
  %v3939 = vadd.f32 %v3867, %v3938
  %v3940 = vpop.f32.mrb[0].mxu0
  %3941 = vdwg.mxu0
  %3942 = vst [vmem:[%s61] sm:$0xff] %v3939
  // Predicated region
  $region122: #{bert_review_classifier.1} parent=0 // pred_check
    _
  $region123: #{bert_review_classifier.1} parent=0 // pred_check_branch
    %3944 = sbr.rel (0) target = $region125
  $region124: #{bert_review_classifier.1} parent=0 // pred_region
    _
  $region125: #{bert_review_classifier.1} parent=0 // pred_fallthru
    _
  // Predicated region
  $region126: #{bert_review_classifier.1} parent=0 // pred_check
    _
  $region127: #{bert_review_classifier.1} parent=0 // pred_check_branch
    %3946 = sbr.rel (0) target = $region129
  $region128: #{bert_review_classifier.1} parent=0 // pred_region
    _
  $region129: #{bert_review_classifier.1} parent=0 // pred_fallthru
    _

</llo_original>
